<compile_context>
chip_gen: v7x
topology: tpu7x:2x2x1
jax: 0.10.0
libtpu: 0.0.40
codegen_flags: <defaults>
</compile_context>

<pallas_src>
import functools

import jax
import jax.numpy as jnp
from jax.experimental import pallas as pl
from jax.experimental.pallas import tpu as pltpu


# --------------------------------------------------------------------------- #
# Fused encoder kernel (one grid step == one batch-block of sequences)
# --------------------------------------------------------------------------- #
def _encoder_kernel(
    x_ref,       # (BB*T, IN)       raw rearranged input (un-normalized), f32
    inw_ref,     # (IN, D)          bf16
    inb_ref,     # (1, D)           f32
    cos_ref,     # (BB*T, D)        f32  head- and sequence-tiled RoPE cos
    sin_ref,     # (BB*T, D)        f32
    hmask_ref,   # (NH*T, D)        f32  block-diagonal head selector
    bones_ref,   # (NH*T, NH*T)     bf16 block-ones (per-head softmax denominator)
    ln1_ref,     # (NL, 1, D)       f32
    wqkv_ref,    # (NL, D, 5D)      bf16 [Wq/sqrt(Dh), Wq_rot/sqrt(Dh), Wk, Wk_rot, Wv]
    wo_ref,      # (NL, D, D)       bf16
    ln2_ref,     # (NL, 1, D)       f32
    wgu_ref,     # (NL, D, 2I)      bf16 [Wgate, Wup]
    wd_ref,      # (NL, I, D)       bf16
    fln_ref,     # (1, D)           f32
    outw_ref,    # (D, OUT_PAD)     bf16
    outb_ref,    # (1, OUT_PAD)     f32
    o_ref,       # (BB*T, OUT_PAD)  f32
    *,
    num_layers,
    num_heads,
    head_dim,
    hidden,
    inter,
    seq_len,
    seqs_per_block,
    eps,
):
    f32, bf16 = jnp.float32, jnp.bfloat16
    D, I, T, NH, BB = hidden, inter, seq_len, num_heads, seqs_per_block

    # x /= x.sum(dim=-1): after 'l b h t -> b t (l h)', that sum runs over the T
    # (sublane) rows of each sequence's slab.
    x = x_ref[...]
    parts = []
    for b in range(BB):
        xb = x[b * T:(b + 1) * T]
        parts.append(xb / jnp.sum(xb, axis=0, keepdims=True))
    x = jnp.concatenate(parts, axis=0) if BB > 1 else parts[0]

    # in_proj (with bias); all matmul operands cast to bf16, f32 accumulation.
    h = jnp.dot(x.astype(bf16), inw_ref[...], preferred_element_type=f32) + inb_ref[...]

    cos, sin = cos_ref[...], sin_ref[...]
    hmask = hmask_ref[...]
    bones = bones_ref[...]

    def rmsnorm(v, w):
        var = jnp.mean(v * v, axis=-1, keepdims=True)
        return (v * jax.lax.rsqrt(var + eps)) * w

    # TODO(synk): for large num_layers switch to lax.fori_loop / an "arbitrary" layer
    # grid axis that streams per-layer weights (scaling guard; NL=2 unrolls fine).
    for li in range(num_layers):
        # ---------------- self-attention block ----------------
        res = h
        hn = rmsnorm(h, ln1_ref[li]).astype(bf16)

        # ONE fused projection: (BB*T, D) @ (D, 5D) -> q | q_rot | k | k_rot | v
        z = jnp.dot(hn, wqkv_ref[li], preferred_element_type=f32)
        q, qr = z[:, 0 * D:1 * D], z[:, 1 * D:2 * D]
        k, kr = z[:, 2 * D:3 * D], z[:, 3 * D:4 * D]
        v = z[:, 4 * D:5 * D]

        # RoPE: rotate_half already folded into the *_rot columns; 1/sqrt(Dh) already
        # folded into the q columns.
        q = q * cos + qr * sin
        k = k * cos + kr * sin

        # Full (non-causal) attention, all heads in one shot via block-diagonal
        # packing.  Row-wise max over all heads is a valid per-head stabilizer.
        outs = []
        for b in range(BB):
            rs = slice(b * T, (b + 1) * T)
            qb = q[rs].astype(bf16)                                     # (T, D)
            k_bd = (jnp.tile(k[rs], (NH, 1)) * hmask).astype(bf16)      # (NH*T, D)
            v_bd = (jnp.tile(v[rs], (NH, 1)) * hmask).astype(bf16)      # (NH*T, D)
            s = jax.lax.dot_general(qb, k_bd, (((1,), (1,)), ((), ())),
                                    preferred_element_type=f32)          # (T, NH*T)
            s = s - jnp.max(s, axis=-1, keepdims=True)
            p = jnp.exp(s)
            denom = jnp.dot(p.astype(bf16), bones, preferred_element_type=f32)
            p = (p * pl.reciprocal(denom, approx=True)).astype(bf16)
            # P @ V_bd lands directly in head-concatenated (T, D) layout.
            outs.append(jnp.dot(p, v_bd, preferred_element_type=f32))
        attn = jnp.concatenate(outs, axis=0) if BB > 1 else outs[0]      # (BB*T, D)

        h = res + jnp.dot(attn.astype(bf16), wo_ref[li], preferred_element_type=f32)

        # ---------------- SwiGLU MLP block ----------------
        res = h
        hn = rmsnorm(h, ln2_ref[li]).astype(bf16)
        gu = jnp.dot(hn, wgu_ref[li], preferred_element_type=f32)        # (BB*T, 2I)
        g, u = gu[:, :I], gu[:, I:]
        silu = g * pl.reciprocal(1.0 + jnp.exp(-g), approx=True)
        h = res + jnp.dot((silu * u).astype(bf16), wd_ref[li],
                          preferred_element_type=f32)

    h = rmsnorm(h, fln_ref[...]).astype(bf16)
    # out_proj into a lane-dense 128-padded slab (real columns sliced off in JAX).
    o_ref[...] = jnp.dot(h, outw_ref[...], preferred_element_type=f32) + outb_ref[...]


# --------------------------------------------------------------------------- #
# RoPE / weight-prep helpers (tiny, precomputed once in JAX)
# --------------------------------------------------------------------------- #
def rope_cos_sin(seq_len, head_dim, theta):
    inv_freq = 1.0 / (
        theta ** (jnp.arange(0, head_dim, 2, dtype=jnp.float32) / head_dim)
    )
    pos = jnp.arange(seq_len, dtype=jnp.float32)
    freqs = jnp.outer(pos, inv_freq)                    # (T, Dh/2)
    emb = jnp.concatenate([freqs, freqs], axis=-1)      # (T, Dh)
    return jnp.cos(emb), jnp.sin(emb)


def _rot_weight(w, num_heads, head_dim):
    # Columns permuted/signed so that  X @ w_rot == rotate_half(X @ w)  per head.
    lead = w.shape[:-1]
    w3 = w.reshape(*lead, num_heads, head_dim)
    w_rot = jnp.concatenate([-w3[..., head_dim // 2:], w3[..., :head_dim // 2]], axis=-1)
    return w_rot.reshape(w.shape)


def _num_batch_blocks(batch):
    # Single-TensorCore chips (v5e/v6e): fold the whole batch into one grid step so
    # matmul M = B*T.  Dual-core v7x: keep 2 parallel grid steps to use both cores.
    try:
        kind = jax.devices()[0].device_kind.lower()
    except Exception:
        return 1
    if "v7" in kind and batch >= 2 and batch % 2 == 0:
        return 2
    return 1


# --------------------------------------------------------------------------- #
# Full forward (LlamaEncoder.forward) — single pallas_call
# --------------------------------------------------------------------------- #
def llama_encoder_forward(x, params, cfg, *, single_buffer_weights=True,
                          num_batch_blocks=None):
    L, B, H, T = x.shape
    D = cfg["hidden_size"]
    NH = cfg["num_heads"]
    Dh = D // NH
    NL = cfg["num_layers"]
    I = cfg["intermediate_size"]
    in_size = L * H
    out_size = cfg["num_full_layers"] * cfg["num_full_heads"]
    out_pad = max(128, -(-out_size // 128) * 128)
    f32, bf16 = jnp.float32, jnp.bfloat16

    nb = num_batch_blocks if num_batch_blocks is not None else _num_batch_blocks(B)
    if B % nb != 0:
        nb = 1
    bb = B // nb            # sequences per grid step
    rows = bb * T           # matmul M per grid step

    # rearrange 'l b h t -> b t (l h)', then flatten (b t) into matmul rows.
    xe = jnp.transpose(x, (1, 3, 0, 2)).reshape(B * T, in_size)

    # RoPE tables tiled per head and per sequence-in-block.
    cos, sin = rope_cos_sin(T, Dh, cfg["rope_theta"])
    cos_f = jnp.tile(cos, (bb, NH))                     # (rows, D)
    sin_f = jnp.tile(sin, (bb, NH))

    # Fused QKV(+rot) weight, with 1/sqrt(Dh) folded into the q columns.
    scale = 1.0 / float(Dh) ** 0.5
    wq_s = params["wq"] * scale
    wqr_s = _rot_weight(params["wq"], NH, Dh) * scale
    wkr = _rot_weight(params["wk"], NH, Dh)
    wqkv = jnp.concatenate([wq_s, wqr_s, params["wk"], wkr, params["wv"]],
                           axis=-1).astype(bf16)        # (NL, D, 5D)
    wgu = jnp.concatenate([params["wg"], params["wu"]], axis=-1).astype(bf16)  # (NL, D, 2I)

    # Block-diagonal head selector and block-ones (per-head softmax denominator).
    row_head = jnp.repeat(jnp.arange(NH), T)            # (NH*T,)
    col_head = jnp.repeat(jnp.arange(NH), Dh)           # (D,)
    hmask = (row_head[:, None] == col_head[None, :]).astype(f32)   # (NH*T, D)
    bones = (row_head[:, None] == row_head[None, :]).astype(bf16)  # (NH*T, NH*T)

    outw_p = (jnp.zeros((D, out_pad), f32)
              .at[:, :out_size].set(params["out_proj_w"])).astype(bf16)
    outb_p = jnp.zeros((1, out_pad), f32).at[:, :out_size].set(params["out_proj_b"])

    kern = functools.partial(
        _encoder_kernel,
        num_layers=NL, num_heads=NH, head_dim=Dh, hidden=D, inter=I,
        seq_len=T, seqs_per_block=bb, eps=float(cfg["eps"]),
    )

    weights = [
        params["in_proj_w"].astype(bf16), params["in_proj_b"], cos_f, sin_f,
        hmask, bones, params["ln1"], wqkv, params["wo"].astype(bf16),
        params["ln2"], wgu, params["wd"].astype(bf16),
        params["final_norm_w"], outw_p, outb_p,
    ]

    def _wspec(shape):
        n = len(shape)
        idx = lambda i, _n=n: (0,) * _n
        if single_buffer_weights and hasattr(pl, "Buffered"):
            # Grid-invariant: one VMEM buffer is enough (never re-fetched).
            return pl.BlockSpec(shape, idx, pipeline_mode=pl.Buffered(1))
        return pl.BlockSpec(shape, idx)

    in_specs = [pl.BlockSpec((rows, in_size), lambda i: (i, 0))]
    in_specs += [_wspec(w.shape) for w in weights]

    y = pl.pallas_call(
        kern,
        grid=(nb,),
        in_specs=in_specs,
        out_specs=pl.BlockSpec((rows, out_pad), lambda i: (i, 0)),
        out_shape=jax.ShapeDtypeStruct((B * T, out_pad), f32),
        compiler_params=pltpu.CompilerParams(
            dimension_semantics=("parallel",),
            vmem_limit_bytes=32 * 1024 * 1024,
        ),
    )(xe, *weights)

    # drop lane padding, then rearrange 'b t (l2 h2) -> l2 b h2 t'
    y = y[:, :out_size]
    L2, H2 = cfg["num_full_layers"], cfg["num_full_heads"]
    return jnp.transpose(y.reshape(B, T, L2, H2), (2, 0, 3, 1))


# --------------------------------------------------------------------------- #
# Pure-JAX reference (mirrors the torch module semantics) for validation
# --------------------------------------------------------------------------- #
def _reference_forward(x, params, cfg):
    L, B, H, T = x.shape
    D = cfg["hidden_size"]
    NH = cfg["num_heads"]
    Dh = D // NH

    xn = x / jnp.sum(x, axis=-1, keepdims=True)
    xe = jnp.transpose(xn, (1, 3, 0, 2)).reshape(B, T, L * H)
    h = xe @ params["in_proj_w"] + params["in_proj_b"]

    cos, sin = rope_cos_sin(T, Dh, cfg["rope_theta"])

    def rms(v, w):
        return v * jax.lax.rsqrt(jnp.mean(v * v, -1, keepdims=True) + cfg["eps"]) * w

    def rope(v):  # (B, NH, T, Dh)
        v1, v2 = v[..., : Dh // 2], v[..., Dh // 2:]
        return v * cos + jnp.concatenate([-v2, v1], axis=-1) * sin

    def heads(z):
        return jnp.transpose(z.reshape(B, T, NH, Dh), (0, 2, 1, 3))

    for li in range(cfg["num_layers"]):
        res = h
        hn = rms(h, params["ln1"][li])
        qh = rope(heads(hn @ params["wq"][li]))
        kh = rope(heads(hn @ params["wk"][li]))
        vh = heads(hn @ params["wv"][li])
        s = jnp.einsum("bhtd,bhsd->bhts", qh, kh) / (Dh ** 0.5)
        p = jax.nn.softmax(s, axis=-1)
        o = jnp.einsum("bhts,bhsd->bhtd", p, vh)
        o = jnp.transpose(o, (0, 2, 1, 3)).reshape(B, T, D)
        h = res + o @ params["wo"][li]

        res = h
        hn = rms(h, params["ln2"][li])
        g = hn @ params["wg"][li]
        u = hn @ params["wu"][li]
        h = res + (jax.nn.silu(g) * u) @ params["wd"][li]

    h = rms(h, params["final_norm_w"])
    y = h @ params["out_proj_w"] + params["out_proj_b"]
    L2, H2 = cfg["num_full_layers"], cfg["num_full_heads"]
    return jnp.transpose(y.reshape(B, T, L2, H2), (2, 0, 3, 1))


# --------------------------------------------------------------------------- #
# Deterministic parameter init (synthetic; weights stored (in, out))
# --------------------------------------------------------------------------- #
def init_params(key, cfg, input_size, output_size):
    D = cfg["hidden_size"]
    I = cfg["intermediate_size"]
    NL = cfg["num_layers"]
    keys = iter(jax.random.split(key, 64))

    def mat(shape, scale=0.05):
        return jax.random.normal(next(keys), shape, jnp.float32) * scale

    return {
        "in_proj_w": mat((input_size, D)),
        "in_proj_b": mat((1, D), 0.01),
        "out_proj_w": mat((D, output_size)),
        "out_proj_b": mat((1, output_size), 0.01),
        "final_norm_w": jnp.ones((1, D), jnp.float32),
        "ln1": jnp.ones((NL, 1, D), jnp.float32),
        "wq": mat((NL, D, D)),
        "wk": mat((NL, D, D)),
        "wv": mat((NL, D, D)),
        "wo": mat((NL, D, D)),
        "ln2": jnp.ones((NL, 1, D), jnp.float32),
        "wg": mat((NL, D, I)),
        "wu": mat((NL, D, I)),
        "wd": mat((NL, I, D)),
    }


# --------------------------------------------------------------------------- #
if __name__ == "__main__":
    key = jax.random.PRNGKey(0)
    kx, kp = jax.random.split(key)

    # module hyper-params (small)
    num_draft_layers, num_draft_heads = 2, 4   # input_size  = 8
    num_full_layers, num_full_heads = 3, 4     # output_size = 12
    batch, seq_len = 2, 8

    cfg = dict(
        hidden_size=32,
        num_layers=2,
        num_heads=4,
        intermediate_size=64,
        eps=1e-6,
        rope_theta=10000.0,
        num_full_layers=num_full_layers,
        num_full_heads=num_full_heads,
    )
    input_size = num_draft_layers * num_draft_heads
    output_size = num_full_layers * num_full_heads

    params = init_params(kp, cfg, input_size, output_size)

    # x: (l, b, h, t) — positive values so the row-sum normalization is well-posed.
    x = jax.random.uniform(
        kx,
        (num_draft_layers, batch, num_draft_heads, seq_len),
        jnp.float32,
        minval=0.1,
        maxval=1.0,
    )

    def _run(single_buffer):
        f = jax.jit(functools.partial(
            llama_encoder_forward, cfg=cfg, single_buffer_weights=single_buffer))
        out = f(x, params)
        jax.block_until_ready(out)
        return out

    try:
        y = _run(True)
    except Exception:
        # Fallback for jax versions without single-buffer pipeline_mode support.
        y = _run(False)

    assert y.shape == (num_full_layers, batch, num_full_heads, seq_len), y.shape
    assert bool(jnp.all(jnp.isfinite(y)))

    # validate against a pure-JAX reference (high-precision matmuls)
    with jax.default_matmul_precision("float32"):
        y_ref = jax.jit(lambda xx, pp: _reference_forward(xx, pp, cfg))(x, params)
    jax.block_until_ready(y_ref)
    max_err = float(jnp.max(jnp.abs(y - y_ref)))
    # bf16 matmul operands + approx-reciprocal softmax => loose tolerance
    assert max_err < 2e-2, f"max abs err vs reference: {max_err}"

    print("KERNEL_OK")
</pallas_src>

<mosaic_0001>
module attributes {stable_mosaic.version = 11 : i64} {
  func.func @_encoder_kernel(%arg0: i32, %arg1: memref<16x8xf32, #tpu.memory_space<vmem>>, %arg2: memref<8x32xbf16, #tpu.memory_space<vmem>>, %arg3: memref<1x32xf32, #tpu.memory_space<vmem>>, %arg4: memref<16x32xf32, #tpu.memory_space<vmem>>, %arg5: memref<16x32xf32, #tpu.memory_space<vmem>>, %arg6: memref<32x32xf32, #tpu.memory_space<vmem>>, %arg7: memref<32x32xbf16, #tpu.memory_space<vmem>>, %arg8: memref<2x1x32xf32, #tpu.memory_space<vmem>>, %arg9: memref<2x32x160xbf16, #tpu.memory_space<vmem>>, %arg10: memref<2x32x32xbf16, #tpu.memory_space<vmem>>, %arg11: memref<2x1x32xf32, #tpu.memory_space<vmem>>, %arg12: memref<2x32x128xbf16, #tpu.memory_space<vmem>>, %arg13: memref<2x64x32xbf16, #tpu.memory_space<vmem>>, %arg14: memref<1x32xf32, #tpu.memory_space<vmem>>, %arg15: memref<32x128xbf16, #tpu.memory_space<vmem>>, %arg16: memref<1x128xf32, #tpu.memory_space<vmem>>, %arg17: memref<16x128xf32, #tpu.memory_space<vmem>>) attributes {dimension_semantics = [#tpu.dimension_semantics<parallel>], iteration_bounds = array<i64: 1>, scalar_prefetch = 0 : i64, scratch_operands = 0 : i64, tpu.core_type = #tpu.core_type<tc>, window_params = [{transform_indices = @transform_0, window_bounds = array<i64: 16, 8>}, {pipeline_mode = #tpu.pipeline_mode<synchronous>, transform_indices = @transform_1, window_bounds = array<i64: 8, 32>}, {pipeline_mode = #tpu.pipeline_mode<synchronous>, transform_indices = @transform_2, window_bounds = array<i64: 1, 32>}, {pipeline_mode = #tpu.pipeline_mode<synchronous>, transform_indices = @transform_3, window_bounds = array<i64: 16, 32>}, {pipeline_mode = #tpu.pipeline_mode<synchronous>, transform_indices = @transform_4, window_bounds = array<i64: 16, 32>}, {pipeline_mode = #tpu.pipeline_mode<synchronous>, transform_indices = @transform_5, window_bounds = array<i64: 32, 32>}, {pipeline_mode = #tpu.pipeline_mode<synchronous>, transform_indices = @transform_6, window_bounds = array<i64: 32, 32>}, {pipeline_mode = #tpu.pipeline_mode<synchronous>, transform_indices = @transform_7, window_bounds = array<i64: 2, 1, 32>}, {pipeline_mode = #tpu.pipeline_mode<synchronous>, transform_indices = @transform_8, window_bounds = array<i64: 2, 32, 160>}, {pipeline_mode = #tpu.pipeline_mode<synchronous>, transform_indices = @transform_9, window_bounds = array<i64: 2, 32, 32>}, {pipeline_mode = #tpu.pipeline_mode<synchronous>, transform_indices = @transform_10, window_bounds = array<i64: 2, 1, 32>}, {pipeline_mode = #tpu.pipeline_mode<synchronous>, transform_indices = @transform_11, window_bounds = array<i64: 2, 32, 128>}, {pipeline_mode = #tpu.pipeline_mode<synchronous>, transform_indices = @transform_12, window_bounds = array<i64: 2, 64, 32>}, {pipeline_mode = #tpu.pipeline_mode<synchronous>, transform_indices = @transform_13, window_bounds = array<i64: 1, 32>}, {pipeline_mode = #tpu.pipeline_mode<synchronous>, transform_indices = @transform_14, window_bounds = array<i64: 32, 128>}, {pipeline_mode = #tpu.pipeline_mode<synchronous>, transform_indices = @transform_15, window_bounds = array<i64: 1, 128>}, {transform_indices = @transform_16, window_bounds = array<i64: 16, 128>}]} {
    %c0 = arith.constant 0 : index
    %c0_0 = arith.constant 0 : index
    %0 = vector.load %arg1[%c0, %c0_0] : memref<16x8xf32, #tpu.memory_space<vmem>>, vector<16x8xf32>
    %1 = vector.extract_strided_slice %0 {offsets = [0, 0], sizes = [8, 8], strides = [1, 1]} : vector<16x8xf32> to vector<8x8xf32>
    %cst = arith.constant dense<0.000000e+00> : vector<8xf32>
    %2 = vector.multi_reduction <add>, %1, %cst [0] : vector<8x8xf32> to vector<8xf32>
    %3 = vector.shape_cast %2 : vector<8xf32> to vector<1x8xf32>
    %4 = vector.broadcast %3 : vector<1x8xf32> to vector<8x8xf32>
    %5 = arith.divf %1, %4 : vector<8x8xf32>
    %6 = vector.extract_strided_slice %0 {offsets = [8, 0], sizes = [8, 8], strides = [1, 1]} : vector<16x8xf32> to vector<8x8xf32>
    %cst_1 = arith.constant dense<0.000000e+00> : vector<8xf32>
    %7 = vector.multi_reduction <add>, %6, %cst_1 [0] : vector<8x8xf32> to vector<8xf32>
    %8 = vector.shape_cast %7 : vector<8xf32> to vector<1x8xf32>
    %9 = vector.broadcast %8 : vector<1x8xf32> to vector<8x8xf32>
    %10 = arith.divf %6, %9 : vector<8x8xf32>
    %11 = tpu.concatenate %5, %10 in 0 : vector<8x8xf32>, vector<8x8xf32> -> vector<16x8xf32>
    %12 = arith.truncf %11 : vector<16x8xf32> to vector<16x8xbf16>
    %c0_2 = arith.constant 0 : index
    %c0_3 = arith.constant 0 : index
    %13 = vector.load %arg2[%c0_2, %c0_3] : memref<8x32xbf16, #tpu.memory_space<vmem>>, vector<8x32xbf16>
    %cst_4 = arith.constant dense<0.000000e+00> : vector<16x32xf32>
    %14 = tpu.matmul %12, %13, %cst_4 {dimension_numbers = #tpu.dot_dimension_numbers<[1], [0], [0], [1], [0, 0, 1, 1], [], []>} : vector<16x8xbf16>, vector<8x32xbf16>, vector<16x32xf32> -> vector<16x32xf32>
    %c0_5 = arith.constant 0 : index
    %c0_6 = arith.constant 0 : index
    %15 = vector.load %arg3[%c0_5, %c0_6] : memref<1x32xf32, #tpu.memory_space<vmem>>, vector<1x32xf32>
    %16 = vector.broadcast %15 : vector<1x32xf32> to vector<16x32xf32>
    %17 = arith.addf %14, %16 : vector<16x32xf32>
    %c0_7 = arith.constant 0 : index
    %c0_8 = arith.constant 0 : index
    %18 = vector.load %arg4[%c0_7, %c0_8] : memref<16x32xf32, #tpu.memory_space<vmem>>, vector<16x32xf32>
    %c0_9 = arith.constant 0 : index
    %c0_10 = arith.constant 0 : index
    %19 = vector.load %arg5[%c0_9, %c0_10] : memref<16x32xf32, #tpu.memory_space<vmem>>, vector<16x32xf32>
    %c0_11 = arith.constant 0 : index
    %c0_12 = arith.constant 0 : index
    %20 = vector.load %arg6[%c0_11, %c0_12] : memref<32x32xf32, #tpu.memory_space<vmem>>, vector<32x32xf32>
    %c0_13 = arith.constant 0 : index
    %c0_14 = arith.constant 0 : index
    %21 = vector.load %arg7[%c0_13, %c0_14] : memref<32x32xbf16, #tpu.memory_space<vmem>>, vector<32x32xbf16>
    %c0_15 = arith.constant 0 : index
    %c0_16 = arith.constant 0 : index
    %c0_17 = arith.constant 0 : index
    %22 = vector.load %arg8[%c0_15, %c0_16, %c0_17] : memref<2x1x32xf32, #tpu.memory_space<vmem>>, vector<1x1x32xf32>
    %23 = vector.shape_cast %22 : vector<1x1x32xf32> to vector<1x32xf32>
    %24 = arith.mulf %17, %17 : vector<16x32xf32>
    %cst_18 = arith.constant dense<0.000000e+00> : vector<16xf32>
    %25 = vector.multi_reduction <add>, %24, %cst_18 [1] : vector<16x32xf32> to vector<16xf32>
    %26 = vector.shape_cast %25 : vector<16xf32> to vector<16x1xf32>
    %cst_19 = arith.constant 3.200000e+01 : f32
    %27 = vector.broadcast %cst_19 : f32 to vector<16x1xf32>
    %28 = arith.divf %26, %27 : vector<16x1xf32>
    %cst_20 = arith.constant 9.99999997E-7 : f32
    %29 = vector.broadcast %cst_20 : f32 to vector<16x1xf32>
    %30 = arith.addf %28, %29 : vector<16x1xf32>
    %31 = math.rsqrt %30 : vector<16x1xf32>
    %32 = vector.broadcast %31 : vector<16x1xf32> to vector<16x32xf32>
    %33 = arith.mulf %17, %32 : vector<16x32xf32>
    %34 = vector.broadcast %23 : vector<1x32xf32> to vector<16x32xf32>
    %35 = arith.mulf %33, %34 : vector<16x32xf32>
    %36 = arith.truncf %35 : vector<16x32xf32> to vector<16x32xbf16>
    %c0_21 = arith.constant 0 : index
    %c0_22 = arith.constant 0 : index
    %c0_23 = arith.constant 0 : index
    %37 = vector.load %arg9[%c0_21, %c0_22, %c0_23] : memref<2x32x160xbf16, #tpu.memory_space<vmem>>, vector<1x32x160xbf16>
    %38 = vector.shape_cast %37 : vector<1x32x160xbf16> to vector<32x160xbf16>
    %cst_24 = arith.constant dense<0.000000e+00> : vector<16x160xf32>
    %39 = tpu.matmul %36, %38, %cst_24 {dimension_numbers = #tpu.dot_dimension_numbers<[1], [0], [0], [1], [0, 0, 1, 1], [], []>} : vector<16x32xbf16>, vector<32x160xbf16>, vector<16x160xf32> -> vector<16x160xf32>
    %40 = vector.extract_strided_slice %39 {offsets = [0, 0], sizes = [16, 32], strides = [1, 1]} : vector<16x160xf32> to vector<16x32xf32>
    %41 = vector.extract_strided_slice %39 {offsets = [0, 32], sizes = [16, 32], strides = [1, 1]} : vector<16x160xf32> to vector<16x32xf32>
    %42 = vector.extract_strided_slice %39 {offsets = [0, 64], sizes = [16, 32], strides = [1, 1]} : vector<16x160xf32> to vector<16x32xf32>
    %43 = vector.extract_strided_slice %39 {offsets = [0, 96], sizes = [16, 32], strides = [1, 1]} : vector<16x160xf32> to vector<16x32xf32>
    %44 = vector.extract_strided_slice %39 {offsets = [0, 128], sizes = [16, 32], strides = [1, 1]} : vector<16x160xf32> to vector<16x32xf32>
    %45 = arith.mulf %40, %18 : vector<16x32xf32>
    %46 = arith.mulf %41, %19 : vector<16x32xf32>
    %47 = arith.addf %45, %46 : vector<16x32xf32>
    %48 = arith.mulf %42, %18 : vector<16x32xf32>
    %49 = arith.mulf %43, %19 : vector<16x32xf32>
    %50 = arith.addf %48, %49 : vector<16x32xf32>
    %51 = vector.extract_strided_slice %47 {offsets = [0, 0], sizes = [8, 32], strides = [1, 1]} : vector<16x32xf32> to vector<8x32xf32>
    %52 = arith.truncf %51 : vector<8x32xf32> to vector<8x32xbf16>
    %53 = vector.extract_strided_slice %50 {offsets = [0, 0], sizes = [8, 32], strides = [1, 1]} : vector<16x32xf32> to vector<8x32xf32>
    %54 = tpu.concatenate %53, %53, %53, %53 in 0 : vector<8x32xf32>, vector<8x32xf32>, vector<8x32xf32>, vector<8x32xf32> -> vector<32x32xf32>
    %55 = arith.mulf %54, %20 : vector<32x32xf32>
    %56 = arith.truncf %55 : vector<32x32xf32> to vector<32x32xbf16>
    %57 = vector.extract_strided_slice %44 {offsets = [0, 0], sizes = [8, 32], strides = [1, 1]} : vector<16x32xf32> to vector<8x32xf32>
    %58 = tpu.concatenate %57, %57, %57, %57 in 0 : vector<8x32xf32>, vector<8x32xf32>, vector<8x32xf32>, vector<8x32xf32> -> vector<32x32xf32>
    %59 = arith.mulf %58, %20 : vector<32x32xf32>
    %60 = arith.truncf %59 : vector<32x32xf32> to vector<32x32xbf16>
    %cst_25 = arith.constant dense<0.000000e+00> : vector<8x32xf32>
    %61 = tpu.matmul %52, %56, %cst_25 {dimension_numbers = #tpu.dot_dimension_numbers<[1], [1], [0], [0], [0, 0, 1, 0], [], []>} : vector<8x32xbf16>, vector<32x32xbf16>, vector<8x32xf32> -> vector<8x32xf32>
    %cst_26 = arith.constant dense<0xFF800000> : vector<8xf32>
    %62 = vector.multi_reduction <maximumf>, %61, %cst_26 [1] : vector<8x32xf32> to vector<8xf32>
    %63 = vector.shape_cast %62 : vector<8xf32> to vector<8x1xf32>
    %64 = vector.broadcast %63 : vector<8x1xf32> to vector<8x32xf32>
    %65 = arith.subf %61, %64 : vector<8x32xf32>
    %66 = math.exp %65 : vector<8x32xf32>
    %67 = arith.truncf %66 : vector<8x32xf32> to vector<8x32xbf16>
    %cst_27 = arith.constant dense<0.000000e+00> : vector<8x32xf32>
    %68 = tpu.matmul %67, %21, %cst_27 {dimension_numbers = #tpu.dot_dimension_numbers<[1], [0], [0], [1], [0, 0, 1, 1], [], []>} : vector<8x32xbf16>, vector<32x32xbf16>, vector<8x32xf32> -> vector<8x32xf32>
    %69 = tpu.reciprocal %68 {approx = true} : vector<8x32xf32> -> vector<8x32xf32>
    %70 = arith.mulf %66, %69 : vector<8x32xf32>
    %71 = arith.truncf %70 : vector<8x32xf32> to vector<8x32xbf16>
    %cst_28 = arith.constant dense<0.000000e+00> : vector<8x32xf32>
    %72 = tpu.matmul %71, %60, %cst_28 {dimension_numbers = #tpu.dot_dimension_numbers<[1], [0], [0], [1], [0, 0, 1, 1], [], []>} : vector<8x32xbf16>, vector<32x32xbf16>, vector<8x32xf32> -> vector<8x32xf32>
    %73 = vector.extract_strided_slice %47 {offsets = [8, 0], sizes = [8, 32], strides = [1, 1]} : vector<16x32xf32> to vector<8x32xf32>
    %74 = arith.truncf %73 : vector<8x32xf32> to vector<8x32xbf16>
    %75 = vector.extract_strided_slice %50 {offsets = [8, 0], sizes = [8, 32], strides = [1, 1]} : vector<16x32xf32> to vector<8x32xf32>
    %76 = tpu.concatenate %75, %75, %75, %75 in 0 : vector<8x32xf32>, vector<8x32xf32>, vector<8x32xf32>, vector<8x32xf32> -> vector<32x32xf32>
    %77 = arith.mulf %76, %20 : vector<32x32xf32>
    %78 = arith.truncf %77 : vector<32x32xf32> to vector<32x32xbf16>
    %79 = vector.extract_strided_slice %44 {offsets = [8, 0], sizes = [8, 32], strides = [1, 1]} : vector<16x32xf32> to vector<8x32xf32>
    %80 = tpu.concatenate %79, %79, %79, %79 in 0 : vector<8x32xf32>, vector<8x32xf32>, vector<8x32xf32>, vector<8x32xf32> -> vector<32x32xf32>
    %81 = arith.mulf %80, %20 : vector<32x32xf32>
    %82 = arith.truncf %81 : vector<32x32xf32> to vector<32x32xbf16>
    %cst_29 = arith.constant dense<0.000000e+00> : vector<8x32xf32>
    %83 = tpu.matmul %74, %78, %cst_29 {dimension_numbers = #tpu.dot_dimension_numbers<[1], [1], [0], [0], [0, 0, 1, 0], [], []>} : vector<8x32xbf16>, vector<32x32xbf16>, vector<8x32xf32> -> vector<8x32xf32>
    %cst_30 = arith.constant dense<0xFF800000> : vector<8xf32>
    %84 = vector.multi_reduction <maximumf>, %83, %cst_30 [1] : vector<8x32xf32> to vector<8xf32>
    %85 = vector.shape_cast %84 : vector<8xf32> to vector<8x1xf32>
    %86 = vector.broadcast %85 : vector<8x1xf32> to vector<8x32xf32>
    %87 = arith.subf %83, %86 : vector<8x32xf32>
    %88 = math.exp %87 : vector<8x32xf32>
    %89 = arith.truncf %88 : vector<8x32xf32> to vector<8x32xbf16>
    %cst_31 = arith.constant dense<0.000000e+00> : vector<8x32xf32>
    %90 = tpu.matmul %89, %21, %cst_31 {dimension_numbers = #tpu.dot_dimension_numbers<[1], [0], [0], [1], [0, 0, 1, 1], [], []>} : vector<8x32xbf16>, vector<32x32xbf16>, vector<8x32xf32> -> vector<8x32xf32>
    %91 = tpu.reciprocal %90 {approx = true} : vector<8x32xf32> -> vector<8x32xf32>
    %92 = arith.mulf %88, %91 : vector<8x32xf32>
    %93 = arith.truncf %92 : vector<8x32xf32> to vector<8x32xbf16>
    %cst_32 = arith.constant dense<0.000000e+00> : vector<8x32xf32>
    %94 = tpu.matmul %93, %82, %cst_32 {dimension_numbers = #tpu.dot_dimension_numbers<[1], [0], [0], [1], [0, 0, 1, 1], [], []>} : vector<8x32xbf16>, vector<32x32xbf16>, vector<8x32xf32> -> vector<8x32xf32>
    %95 = tpu.concatenate %72, %94 in 0 : vector<8x32xf32>, vector<8x32xf32> -> vector<16x32xf32>
    %96 = arith.truncf %95 : vector<16x32xf32> to vector<16x32xbf16>
    %c0_33 = arith.constant 0 : index
    %c0_34 = arith.constant 0 : index
    %c0_35 = arith.constant 0 : index
    %97 = vector.load %arg10[%c0_33, %c0_34, %c0_35] : memref<2x32x32xbf16, #tpu.memory_space<vmem>>, vector<1x32x32xbf16>
    %98 = vector.shape_cast %97 : vector<1x32x32xbf16> to vector<32x32xbf16>
    %cst_36 = arith.constant dense<0.000000e+00> : vector<16x32xf32>
    %99 = tpu.matmul %96, %98, %cst_36 {dimension_numbers = #tpu.dot_dimension_numbers<[1], [0], [0], [1], [0, 0, 1, 1], [], []>} : vector<16x32xbf16>, vector<32x32xbf16>, vector<16x32xf32> -> vector<16x32xf32>
    %100 = arith.addf %17, %99 : vector<16x32xf32>
    %c0_37 = arith.constant 0 : index
    %c0_38 = arith.constant 0 : index
    %c0_39 = arith.constant 0 : index
    %101 = vector.load %arg11[%c0_37, %c0_38, %c0_39] : memref<2x1x32xf32, #tpu.memory_space<vmem>>, vector<1x1x32xf32>
    %102 = vector.shape_cast %101 : vector<1x1x32xf32> to vector<1x32xf32>
    %103 = arith.mulf %100, %100 : vector<16x32xf32>
    %cst_40 = arith.constant dense<0.000000e+00> : vector<16xf32>
    %104 = vector.multi_reduction <add>, %103, %cst_40 [1] : vector<16x32xf32> to vector<16xf32>
    %105 = vector.shape_cast %104 : vector<16xf32> to vector<16x1xf32>
    %cst_41 = arith.constant 3.200000e+01 : f32
    %106 = vector.broadcast %cst_41 : f32 to vector<16x1xf32>
    %107 = arith.divf %105, %106 : vector<16x1xf32>
    %cst_42 = arith.constant 9.99999997E-7 : f32
    %108 = vector.broadcast %cst_42 : f32 to vector<16x1xf32>
    %109 = arith.addf %107, %108 : vector<16x1xf32>
    %110 = math.rsqrt %109 : vector<16x1xf32>
    %111 = vector.broadcast %110 : vector<16x1xf32> to vector<16x32xf32>
    %112 = arith.mulf %100, %111 : vector<16x32xf32>
    %113 = vector.broadcast %102 : vector<1x32xf32> to vector<16x32xf32>
    %114 = arith.mulf %112, %113 : vector<16x32xf32>
    %115 = arith.truncf %114 : vector<16x32xf32> to vector<16x32xbf16>
    %c0_43 = arith.constant 0 : index
    %c0_44 = arith.constant 0 : index
    %c0_45 = arith.constant 0 : index
    %116 = vector.load %arg12[%c0_43, %c0_44, %c0_45] : memref<2x32x128xbf16, #tpu.memory_space<vmem>>, vector<1x32x128xbf16>
    %117 = vector.shape_cast %116 : vector<1x32x128xbf16> to vector<32x128xbf16>
    %cst_46 = arith.constant dense<0.000000e+00> : vector<16x128xf32>
    %118 = tpu.matmul %115, %117, %cst_46 {dimension_numbers = #tpu.dot_dimension_numbers<[1], [0], [0], [1], [0, 0, 1, 1], [], []>} : vector<16x32xbf16>, vector<32x128xbf16>, vector<16x128xf32> -> vector<16x128xf32>
    %119 = vector.extract_strided_slice %118 {offsets = [0, 0], sizes = [16, 64], strides = [1, 1]} : vector<16x128xf32> to vector<16x64xf32>
    %120 = vector.extract_strided_slice %118 {offsets = [0, 64], sizes = [16, 64], strides = [1, 1]} : vector<16x128xf32> to vector<16x64xf32>
    %cst_47 = arith.constant 0.000000e+00 : f32
    %121 = vector.broadcast %cst_47 : f32 to vector<16x64xf32>
    %122 = arith.subf %121, %119 : vector<16x64xf32>
    %123 = math.exp %122 : vector<16x64xf32>
    %cst_48 = arith.constant 1.000000e+00 : f32
    %124 = vector.broadcast %cst_48 : f32 to vector<16x64xf32>
    %125 = arith.addf %124, %123 : vector<16x64xf32>
    %126 = tpu.reciprocal %125 {approx = true} : vector<16x64xf32> -> vector<16x64xf32>
    %127 = arith.mulf %119, %126 : vector<16x64xf32>
    %128 = arith.mulf %127, %120 : vector<16x64xf32>
    %129 = arith.truncf %128 : vector<16x64xf32> to vector<16x64xbf16>
    %c0_49 = arith.constant 0 : index
    %c0_50 = arith.constant 0 : index
    %c0_51 = arith.constant 0 : index
    %130 = vector.load %arg13[%c0_49, %c0_50, %c0_51] : memref<2x64x32xbf16, #tpu.memory_space<vmem>>, vector<1x64x32xbf16>
    %131 = vector.shape_cast %130 : vector<1x64x32xbf16> to vector<64x32xbf16>
    %cst_52 = arith.constant dense<0.000000e+00> : vector<16x32xf32>
    %132 = tpu.matmul %129, %131, %cst_52 {dimension_numbers = #tpu.dot_dimension_numbers<[1], [0], [0], [1], [0, 0, 1, 1], [], []>} : vector<16x64xbf16>, vector<64x32xbf16>, vector<16x32xf32> -> vector<16x32xf32>
    %133 = arith.addf %100, %132 : vector<16x32xf32>
    %c1 = arith.constant 1 : index
    %c0_53 = arith.constant 0 : index
    %c0_54 = arith.constant 0 : index
    %134 = vector.load %arg8[%c1, %c0_53, %c0_54] : memref<2x1x32xf32, #tpu.memory_space<vmem>>, vector<1x1x32xf32>
    %135 = vector.shape_cast %134 : vector<1x1x32xf32> to vector<1x32xf32>
    %136 = arith.mulf %133, %133 : vector<16x32xf32>
    %cst_55 = arith.constant dense<0.000000e+00> : vector<16xf32>
    %137 = vector.multi_reduction <add>, %136, %cst_55 [1] : vector<16x32xf32> to vector<16xf32>
    %138 = vector.shape_cast %137 : vector<16xf32> to vector<16x1xf32>
    %cst_56 = arith.constant 3.200000e+01 : f32
    %139 = vector.broadcast %cst_56 : f32 to vector<16x1xf32>
    %140 = arith.divf %138, %139 : vector<16x1xf32>
    %cst_57 = arith.constant 9.99999997E-7 : f32
    %141 = vector.broadcast %cst_57 : f32 to vector<16x1xf32>
    %142 = arith.addf %140, %141 : vector<16x1xf32>
    %143 = math.rsqrt %142 : vector<16x1xf32>
    %144 = vector.broadcast %143 : vector<16x1xf32> to vector<16x32xf32>
    %145 = arith.mulf %133, %144 : vector<16x32xf32>
    %146 = vector.broadcast %135 : vector<1x32xf32> to vector<16x32xf32>
    %147 = arith.mulf %145, %146 : vector<16x32xf32>
    %148 = arith.truncf %147 : vector<16x32xf32> to vector<16x32xbf16>
    %c1_58 = arith.constant 1 : index
    %c0_59 = arith.constant 0 : index
    %c0_60 = arith.constant 0 : index
    %149 = vector.load %arg9[%c1_58, %c0_59, %c0_60] : memref<2x32x160xbf16, #tpu.memory_space<vmem>>, vector<1x32x160xbf16>
    %150 = vector.shape_cast %149 : vector<1x32x160xbf16> to vector<32x160xbf16>
    %cst_61 = arith.constant dense<0.000000e+00> : vector<16x160xf32>
    %151 = tpu.matmul %148, %150, %cst_61 {dimension_numbers = #tpu.dot_dimension_numbers<[1], [0], [0], [1], [0, 0, 1, 1], [], []>} : vector<16x32xbf16>, vector<32x160xbf16>, vector<16x160xf32> -> vector<16x160xf32>
    %152 = vector.extract_strided_slice %151 {offsets = [0, 0], sizes = [16, 32], strides = [1, 1]} : vector<16x160xf32> to vector<16x32xf32>
    %153 = vector.extract_strided_slice %151 {offsets = [0, 32], sizes = [16, 32], strides = [1, 1]} : vector<16x160xf32> to vector<16x32xf32>
    %154 = vector.extract_strided_slice %151 {offsets = [0, 64], sizes = [16, 32], strides = [1, 1]} : vector<16x160xf32> to vector<16x32xf32>
    %155 = vector.extract_strided_slice %151 {offsets = [0, 96], sizes = [16, 32], strides = [1, 1]} : vector<16x160xf32> to vector<16x32xf32>
    %156 = vector.extract_strided_slice %151 {offsets = [0, 128], sizes = [16, 32], strides = [1, 1]} : vector<16x160xf32> to vector<16x32xf32>
    %157 = arith.mulf %152, %18 : vector<16x32xf32>
    %158 = arith.mulf %153, %19 : vector<16x32xf32>
    %159 = arith.addf %157, %158 : vector<16x32xf32>
    %160 = arith.mulf %154, %18 : vector<16x32xf32>
    %161 = arith.mulf %155, %19 : vector<16x32xf32>
    %162 = arith.addf %160, %161 : vector<16x32xf32>
    %163 = vector.extract_strided_slice %159 {offsets = [0, 0], sizes = [8, 32], strides = [1, 1]} : vector<16x32xf32> to vector<8x32xf32>
    %164 = arith.truncf %163 : vector<8x32xf32> to vector<8x32xbf16>
    %165 = vector.extract_strided_slice %162 {offsets = [0, 0], sizes = [8, 32], strides = [1, 1]} : vector<16x32xf32> to vector<8x32xf32>
    %166 = tpu.concatenate %165, %165, %165, %165 in 0 : vector<8x32xf32>, vector<8x32xf32>, vector<8x32xf32>, vector<8x32xf32> -> vector<32x32xf32>
    %167 = arith.mulf %166, %20 : vector<32x32xf32>
    %168 = arith.truncf %167 : vector<32x32xf32> to vector<32x32xbf16>
    %169 = vector.extract_strided_slice %156 {offsets = [0, 0], sizes = [8, 32], strides = [1, 1]} : vector<16x32xf32> to vector<8x32xf32>
    %170 = tpu.concatenate %169, %169, %169, %169 in 0 : vector<8x32xf32>, vector<8x32xf32>, vector<8x32xf32>, vector<8x32xf32> -> vector<32x32xf32>
    %171 = arith.mulf %170, %20 : vector<32x32xf32>
    %172 = arith.truncf %171 : vector<32x32xf32> to vector<32x32xbf16>
    %cst_62 = arith.constant dense<0.000000e+00> : vector<8x32xf32>
    %173 = tpu.matmul %164, %168, %cst_62 {dimension_numbers = #tpu.dot_dimension_numbers<[1], [1], [0], [0], [0, 0, 1, 0], [], []>} : vector<8x32xbf16>, vector<32x32xbf16>, vector<8x32xf32> -> vector<8x32xf32>
    %cst_63 = arith.constant dense<0xFF800000> : vector<8xf32>
    %174 = vector.multi_reduction <maximumf>, %173, %cst_63 [1] : vector<8x32xf32> to vector<8xf32>
    %175 = vector.shape_cast %174 : vector<8xf32> to vector<8x1xf32>
    %176 = vector.broadcast %175 : vector<8x1xf32> to vector<8x32xf32>
    %177 = arith.subf %173, %176 : vector<8x32xf32>
    %178 = math.exp %177 : vector<8x32xf32>
    %179 = arith.truncf %178 : vector<8x32xf32> to vector<8x32xbf16>
    %cst_64 = arith.constant dense<0.000000e+00> : vector<8x32xf32>
    %180 = tpu.matmul %179, %21, %cst_64 {dimension_numbers = #tpu.dot_dimension_numbers<[1], [0], [0], [1], [0, 0, 1, 1], [], []>} : vector<8x32xbf16>, vector<32x32xbf16>, vector<8x32xf32> -> vector<8x32xf32>
    %181 = tpu.reciprocal %180 {approx = true} : vector<8x32xf32> -> vector<8x32xf32>
    %182 = arith.mulf %178, %181 : vector<8x32xf32>
    %183 = arith.truncf %182 : vector<8x32xf32> to vector<8x32xbf16>
    %cst_65 = arith.constant dense<0.000000e+00> : vector<8x32xf32>
    %184 = tpu.matmul %183, %172, %cst_65 {dimension_numbers = #tpu.dot_dimension_numbers<[1], [0], [0], [1], [0, 0, 1, 1], [], []>} : vector<8x32xbf16>, vector<32x32xbf16>, vector<8x32xf32> -> vector<8x32xf32>
    %185 = vector.extract_strided_slice %159 {offsets = [8, 0], sizes = [8, 32], strides = [1, 1]} : vector<16x32xf32> to vector<8x32xf32>
    %186 = arith.truncf %185 : vector<8x32xf32> to vector<8x32xbf16>
    %187 = vector.extract_strided_slice %162 {offsets = [8, 0], sizes = [8, 32], strides = [1, 1]} : vector<16x32xf32> to vector<8x32xf32>
    %188 = tpu.concatenate %187, %187, %187, %187 in 0 : vector<8x32xf32>, vector<8x32xf32>, vector<8x32xf32>, vector<8x32xf32> -> vector<32x32xf32>
    %189 = arith.mulf %188, %20 : vector<32x32xf32>
    %190 = arith.truncf %189 : vector<32x32xf32> to vector<32x32xbf16>
    %191 = vector.extract_strided_slice %156 {offsets = [8, 0], sizes = [8, 32], strides = [1, 1]} : vector<16x32xf32> to vector<8x32xf32>
    %192 = tpu.concatenate %191, %191, %191, %191 in 0 : vector<8x32xf32>, vector<8x32xf32>, vector<8x32xf32>, vector<8x32xf32> -> vector<32x32xf32>
    %193 = arith.mulf %192, %20 : vector<32x32xf32>
    %194 = arith.truncf %193 : vector<32x32xf32> to vector<32x32xbf16>
    %cst_66 = arith.constant dense<0.000000e+00> : vector<8x32xf32>
    %195 = tpu.matmul %186, %190, %cst_66 {dimension_numbers = #tpu.dot_dimension_numbers<[1], [1], [0], [0], [0, 0, 1, 0], [], []>} : vector<8x32xbf16>, vector<32x32xbf16>, vector<8x32xf32> -> vector<8x32xf32>
    %cst_67 = arith.constant dense<0xFF800000> : vector<8xf32>
    %196 = vector.multi_reduction <maximumf>, %195, %cst_67 [1] : vector<8x32xf32> to vector<8xf32>
    %197 = vector.shape_cast %196 : vector<8xf32> to vector<8x1xf32>
    %198 = vector.broadcast %197 : vector<8x1xf32> to vector<8x32xf32>
    %199 = arith.subf %195, %198 : vector<8x32xf32>
    %200 = math.exp %199 : vector<8x32xf32>
    %201 = arith.truncf %200 : vector<8x32xf32> to vector<8x32xbf16>
    %cst_68 = arith.constant dense<0.000000e+00> : vector<8x32xf32>
    %202 = tpu.matmul %201, %21, %cst_68 {dimension_numbers = #tpu.dot_dimension_numbers<[1], [0], [0], [1], [0, 0, 1, 1], [], []>} : vector<8x32xbf16>, vector<32x32xbf16>, vector<8x32xf32> -> vector<8x32xf32>
    %203 = tpu.reciprocal %202 {approx = true} : vector<8x32xf32> -> vector<8x32xf32>
    %204 = arith.mulf %200, %203 : vector<8x32xf32>
    %205 = arith.truncf %204 : vector<8x32xf32> to vector<8x32xbf16>
    %cst_69 = arith.constant dense<0.000000e+00> : vector<8x32xf32>
    %206 = tpu.matmul %205, %194, %cst_69 {dimension_numbers = #tpu.dot_dimension_numbers<[1], [0], [0], [1], [0, 0, 1, 1], [], []>} : vector<8x32xbf16>, vector<32x32xbf16>, vector<8x32xf32> -> vector<8x32xf32>
    %207 = tpu.concatenate %184, %206 in 0 : vector<8x32xf32>, vector<8x32xf32> -> vector<16x32xf32>
    %208 = arith.truncf %207 : vector<16x32xf32> to vector<16x32xbf16>
    %c1_70 = arith.constant 1 : index
    %c0_71 = arith.constant 0 : index
    %c0_72 = arith.constant 0 : index
    %209 = vector.load %arg10[%c1_70, %c0_71, %c0_72] : memref<2x32x32xbf16, #tpu.memory_space<vmem>>, vector<1x32x32xbf16>
    %210 = vector.shape_cast %209 : vector<1x32x32xbf16> to vector<32x32xbf16>
    %cst_73 = arith.constant dense<0.000000e+00> : vector<16x32xf32>
    %211 = tpu.matmul %208, %210, %cst_73 {dimension_numbers = #tpu.dot_dimension_numbers<[1], [0], [0], [1], [0, 0, 1, 1], [], []>} : vector<16x32xbf16>, vector<32x32xbf16>, vector<16x32xf32> -> vector<16x32xf32>
    %212 = arith.addf %133, %211 : vector<16x32xf32>
    %c1_74 = arith.constant 1 : index
    %c0_75 = arith.constant 0 : index
    %c0_76 = arith.constant 0 : index
    %213 = vector.load %arg11[%c1_74, %c0_75, %c0_76] : memref<2x1x32xf32, #tpu.memory_space<vmem>>, vector<1x1x32xf32>
    %214 = vector.shape_cast %213 : vector<1x1x32xf32> to vector<1x32xf32>
    %215 = arith.mulf %212, %212 : vector<16x32xf32>
    %cst_77 = arith.constant dense<0.000000e+00> : vector<16xf32>
    %216 = vector.multi_reduction <add>, %215, %cst_77 [1] : vector<16x32xf32> to vector<16xf32>
    %217 = vector.shape_cast %216 : vector<16xf32> to vector<16x1xf32>
    %cst_78 = arith.constant 3.200000e+01 : f32
    %218 = vector.broadcast %cst_78 : f32 to vector<16x1xf32>
    %219 = arith.divf %217, %218 : vector<16x1xf32>
    %cst_79 = arith.constant 9.99999997E-7 : f32
    %220 = vector.broadcast %cst_79 : f32 to vector<16x1xf32>
    %221 = arith.addf %219, %220 : vector<16x1xf32>
    %222 = math.rsqrt %221 : vector<16x1xf32>
    %223 = vector.broadcast %222 : vector<16x1xf32> to vector<16x32xf32>
    %224 = arith.mulf %212, %223 : vector<16x32xf32>
    %225 = vector.broadcast %214 : vector<1x32xf32> to vector<16x32xf32>
    %226 = arith.mulf %224, %225 : vector<16x32xf32>
    %227 = arith.truncf %226 : vector<16x32xf32> to vector<16x32xbf16>
    %c1_80 = arith.constant 1 : index
    %c0_81 = arith.constant 0 : index
    %c0_82 = arith.constant 0 : index
    %228 = vector.load %arg12[%c1_80, %c0_81, %c0_82] : memref<2x32x128xbf16, #tpu.memory_space<vmem>>, vector<1x32x128xbf16>
    %229 = vector.shape_cast %228 : vector<1x32x128xbf16> to vector<32x128xbf16>
    %cst_83 = arith.constant dense<0.000000e+00> : vector<16x128xf32>
    %230 = tpu.matmul %227, %229, %cst_83 {dimension_numbers = #tpu.dot_dimension_numbers<[1], [0], [0], [1], [0, 0, 1, 1], [], []>} : vector<16x32xbf16>, vector<32x128xbf16>, vector<16x128xf32> -> vector<16x128xf32>
    %231 = vector.extract_strided_slice %230 {offsets = [0, 0], sizes = [16, 64], strides = [1, 1]} : vector<16x128xf32> to vector<16x64xf32>
    %232 = vector.extract_strided_slice %230 {offsets = [0, 64], sizes = [16, 64], strides = [1, 1]} : vector<16x128xf32> to vector<16x64xf32>
    %cst_84 = arith.constant 0.000000e+00 : f32
    %233 = vector.broadcast %cst_84 : f32 to vector<16x64xf32>
    %234 = arith.subf %233, %231 : vector<16x64xf32>
    %235 = math.exp %234 : vector<16x64xf32>
    %cst_85 = arith.constant 1.000000e+00 : f32
    %236 = vector.broadcast %cst_85 : f32 to vector<16x64xf32>
    %237 = arith.addf %236, %235 : vector<16x64xf32>
    %238 = tpu.reciprocal %237 {approx = true} : vector<16x64xf32> -> vector<16x64xf32>
    %239 = arith.mulf %231, %238 : vector<16x64xf32>
    %240 = arith.mulf %239, %232 : vector<16x64xf32>
    %241 = arith.truncf %240 : vector<16x64xf32> to vector<16x64xbf16>
    %c1_86 = arith.constant 1 : index
    %c0_87 = arith.constant 0 : index
    %c0_88 = arith.constant 0 : index
    %242 = vector.load %arg13[%c1_86, %c0_87, %c0_88] : memref<2x64x32xbf16, #tpu.memory_space<vmem>>, vector<1x64x32xbf16>
    %243 = vector.shape_cast %242 : vector<1x64x32xbf16> to vector<64x32xbf16>
    %cst_89 = arith.constant dense<0.000000e+00> : vector<16x32xf32>
    %244 = tpu.matmul %241, %243, %cst_89 {dimension_numbers = #tpu.dot_dimension_numbers<[1], [0], [0], [1], [0, 0, 1, 1], [], []>} : vector<16x64xbf16>, vector<64x32xbf16>, vector<16x32xf32> -> vector<16x32xf32>
    %245 = arith.addf %212, %244 : vector<16x32xf32>
    %c0_90 = arith.constant 0 : index
    %c0_91 = arith.constant 0 : index
    %246 = vector.load %arg14[%c0_90, %c0_91] : memref<1x32xf32, #tpu.memory_space<vmem>>, vector<1x32xf32>
    %247 = arith.mulf %245, %245 : vector<16x32xf32>
    %cst_92 = arith.constant dense<0.000000e+00> : vector<16xf32>
    %248 = vector.multi_reduction <add>, %247, %cst_92 [1] : vector<16x32xf32> to vector<16xf32>
    %249 = vector.shape_cast %248 : vector<16xf32> to vector<16x1xf32>
    %cst_93 = arith.constant 3.200000e+01 : f32
    %250 = vector.broadcast %cst_93 : f32 to vector<16x1xf32>
    %251 = arith.divf %249, %250 : vector<16x1xf32>
    %cst_94 = arith.constant 9.99999997E-7 : f32
    %252 = vector.broadcast %cst_94 : f32 to vector<16x1xf32>
    %253 = arith.addf %251, %252 : vector<16x1xf32>
    %254 = math.rsqrt %253 : vector<16x1xf32>
    %255 = vector.broadcast %254 : vector<16x1xf32> to vector<16x32xf32>
    %256 = arith.mulf %245, %255 : vector<16x32xf32>
    %257 = vector.broadcast %246 : vector<1x32xf32> to vector<16x32xf32>
    %258 = arith.mulf %256, %257 : vector<16x32xf32>
    %259 = arith.truncf %258 : vector<16x32xf32> to vector<16x32xbf16>
    %c0_95 = arith.constant 0 : index
    %c0_96 = arith.constant 0 : index
    %260 = vector.load %arg15[%c0_95, %c0_96] : memref<32x128xbf16, #tpu.memory_space<vmem>>, vector<32x128xbf16>
    %cst_97 = arith.constant dense<0.000000e+00> : vector<16x128xf32>
    %261 = tpu.matmul %259, %260, %cst_97 {dimension_numbers = #tpu.dot_dimension_numbers<[1], [0], [0], [1], [0, 0, 1, 1], [], []>} : vector<16x32xbf16>, vector<32x128xbf16>, vector<16x128xf32> -> vector<16x128xf32>
    %c0_98 = arith.constant 0 : index
    %c0_99 = arith.constant 0 : index
    %262 = vector.load %arg16[%c0_98, %c0_99] : memref<1x128xf32, #tpu.memory_space<vmem>>, vector<1x128xf32>
    %263 = vector.broadcast %262 : vector<1x128xf32> to vector<16x128xf32>
    %264 = arith.addf %261, %263 : vector<16x128xf32>
    %c0_100 = arith.constant 0 : index
    %c0_101 = arith.constant 0 : index
    %265 = vector.load %arg17[%c0_100, %c0_101] : memref<16x128xf32, #tpu.memory_space<vmem>>, vector<16x128xf32>
    tpu.vector_store %arg17[%c0_100, %c0_101], %264 {strides = array<i32>} : memref<16x128xf32, #tpu.memory_space<vmem>>, vector<16x128xf32>,
    return
  }
  func.func @transform_0(%arg0: i32) -> (i32, i32) {
    %c0_i32 = arith.constant 0 : i32
    %c0_i32_0 = arith.constant 0 : i32
    return %arg0, %c0_i32 : i32, i32
  }
  func.func @transform_1(%arg0: i32) -> (i32, i32) {
    %c0_i32 = arith.constant 0 : i32
    %c0_i32_0 = arith.constant 0 : i32
    %c0_i32_1 = arith.constant 0 : i32
    return %c0_i32, %c0_i32_0 : i32, i32
  }
  func.func @transform_2(%arg0: i32) -> (i32, i32) {
    %c0_i32 = arith.constant 0 : i32
    %c0_i32_0 = arith.constant 0 : i32
    %c0_i32_1 = arith.constant 0 : i32
    return %c0_i32, %c0_i32_0 : i32, i32
  }
  func.func @transform_3(%arg0: i32) -> (i32, i32) {
    %c0_i32 = arith.constant 0 : i32
    %c0_i32_0 = arith.constant 0 : i32
    %c0_i32_1 = arith.constant 0 : i32
    return %c0_i32, %c0_i32_0 : i32, i32
  }
  func.func @transform_4(%arg0: i32) -> (i32, i32) {
    %c0_i32 = arith.constant 0 : i32
    %c0_i32_0 = arith.constant 0 : i32
    %c0_i32_1 = arith.constant 0 : i32
    return %c0_i32, %c0_i32_0 : i32, i32
  }
  func.func @transform_5(%arg0: i32) -> (i32, i32) {
    %c0_i32 = arith.constant 0 : i32
    %c0_i32_0 = arith.constant 0 : i32
    %c0_i32_1 = arith.constant 0 : i32
    return %c0_i32, %c0_i32_0 : i32, i32
  }
  func.func @transform_6(%arg0: i32) -> (i32, i32) {
    %c0_i32 = arith.constant 0 : i32
    %c0_i32_0 = arith.constant 0 : i32
    %c0_i32_1 = arith.constant 0 : i32
    return %c0_i32, %c0_i32_0 : i32, i32
  }
  func.func @transform_7(%arg0: i32) -> (i32, i32, i32) {
    %c0_i32 = arith.constant 0 : i32
    %c0_i32_0 = arith.constant 0 : i32
    %c0_i32_1 = arith.constant 0 : i32
    %c0_i32_2 = arith.constant 0 : i32
    return %c0_i32, %c0_i32_0, %c0_i32_1 : i32, i32, i32
  }
  func.func @transform_8(%arg0: i32) -> (i32, i32, i32) {
    %c0_i32 = arith.constant 0 : i32
    %c0_i32_0 = arith.constant 0 : i32
    %c0_i32_1 = arith.constant 0 : i32
    %c0_i32_2 = arith.constant 0 : i32
    return %c0_i32, %c0_i32_0, %c0_i32_1 : i32, i32, i32
  }
  func.func @transform_9(%arg0: i32) -> (i32, i32, i32) {
    %c0_i32 = arith.constant 0 : i32
    %c0_i32_0 = arith.constant 0 : i32
    %c0_i32_1 = arith.constant 0 : i32
    %c0_i32_2 = arith.constant 0 : i32
    return %c0_i32, %c0_i32_0, %c0_i32_1 : i32, i32, i32
  }
  func.func @transform_10(%arg0: i32) -> (i32, i32, i32) {
    %c0_i32 = arith.constant 0 : i32
    %c0_i32_0 = arith.constant 0 : i32
    %c0_i32_1 = arith.constant 0 : i32
    %c0_i32_2 = arith.constant 0 : i32
    return %c0_i32, %c0_i32_0, %c0_i32_1 : i32, i32, i32
  }
  func.func @transform_11(%arg0: i32) -> (i32, i32, i32) {
    %c0_i32 = arith.constant 0 : i32
    %c0_i32_0 = arith.constant 0 : i32
    %c0_i32_1 = arith.constant 0 : i32
    %c0_i32_2 = arith.constant 0 : i32
    return %c0_i32, %c0_i32_0, %c0_i32_1 : i32, i32, i32
  }
  func.func @transform_12(%arg0: i32) -> (i32, i32, i32) {
    %c0_i32 = arith.constant 0 : i32
    %c0_i32_0 = arith.constant 0 : i32
    %c0_i32_1 = arith.constant 0 : i32
    %c0_i32_2 = arith.constant 0 : i32
    return %c0_i32, %c0_i32_0, %c0_i32_1 : i32, i32, i32
  }
  func.func @transform_13(%arg0: i32) -> (i32, i32) {
    %c0_i32 = arith.constant 0 : i32
    %c0_i32_0 = arith.constant 0 : i32
    %c0_i32_1 = arith.constant 0 : i32
    return %c0_i32, %c0_i32_0 : i32, i32
  }
  func.func @transform_14(%arg0: i32) -> (i32, i32) {
    %c0_i32 = arith.constant 0 : i32
    %c0_i32_0 = arith.constant 0 : i32
    %c0_i32_1 = arith.constant 0 : i32
    return %c0_i32, %c0_i32_0 : i32, i32
  }
  func.func @transform_15(%arg0: i32) -> (i32, i32) {
    %c0_i32 = arith.constant 0 : i32
    %c0_i32_0 = arith.constant 0 : i32
    %c0_i32_1 = arith.constant 0 : i32
    return %c0_i32, %c0_i32_0 : i32, i32
  }
  func.func @transform_16(%arg0: i32) -> (i32, i32) {
    %c0_i32 = arith.constant 0 : i32
    %c0_i32_0 = arith.constant 0 : i32
    return %arg0, %c0_i32 : i32, i32
  }
}

module attributes {stable_mosaic.version = 11 : i64} {
  func.func @_encoder_kernel(%arg0: i32, %arg1: memref<16x8xf32, #tpu.memory_space<vmem>>, %arg2: memref<8x32xbf16, #tpu.memory_space<vmem>>, %arg3: memref<1x32xf32, #tpu.memory_space<vmem>>, %arg4: memref<16x32xf32, #tpu.memory_space<vmem>>, %arg5: memref<16x32xf32, #tpu.memory_space<vmem>>, %arg6: memref<32x32xf32, #tpu.memory_space<vmem>>, %arg7: memref<32x32xbf16, #tpu.memory_space<vmem>>, %arg8: memref<2x1x32xf32, #tpu.memory_space<vmem>>, %arg9: memref<2x32x160xbf16, #tpu.memory_space<vmem>>, %arg10: memref<2x32x32xbf16, #tpu.memory_space<vmem>>, %arg11: memref<2x1x32xf32, #tpu.memory_space<vmem>>, %arg12: memref<2x32x128xbf16, #tpu.memory_space<vmem>>, %arg13: memref<2x64x32xbf16, #tpu.memory_space<vmem>>, %arg14: memref<1x32xf32, #tpu.memory_space<vmem>>, %arg15: memref<32x128xbf16, #tpu.memory_space<vmem>>, %arg16: memref<1x128xf32, #tpu.memory_space<vmem>>, %arg17: memref<16x128xf32, #tpu.memory_space<vmem>>) attributes {dimension_semantics = [#tpu.dimension_semantics<parallel>], iteration_bounds = array<i64: 1>, scalar_prefetch = 0 : i64, scratch_operands = 0 : i64, tpu.core_type = #tpu.core_type<tc>, window_params = [{transform_indices = @transform_0, window_bounds = array<i64: 16, 8>}, {pipeline_mode = #tpu.pipeline_mode<synchronous>, transform_indices = @transform_1, window_bounds = array<i64: 8, 32>}, {pipeline_mode = #tpu.pipeline_mode<synchronous>, transform_indices = @transform_2, window_bounds = array<i64: 1, 32>}, {pipeline_mode = #tpu.pipeline_mode<synchronous>, transform_indices = @transform_3, window_bounds = array<i64: 16, 32>}, {pipeline_mode = #tpu.pipeline_mode<synchronous>, transform_indices = @transform_4, window_bounds = array<i64: 16, 32>}, {pipeline_mode = #tpu.pipeline_mode<synchronous>, transform_indices = @transform_5, window_bounds = array<i64: 32, 32>}, {pipeline_mode = #tpu.pipeline_mode<synchronous>, transform_indices = @transform_6, window_bounds = array<i64: 32, 32>}, {pipeline_mode = #tpu.pipeline_mode<synchronous>, transform_indices = @transform_7, window_bounds = array<i64: 2, 1, 32>}, {pipeline_mode = #tpu.pipeline_mode<synchronous>, transform_indices = @transform_8, window_bounds = array<i64: 2, 32, 160>}, {pipeline_mode = #tpu.pipeline_mode<synchronous>, transform_indices = @transform_9, window_bounds = array<i64: 2, 32, 32>}, {pipeline_mode = #tpu.pipeline_mode<synchronous>, transform_indices = @transform_10, window_bounds = array<i64: 2, 1, 32>}, {pipeline_mode = #tpu.pipeline_mode<synchronous>, transform_indices = @transform_11, window_bounds = array<i64: 2, 32, 128>}, {pipeline_mode = #tpu.pipeline_mode<synchronous>, transform_indices = @transform_12, window_bounds = array<i64: 2, 64, 32>}, {pipeline_mode = #tpu.pipeline_mode<synchronous>, transform_indices = @transform_13, window_bounds = array<i64: 1, 32>}, {pipeline_mode = #tpu.pipeline_mode<synchronous>, transform_indices = @transform_14, window_bounds = array<i64: 32, 128>}, {pipeline_mode = #tpu.pipeline_mode<synchronous>, transform_indices = @transform_15, window_bounds = array<i64: 1, 128>}, {transform_indices = @transform_16, window_bounds = array<i64: 16, 128>}]} {
    %c0 = arith.constant 0 : index
    %c0_0 = arith.constant 0 : index
    %0 = vector.load %arg1[%c0, %c0_0] : memref<16x8xf32, #tpu.memory_space<vmem>>, vector<16x8xf32>
    %1 = vector.extract_strided_slice %0 {offsets = [0, 0], sizes = [8, 8], strides = [1, 1]} : vector<16x8xf32> to vector<8x8xf32>
    %cst = arith.constant dense<0.000000e+00> : vector<8xf32>
    %2 = vector.multi_reduction <add>, %1, %cst [0] : vector<8x8xf32> to vector<8xf32>
    %3 = vector.shape_cast %2 : vector<8xf32> to vector<1x8xf32>
    %4 = vector.broadcast %3 : vector<1x8xf32> to vector<8x8xf32>
    %5 = arith.divf %1, %4 : vector<8x8xf32>
    %6 = vector.extract_strided_slice %0 {offsets = [8, 0], sizes = [8, 8], strides = [1, 1]} : vector<16x8xf32> to vector<8x8xf32>
    %cst_1 = arith.constant dense<0.000000e+00> : vector<8xf32>
    %7 = vector.multi_reduction <add>, %6, %cst_1 [0] : vector<8x8xf32> to vector<8xf32>
    %8 = vector.shape_cast %7 : vector<8xf32> to vector<1x8xf32>
    %9 = vector.broadcast %8 : vector<1x8xf32> to vector<8x8xf32>
    %10 = arith.divf %6, %9 : vector<8x8xf32>
    %11 = tpu.concatenate %5, %10 in 0 : vector<8x8xf32>, vector<8x8xf32> -> vector<16x8xf32>
    %12 = arith.truncf %11 : vector<16x8xf32> to vector<16x8xbf16>
    %c0_2 = arith.constant 0 : index
    %c0_3 = arith.constant 0 : index
    %13 = vector.load %arg2[%c0_2, %c0_3] : memref<8x32xbf16, #tpu.memory_space<vmem>>, vector<8x32xbf16>
    %cst_4 = arith.constant dense<0.000000e+00> : vector<16x32xf32>
    %14 = tpu.matmul %12, %13, %cst_4 {dimension_numbers = #tpu.dot_dimension_numbers<[1], [0], [0], [1], [0, 0, 1, 1], [], []>} : vector<16x8xbf16>, vector<8x32xbf16>, vector<16x32xf32> -> vector<16x32xf32>
    %c0_5 = arith.constant 0 : index
    %c0_6 = arith.constant 0 : index
    %15 = vector.load %arg3[%c0_5, %c0_6] : memref<1x32xf32, #tpu.memory_space<vmem>>, vector<1x32xf32>
    %16 = vector.broadcast %15 : vector<1x32xf32> to vector<16x32xf32>
    %17 = arith.addf %14, %16 : vector<16x32xf32>
    %c0_7 = arith.constant 0 : index
    %c0_8 = arith.constant 0 : index
    %18 = vector.load %arg4[%c0_7, %c0_8] : memref<16x32xf32, #tpu.memory_space<vmem>>, vector<16x32xf32>
    %c0_9 = arith.constant 0 : index
    %c0_10 = arith.constant 0 : index
    %19 = vector.load %arg5[%c0_9, %c0_10] : memref<16x32xf32, #tpu.memory_space<vmem>>, vector<16x32xf32>
    %c0_11 = arith.constant 0 : index
    %c0_12 = arith.constant 0 : index
    %20 = vector.load %arg6[%c0_11, %c0_12] : memref<32x32xf32, #tpu.memory_space<vmem>>, vector<32x32xf32>
    %c0_13 = arith.constant 0 : index
    %c0_14 = arith.constant 0 : index
    %21 = vector.load %arg7[%c0_13, %c0_14] : memref<32x32xbf16, #tpu.memory_space<vmem>>, vector<32x32xbf16>
    %c0_15 = arith.constant 0 : index
    %c0_16 = arith.constant 0 : index
    %c0_17 = arith.constant 0 : index
    %22 = vector.load %arg8[%c0_15, %c0_16, %c0_17] : memref<2x1x32xf32, #tpu.memory_space<vmem>>, vector<1x1x32xf32>
    %23 = vector.shape_cast %22 : vector<1x1x32xf32> to vector<1x32xf32>
    %24 = arith.mulf %17, %17 : vector<16x32xf32>
    %cst_18 = arith.constant dense<0.000000e+00> : vector<16xf32>
    %25 = vector.multi_reduction <add>, %24, %cst_18 [1] : vector<16x32xf32> to vector<16xf32>
    %26 = vector.shape_cast %25 : vector<16xf32> to vector<16x1xf32>
    %cst_19 = arith.constant 3.200000e+01 : f32
    %27 = vector.broadcast %cst_19 : f32 to vector<16x1xf32>
    %28 = arith.divf %26, %27 : vector<16x1xf32>
    %cst_20 = arith.constant 9.99999997E-7 : f32
    %29 = vector.broadcast %cst_20 : f32 to vector<16x1xf32>
    %30 = arith.addf %28, %29 : vector<16x1xf32>
    %31 = math.rsqrt %30 : vector<16x1xf32>
    %32 = vector.broadcast %31 : vector<16x1xf32> to vector<16x32xf32>
    %33 = arith.mulf %17, %32 : vector<16x32xf32>
    %34 = vector.broadcast %23 : vector<1x32xf32> to vector<16x32xf32>
    %35 = arith.mulf %33, %34 : vector<16x32xf32>
    %36 = arith.truncf %35 : vector<16x32xf32> to vector<16x32xbf16>
    %c0_21 = arith.constant 0 : index
    %c0_22 = arith.constant 0 : index
    %c0_23 = arith.constant 0 : index
    %37 = vector.load %arg9[%c0_21, %c0_22, %c0_23] : memref<2x32x160xbf16, #tpu.memory_space<vmem>>, vector<1x32x160xbf16>
    %38 = vector.shape_cast %37 : vector<1x32x160xbf16> to vector<32x160xbf16>
    %cst_24 = arith.constant dense<0.000000e+00> : vector<16x160xf32>
    %39 = tpu.matmul %36, %38, %cst_24 {dimension_numbers = #tpu.dot_dimension_numbers<[1], [0], [0], [1], [0, 0, 1, 1], [], []>} : vector<16x32xbf16>, vector<32x160xbf16>, vector<16x160xf32> -> vector<16x160xf32>
    %40 = vector.extract_strided_slice %39 {offsets = [0, 0], sizes = [16, 32], strides = [1, 1]} : vector<16x160xf32> to vector<16x32xf32>
    %41 = vector.extract_strided_slice %39 {offsets = [0, 32], sizes = [16, 32], strides = [1, 1]} : vector<16x160xf32> to vector<16x32xf32>
    %42 = vector.extract_strided_slice %39 {offsets = [0, 64], sizes = [16, 32], strides = [1, 1]} : vector<16x160xf32> to vector<16x32xf32>
    %43 = vector.extract_strided_slice %39 {offsets = [0, 96], sizes = [16, 32], strides = [1, 1]} : vector<16x160xf32> to vector<16x32xf32>
    %44 = vector.extract_strided_slice %39 {offsets = [0, 128], sizes = [16, 32], strides = [1, 1]} : vector<16x160xf32> to vector<16x32xf32>
    %45 = arith.mulf %40, %18 : vector<16x32xf32>
    %46 = arith.mulf %41, %19 : vector<16x32xf32>
    %47 = arith.addf %45, %46 : vector<16x32xf32>
    %48 = arith.mulf %42, %18 : vector<16x32xf32>
    %49 = arith.mulf %43, %19 : vector<16x32xf32>
    %50 = arith.addf %48, %49 : vector<16x32xf32>
    %51 = vector.extract_strided_slice %47 {offsets = [0, 0], sizes = [8, 32], strides = [1, 1]} : vector<16x32xf32> to vector<8x32xf32>
    %52 = arith.truncf %51 : vector<8x32xf32> to vector<8x32xbf16>
    %53 = vector.extract_strided_slice %50 {offsets = [0, 0], sizes = [8, 32], strides = [1, 1]} : vector<16x32xf32> to vector<8x32xf32>
    %54 = tpu.concatenate %53, %53, %53, %53 in 0 : vector<8x32xf32>, vector<8x32xf32>, vector<8x32xf32>, vector<8x32xf32> -> vector<32x32xf32>
    %55 = arith.mulf %54, %20 : vector<32x32xf32>
    %56 = arith.truncf %55 : vector<32x32xf32> to vector<32x32xbf16>
    %57 = vector.extract_strided_slice %44 {offsets = [0, 0], sizes = [8, 32], strides = [1, 1]} : vector<16x32xf32> to vector<8x32xf32>
    %58 = tpu.concatenate %57, %57, %57, %57 in 0 : vector<8x32xf32>, vector<8x32xf32>, vector<8x32xf32>, vector<8x32xf32> -> vector<32x32xf32>
    %59 = arith.mulf %58, %20 : vector<32x32xf32>
    %60 = arith.truncf %59 : vector<32x32xf32> to vector<32x32xbf16>
    %cst_25 = arith.constant dense<0.000000e+00> : vector<8x32xf32>
    %61 = tpu.matmul %52, %56, %cst_25 {dimension_numbers = #tpu.dot_dimension_numbers<[1], [1], [0], [0], [0, 0, 1, 0], [], []>} : vector<8x32xbf16>, vector<32x32xbf16>, vector<8x32xf32> -> vector<8x32xf32>
    %cst_26 = arith.constant dense<0xFF800000> : vector<8xf32>
    %62 = vector.multi_reduction <maximumf>, %61, %cst_26 [1] : vector<8x32xf32> to vector<8xf32>
    %63 = vector.shape_cast %62 : vector<8xf32> to vector<8x1xf32>
    %64 = vector.broadcast %63 : vector<8x1xf32> to vector<8x32xf32>
    %65 = arith.subf %61, %64 : vector<8x32xf32>
    %66 = math.exp %65 : vector<8x32xf32>
    %67 = arith.truncf %66 : vector<8x32xf32> to vector<8x32xbf16>
    %cst_27 = arith.constant dense<0.000000e+00> : vector<8x32xf32>
    %68 = tpu.matmul %67, %21, %cst_27 {dimension_numbers = #tpu.dot_dimension_numbers<[1], [0], [0], [1], [0, 0, 1, 1], [], []>} : vector<8x32xbf16>, vector<32x32xbf16>, vector<8x32xf32> -> vector<8x32xf32>
    %69 = tpu.reciprocal %68 {approx = true} : vector<8x32xf32> -> vector<8x32xf32>
    %70 = arith.mulf %66, %69 : vector<8x32xf32>
    %71 = arith.truncf %70 : vector<8x32xf32> to vector<8x32xbf16>
    %cst_28 = arith.constant dense<0.000000e+00> : vector<8x32xf32>
    %72 = tpu.matmul %71, %60, %cst_28 {dimension_numbers = #tpu.dot_dimension_numbers<[1], [0], [0], [1], [0, 0, 1, 1], [], []>} : vector<8x32xbf16>, vector<32x32xbf16>, vector<8x32xf32> -> vector<8x32xf32>
    %73 = vector.extract_strided_slice %47 {offsets = [8, 0], sizes = [8, 32], strides = [1, 1]} : vector<16x32xf32> to vector<8x32xf32>
    %74 = arith.truncf %73 : vector<8x32xf32> to vector<8x32xbf16>
    %75 = vector.extract_strided_slice %50 {offsets = [8, 0], sizes = [8, 32], strides = [1, 1]} : vector<16x32xf32> to vector<8x32xf32>
    %76 = tpu.concatenate %75, %75, %75, %75 in 0 : vector<8x32xf32>, vector<8x32xf32>, vector<8x32xf32>, vector<8x32xf32> -> vector<32x32xf32>
    %77 = arith.mulf %76, %20 : vector<32x32xf32>
    %78 = arith.truncf %77 : vector<32x32xf32> to vector<32x32xbf16>
    %79 = vector.extract_strided_slice %44 {offsets = [8, 0], sizes = [8, 32], strides = [1, 1]} : vector<16x32xf32> to vector<8x32xf32>
    %80 = tpu.concatenate %79, %79, %79, %79 in 0 : vector<8x32xf32>, vector<8x32xf32>, vector<8x32xf32>, vector<8x32xf32> -> vector<32x32xf32>
    %81 = arith.mulf %80, %20 : vector<32x32xf32>
    %82 = arith.truncf %81 : vector<32x32xf32> to vector<32x32xbf16>
    %cst_29 = arith.constant dense<0.000000e+00> : vector<8x32xf32>
    %83 = tpu.matmul %74, %78, %cst_29 {dimension_numbers = #tpu.dot_dimension_numbers<[1], [1], [0], [0], [0, 0, 1, 0], [], []>} : vector<8x32xbf16>, vector<32x32xbf16>, vector<8x32xf32> -> vector<8x32xf32>
    %cst_30 = arith.constant dense<0xFF800000> : vector<8xf32>
    %84 = vector.multi_reduction <maximumf>, %83, %cst_30 [1] : vector<8x32xf32> to vector<8xf32>
    %85 = vector.shape_cast %84 : vector<8xf32> to vector<8x1xf32>
    %86 = vector.broadcast %85 : vector<8x1xf32> to vector<8x32xf32>
    %87 = arith.subf %83, %86 : vector<8x32xf32>
    %88 = math.exp %87 : vector<8x32xf32>
    %89 = arith.truncf %88 : vector<8x32xf32> to vector<8x32xbf16>
    %cst_31 = arith.constant dense<0.000000e+00> : vector<8x32xf32>
    %90 = tpu.matmul %89, %21, %cst_31 {dimension_numbers = #tpu.dot_dimension_numbers<[1], [0], [0], [1], [0, 0, 1, 1], [], []>} : vector<8x32xbf16>, vector<32x32xbf16>, vector<8x32xf32> -> vector<8x32xf32>
    %91 = tpu.reciprocal %90 {approx = true} : vector<8x32xf32> -> vector<8x32xf32>
    %92 = arith.mulf %88, %91 : vector<8x32xf32>
    %93 = arith.truncf %92 : vector<8x32xf32> to vector<8x32xbf16>
    %cst_32 = arith.constant dense<0.000000e+00> : vector<8x32xf32>
    %94 = tpu.matmul %93, %82, %cst_32 {dimension_numbers = #tpu.dot_dimension_numbers<[1], [0], [0], [1], [0, 0, 1, 1], [], []>} : vector<8x32xbf16>, vector<32x32xbf16>, vector<8x32xf32> -> vector<8x32xf32>
    %95 = tpu.concatenate %72, %94 in 0 : vector<8x32xf32>, vector<8x32xf32> -> vector<16x32xf32>
    %96 = arith.truncf %95 : vector<16x32xf32> to vector<16x32xbf16>
    %c0_33 = arith.constant 0 : index
    %c0_34 = arith.constant 0 : index
    %c0_35 = arith.constant 0 : index
    %97 = vector.load %arg10[%c0_33, %c0_34, %c0_35] : memref<2x32x32xbf16, #tpu.memory_space<vmem>>, vector<1x32x32xbf16>
    %98 = vector.shape_cast %97 : vector<1x32x32xbf16> to vector<32x32xbf16>
    %cst_36 = arith.constant dense<0.000000e+00> : vector<16x32xf32>
    %99 = tpu.matmul %96, %98, %cst_36 {dimension_numbers = #tpu.dot_dimension_numbers<[1], [0], [0], [1], [0, 0, 1, 1], [], []>} : vector<16x32xbf16>, vector<32x32xbf16>, vector<16x32xf32> -> vector<16x32xf32>
    %100 = arith.addf %17, %99 : vector<16x32xf32>
    %c0_37 = arith.constant 0 : index
    %c0_38 = arith.constant 0 : index
    %c0_39 = arith.constant 0 : index
    %101 = vector.load %arg11[%c0_37, %c0_38, %c0_39] : memref<2x1x32xf32, #tpu.memory_space<vmem>>, vector<1x1x32xf32>
    %102 = vector.shape_cast %101 : vector<1x1x32xf32> to vector<1x32xf32>
    %103 = arith.mulf %100, %100 : vector<16x32xf32>
    %cst_40 = arith.constant dense<0.000000e+00> : vector<16xf32>
    %104 = vector.multi_reduction <add>, %103, %cst_40 [1] : vector<16x32xf32> to vector<16xf32>
    %105 = vector.shape_cast %104 : vector<16xf32> to vector<16x1xf32>
    %cst_41 = arith.constant 3.200000e+01 : f32
    %106 = vector.broadcast %cst_41 : f32 to vector<16x1xf32>
    %107 = arith.divf %105, %106 : vector<16x1xf32>
    %cst_42 = arith.constant 9.99999997E-7 : f32
    %108 = vector.broadcast %cst_42 : f32 to vector<16x1xf32>
    %109 = arith.addf %107, %108 : vector<16x1xf32>
    %110 = math.rsqrt %109 : vector<16x1xf32>
    %111 = vector.broadcast %110 : vector<16x1xf32> to vector<16x32xf32>
    %112 = arith.mulf %100, %111 : vector<16x32xf32>
    %113 = vector.broadcast %102 : vector<1x32xf32> to vector<16x32xf32>
    %114 = arith.mulf %112, %113 : vector<16x32xf32>
    %115 = arith.truncf %114 : vector<16x32xf32> to vector<16x32xbf16>
    %c0_43 = arith.constant 0 : index
    %c0_44 = arith.constant 0 : index
    %c0_45 = arith.constant 0 : index
    %116 = vector.load %arg12[%c0_43, %c0_44, %c0_45] : memref<2x32x128xbf16, #tpu.memory_space<vmem>>, vector<1x32x128xbf16>
    %117 = vector.shape_cast %116 : vector<1x32x128xbf16> to vector<32x128xbf16>
    %cst_46 = arith.constant dense<0.000000e+00> : vector<16x128xf32>
    %118 = tpu.matmul %115, %117, %cst_46 {dimension_numbers = #tpu.dot_dimension_numbers<[1], [0], [0], [1], [0, 0, 1, 1], [], []>} : vector<16x32xbf16>, vector<32x128xbf16>, vector<16x128xf32> -> vector<16x128xf32>
    %119 = vector.extract_strided_slice %118 {offsets = [0, 0], sizes = [16, 64], strides = [1, 1]} : vector<16x128xf32> to vector<16x64xf32>
    %120 = vector.extract_strided_slice %118 {offsets = [0, 64], sizes = [16, 64], strides = [1, 1]} : vector<16x128xf32> to vector<16x64xf32>
    %cst_47 = arith.constant 0.000000e+00 : f32
    %121 = vector.broadcast %cst_47 : f32 to vector<16x64xf32>
    %122 = arith.subf %121, %119 : vector<16x64xf32>
    %123 = math.exp %122 : vector<16x64xf32>
    %cst_48 = arith.constant 1.000000e+00 : f32
    %124 = vector.broadcast %cst_48 : f32 to vector<16x64xf32>
    %125 = arith.addf %124, %123 : vector<16x64xf32>
    %126 = tpu.reciprocal %125 {approx = true} : vector<16x64xf32> -> vector<16x64xf32>
    %127 = arith.mulf %119, %126 : vector<16x64xf32>
    %128 = arith.mulf %127, %120 : vector<16x64xf32>
    %129 = arith.truncf %128 : vector<16x64xf32> to vector<16x64xbf16>
    %c0_49 = arith.constant 0 : index
    %c0_50 = arith.constant 0 : index
    %c0_51 = arith.constant 0 : index
    %130 = vector.load %arg13[%c0_49, %c0_50, %c0_51] : memref<2x64x32xbf16, #tpu.memory_space<vmem>>, vector<1x64x32xbf16>
    %131 = vector.shape_cast %130 : vector<1x64x32xbf16> to vector<64x32xbf16>
    %cst_52 = arith.constant dense<0.000000e+00> : vector<16x32xf32>
    %132 = tpu.matmul %129, %131, %cst_52 {dimension_numbers = #tpu.dot_dimension_numbers<[1], [0], [0], [1], [0, 0, 1, 1], [], []>} : vector<16x64xbf16>, vector<64x32xbf16>, vector<16x32xf32> -> vector<16x32xf32>
    %133 = arith.addf %100, %132 : vector<16x32xf32>
    %c1 = arith.constant 1 : index
    %c0_53 = arith.constant 0 : index
    %c0_54 = arith.constant 0 : index
    %134 = vector.load %arg8[%c1, %c0_53, %c0_54] : memref<2x1x32xf32, #tpu.memory_space<vmem>>, vector<1x1x32xf32>
    %135 = vector.shape_cast %134 : vector<1x1x32xf32> to vector<1x32xf32>
    %136 = arith.mulf %133, %133 : vector<16x32xf32>
    %cst_55 = arith.constant dense<0.000000e+00> : vector<16xf32>
    %137 = vector.multi_reduction <add>, %136, %cst_55 [1] : vector<16x32xf32> to vector<16xf32>
    %138 = vector.shape_cast %137 : vector<16xf32> to vector<16x1xf32>
    %cst_56 = arith.constant 3.200000e+01 : f32
    %139 = vector.broadcast %cst_56 : f32 to vector<16x1xf32>
    %140 = arith.divf %138, %139 : vector<16x1xf32>
    %cst_57 = arith.constant 9.99999997E-7 : f32
    %141 = vector.broadcast %cst_57 : f32 to vector<16x1xf32>
    %142 = arith.addf %140, %141 : vector<16x1xf32>
    %143 = math.rsqrt %142 : vector<16x1xf32>
    %144 = vector.broadcast %143 : vector<16x1xf32> to vector<16x32xf32>
    %145 = arith.mulf %133, %144 : vector<16x32xf32>
    %146 = vector.broadcast %135 : vector<1x32xf32> to vector<16x32xf32>
    %147 = arith.mulf %145, %146 : vector<16x32xf32>
    %148 = arith.truncf %147 : vector<16x32xf32> to vector<16x32xbf16>
    %c1_58 = arith.constant 1 : index
    %c0_59 = arith.constant 0 : index
    %c0_60 = arith.constant 0 : index
    %149 = vector.load %arg9[%c1_58, %c0_59, %c0_60] : memref<2x32x160xbf16, #tpu.memory_space<vmem>>, vector<1x32x160xbf16>
    %150 = vector.shape_cast %149 : vector<1x32x160xbf16> to vector<32x160xbf16>
    %cst_61 = arith.constant dense<0.000000e+00> : vector<16x160xf32>
    %151 = tpu.matmul %148, %150, %cst_61 {dimension_numbers = #tpu.dot_dimension_numbers<[1], [0], [0], [1], [0, 0, 1, 1], [], []>} : vector<16x32xbf16>, vector<32x160xbf16>, vector<16x160xf32> -> vector<16x160xf32>
    %152 = vector.extract_strided_slice %151 {offsets = [0, 0], sizes = [16, 32], strides = [1, 1]} : vector<16x160xf32> to vector<16x32xf32>
    %153 = vector.extract_strided_slice %151 {offsets = [0, 32], sizes = [16, 32], strides = [1, 1]} : vector<16x160xf32> to vector<16x32xf32>
    %154 = vector.extract_strided_slice %151 {offsets = [0, 64], sizes = [16, 32], strides = [1, 1]} : vector<16x160xf32> to vector<16x32xf32>
    %155 = vector.extract_strided_slice %151 {offsets = [0, 96], sizes = [16, 32], strides = [1, 1]} : vector<16x160xf32> to vector<16x32xf32>
    %156 = vector.extract_strided_slice %151 {offsets = [0, 128], sizes = [16, 32], strides = [1, 1]} : vector<16x160xf32> to vector<16x32xf32>
    %157 = arith.mulf %152, %18 : vector<16x32xf32>
    %158 = arith.mulf %153, %19 : vector<16x32xf32>
    %159 = arith.addf %157, %158 : vector<16x32xf32>
    %160 = arith.mulf %154, %18 : vector<16x32xf32>
    %161 = arith.mulf %155, %19 : vector<16x32xf32>
    %162 = arith.addf %160, %161 : vector<16x32xf32>
    %163 = vector.extract_strided_slice %159 {offsets = [0, 0], sizes = [8, 32], strides = [1, 1]} : vector<16x32xf32> to vector<8x32xf32>
    %164 = arith.truncf %163 : vector<8x32xf32> to vector<8x32xbf16>
    %165 = vector.extract_strided_slice %162 {offsets = [0, 0], sizes = [8, 32], strides = [1, 1]} : vector<16x32xf32> to vector<8x32xf32>
    %166 = tpu.concatenate %165, %165, %165, %165 in 0 : vector<8x32xf32>, vector<8x32xf32>, vector<8x32xf32>, vector<8x32xf32> -> vector<32x32xf32>
    %167 = arith.mulf %166, %20 : vector<32x32xf32>
    %168 = arith.truncf %167 : vector<32x32xf32> to vector<32x32xbf16>
    %169 = vector.extract_strided_slice %156 {offsets = [0, 0], sizes = [8, 32], strides = [1, 1]} : vector<16x32xf32> to vector<8x32xf32>
    %170 = tpu.concatenate %169, %169, %169, %169 in 0 : vector<8x32xf32>, vector<8x32xf32>, vector<8x32xf32>, vector<8x32xf32> -> vector<32x32xf32>
    %171 = arith.mulf %170, %20 : vector<32x32xf32>
    %172 = arith.truncf %171 : vector<32x32xf32> to vector<32x32xbf16>
    %cst_62 = arith.constant dense<0.000000e+00> : vector<8x32xf32>
    %173 = tpu.matmul %164, %168, %cst_62 {dimension_numbers = #tpu.dot_dimension_numbers<[1], [1], [0], [0], [0, 0, 1, 0], [], []>} : vector<8x32xbf16>, vector<32x32xbf16>, vector<8x32xf32> -> vector<8x32xf32>
    %cst_63 = arith.constant dense<0xFF800000> : vector<8xf32>
    %174 = vector.multi_reduction <maximumf>, %173, %cst_63 [1] : vector<8x32xf32> to vector<8xf32>
    %175 = vector.shape_cast %174 : vector<8xf32> to vector<8x1xf32>
    %176 = vector.broadcast %175 : vector<8x1xf32> to vector<8x32xf32>
    %177 = arith.subf %173, %176 : vector<8x32xf32>
    %178 = math.exp %177 : vector<8x32xf32>
    %179 = arith.truncf %178 : vector<8x32xf32> to vector<8x32xbf16>
    %cst_64 = arith.constant dense<0.000000e+00> : vector<8x32xf32>
    %180 = tpu.matmul %179, %21, %cst_64 {dimension_numbers = #tpu.dot_dimension_numbers<[1], [0], [0], [1], [0, 0, 1, 1], [], []>} : vector<8x32xbf16>, vector<32x32xbf16>, vector<8x32xf32> -> vector<8x32xf32>
    %181 = tpu.reciprocal %180 {approx = true} : vector<8x32xf32> -> vector<8x32xf32>
    %182 = arith.mulf %178, %181 : vector<8x32xf32>
    %183 = arith.truncf %182 : vector<8x32xf32> to vector<8x32xbf16>
    %cst_65 = arith.constant dense<0.000000e+00> : vector<8x32xf32>
    %184 = tpu.matmul %183, %172, %cst_65 {dimension_numbers = #tpu.dot_dimension_numbers<[1], [0], [0], [1], [0, 0, 1, 1], [], []>} : vector<8x32xbf16>, vector<32x32xbf16>, vector<8x32xf32> -> vector<8x32xf32>
    %185 = vector.extract_strided_slice %159 {offsets = [8, 0], sizes = [8, 32], strides = [1, 1]} : vector<16x32xf32> to vector<8x32xf32>
    %186 = arith.truncf %185 : vector<8x32xf32> to vector<8x32xbf16>
    %187 = vector.extract_strided_slice %162 {offsets = [8, 0], sizes = [8, 32], strides = [1, 1]} : vector<16x32xf32> to vector<8x32xf32>
    %188 = tpu.concatenate %187, %187, %187, %187 in 0 : vector<8x32xf32>, vector<8x32xf32>, vector<8x32xf32>, vector<8x32xf32> -> vector<32x32xf32>
    %189 = arith.mulf %188, %20 : vector<32x32xf32>
    %190 = arith.truncf %189 : vector<32x32xf32> to vector<32x32xbf16>
    %191 = vector.extract_strided_slice %156 {offsets = [8, 0], sizes = [8, 32], strides = [1, 1]} : vector<16x32xf32> to vector<8x32xf32>
    %192 = tpu.concatenate %191, %191, %191, %191 in 0 : vector<8x32xf32>, vector<8x32xf32>, vector<8x32xf32>, vector<8x32xf32> -> vector<32x32xf32>
    %193 = arith.mulf %192, %20 : vector<32x32xf32>
    %194 = arith.truncf %193 : vector<32x32xf32> to vector<32x32xbf16>
    %cst_66 = arith.constant dense<0.000000e+00> : vector<8x32xf32>
    %195 = tpu.matmul %186, %190, %cst_66 {dimension_numbers = #tpu.dot_dimension_numbers<[1], [1], [0], [0], [0, 0, 1, 0], [], []>} : vector<8x32xbf16>, vector<32x32xbf16>, vector<8x32xf32> -> vector<8x32xf32>
    %cst_67 = arith.constant dense<0xFF800000> : vector<8xf32>
    %196 = vector.multi_reduction <maximumf>, %195, %cst_67 [1] : vector<8x32xf32> to vector<8xf32>
    %197 = vector.shape_cast %196 : vector<8xf32> to vector<8x1xf32>
    %198 = vector.broadcast %197 : vector<8x1xf32> to vector<8x32xf32>
    %199 = arith.subf %195, %198 : vector<8x32xf32>
    %200 = math.exp %199 : vector<8x32xf32>
    %201 = arith.truncf %200 : vector<8x32xf32> to vector<8x32xbf16>
    %cst_68 = arith.constant dense<0.000000e+00> : vector<8x32xf32>
    %202 = tpu.matmul %201, %21, %cst_68 {dimension_numbers = #tpu.dot_dimension_numbers<[1], [0], [0], [1], [0, 0, 1, 1], [], []>} : vector<8x32xbf16>, vector<32x32xbf16>, vector<8x32xf32> -> vector<8x32xf32>
    %203 = tpu.reciprocal %202 {approx = true} : vector<8x32xf32> -> vector<8x32xf32>
    %204 = arith.mulf %200, %203 : vector<8x32xf32>
    %205 = arith.truncf %204 : vector<8x32xf32> to vector<8x32xbf16>
    %cst_69 = arith.constant dense<0.000000e+00> : vector<8x32xf32>
    %206 = tpu.matmul %205, %194, %cst_69 {dimension_numbers = #tpu.dot_dimension_numbers<[1], [0], [0], [1], [0, 0, 1, 1], [], []>} : vector<8x32xbf16>, vector<32x32xbf16>, vector<8x32xf32> -> vector<8x32xf32>
    %207 = tpu.concatenate %184, %206 in 0 : vector<8x32xf32>, vector<8x32xf32> -> vector<16x32xf32>
    %208 = arith.truncf %207 : vector<16x32xf32> to vector<16x32xbf16>
    %c1_70 = arith.constant 1 : index
    %c0_71 = arith.constant 0 : index
    %c0_72 = arith.constant 0 : index
    %209 = vector.load %arg10[%c1_70, %c0_71, %c0_72] : memref<2x32x32xbf16, #tpu.memory_space<vmem>>, vector<1x32x32xbf16>
    %210 = vector.shape_cast %209 : vector<1x32x32xbf16> to vector<32x32xbf16>
    %cst_73 = arith.constant dense<0.000000e+00> : vector<16x32xf32>
    %211 = tpu.matmul %208, %210, %cst_73 {dimension_numbers = #tpu.dot_dimension_numbers<[1], [0], [0], [1], [0, 0, 1, 1], [], []>} : vector<16x32xbf16>, vector<32x32xbf16>, vector<16x32xf32> -> vector<16x32xf32>
    %212 = arith.addf %133, %211 : vector<16x32xf32>
    %c1_74 = arith.constant 1 : index
    %c0_75 = arith.constant 0 : index
    %c0_76 = arith.constant 0 : index
    %213 = vector.load %arg11[%c1_74, %c0_75, %c0_76] : memref<2x1x32xf32, #tpu.memory_space<vmem>>, vector<1x1x32xf32>
    %214 = vector.shape_cast %213 : vector<1x1x32xf32> to vector<1x32xf32>
    %215 = arith.mulf %212, %212 : vector<16x32xf32>
    %cst_77 = arith.constant dense<0.000000e+00> : vector<16xf32>
    %216 = vector.multi_reduction <add>, %215, %cst_77 [1] : vector<16x32xf32> to vector<16xf32>
    %217 = vector.shape_cast %216 : vector<16xf32> to vector<16x1xf32>
    %cst_78 = arith.constant 3.200000e+01 : f32
    %218 = vector.broadcast %cst_78 : f32 to vector<16x1xf32>
    %219 = arith.divf %217, %218 : vector<16x1xf32>
    %cst_79 = arith.constant 9.99999997E-7 : f32
    %220 = vector.broadcast %cst_79 : f32 to vector<16x1xf32>
    %221 = arith.addf %219, %220 : vector<16x1xf32>
    %222 = math.rsqrt %221 : vector<16x1xf32>
    %223 = vector.broadcast %222 : vector<16x1xf32> to vector<16x32xf32>
    %224 = arith.mulf %212, %223 : vector<16x32xf32>
    %225 = vector.broadcast %214 : vector<1x32xf32> to vector<16x32xf32>
    %226 = arith.mulf %224, %225 : vector<16x32xf32>
    %227 = arith.truncf %226 : vector<16x32xf32> to vector<16x32xbf16>
    %c1_80 = arith.constant 1 : index
    %c0_81 = arith.constant 0 : index
    %c0_82 = arith.constant 0 : index
    %228 = vector.load %arg12[%c1_80, %c0_81, %c0_82] : memref<2x32x128xbf16, #tpu.memory_space<vmem>>, vector<1x32x128xbf16>
    %229 = vector.shape_cast %228 : vector<1x32x128xbf16> to vector<32x128xbf16>
    %cst_83 = arith.constant dense<0.000000e+00> : vector<16x128xf32>
    %230 = tpu.matmul %227, %229, %cst_83 {dimension_numbers = #tpu.dot_dimension_numbers<[1], [0], [0], [1], [0, 0, 1, 1], [], []>} : vector<16x32xbf16>, vector<32x128xbf16>, vector<16x128xf32> -> vector<16x128xf32>
    %231 = vector.extract_strided_slice %230 {offsets = [0, 0], sizes = [16, 64], strides = [1, 1]} : vector<16x128xf32> to vector<16x64xf32>
    %232 = vector.extract_strided_slice %230 {offsets = [0, 64], sizes = [16, 64], strides = [1, 1]} : vector<16x128xf32> to vector<16x64xf32>
    %cst_84 = arith.constant 0.000000e+00 : f32
    %233 = vector.broadcast %cst_84 : f32 to vector<16x64xf32>
    %234 = arith.subf %233, %231 : vector<16x64xf32>
    %235 = math.exp %234 : vector<16x64xf32>
    %cst_85 = arith.constant 1.000000e+00 : f32
    %236 = vector.broadcast %cst_85 : f32 to vector<16x64xf32>
    %237 = arith.addf %236, %235 : vector<16x64xf32>
    %238 = tpu.reciprocal %237 {approx = true} : vector<16x64xf32> -> vector<16x64xf32>
    %239 = arith.mulf %231, %238 : vector<16x64xf32>
    %240 = arith.mulf %239, %232 : vector<16x64xf32>
    %241 = arith.truncf %240 : vector<16x64xf32> to vector<16x64xbf16>
    %c1_86 = arith.constant 1 : index
    %c0_87 = arith.constant 0 : index
    %c0_88 = arith.constant 0 : index
    %242 = vector.load %arg13[%c1_86, %c0_87, %c0_88] : memref<2x64x32xbf16, #tpu.memory_space<vmem>>, vector<1x64x32xbf16>
    %243 = vector.shape_cast %242 : vector<1x64x32xbf16> to vector<64x32xbf16>
    %cst_89 = arith.constant dense<0.000000e+00> : vector<16x32xf32>
    %244 = tpu.matmul %241, %243, %cst_89 {dimension_numbers = #tpu.dot_dimension_numbers<[1], [0], [0], [1], [0, 0, 1, 1], [], []>} : vector<16x64xbf16>, vector<64x32xbf16>, vector<16x32xf32> -> vector<16x32xf32>
    %245 = arith.addf %212, %244 : vector<16x32xf32>
    %c0_90 = arith.constant 0 : index
    %c0_91 = arith.constant 0 : index
    %246 = vector.load %arg14[%c0_90, %c0_91] : memref<1x32xf32, #tpu.memory_space<vmem>>, vector<1x32xf32>
    %247 = arith.mulf %245, %245 : vector<16x32xf32>
    %cst_92 = arith.constant dense<0.000000e+00> : vector<16xf32>
    %248 = vector.multi_reduction <add>, %247, %cst_92 [1] : vector<16x32xf32> to vector<16xf32>
    %249 = vector.shape_cast %248 : vector<16xf32> to vector<16x1xf32>
    %cst_93 = arith.constant 3.200000e+01 : f32
    %250 = vector.broadcast %cst_93 : f32 to vector<16x1xf32>
    %251 = arith.divf %249, %250 : vector<16x1xf32>
    %cst_94 = arith.constant 9.99999997E-7 : f32
    %252 = vector.broadcast %cst_94 : f32 to vector<16x1xf32>
    %253 = arith.addf %251, %252 : vector<16x1xf32>
    %254 = math.rsqrt %253 : vector<16x1xf32>
    %255 = vector.broadcast %254 : vector<16x1xf32> to vector<16x32xf32>
    %256 = arith.mulf %245, %255 : vector<16x32xf32>
    %257 = vector.broadcast %246 : vector<1x32xf32> to vector<16x32xf32>
    %258 = arith.mulf %256, %257 : vector<16x32xf32>
    %259 = arith.truncf %258 : vector<16x32xf32> to vector<16x32xbf16>
    %c0_95 = arith.constant 0 : index
    %c0_96 = arith.constant 0 : index
    %260 = vector.load %arg15[%c0_95, %c0_96] : memref<32x128xbf16, #tpu.memory_space<vmem>>, vector<32x128xbf16>
    %cst_97 = arith.constant dense<0.000000e+00> : vector<16x128xf32>
    %261 = tpu.matmul %259, %260, %cst_97 {dimension_numbers = #tpu.dot_dimension_numbers<[1], [0], [0], [1], [0, 0, 1, 1], [], []>} : vector<16x32xbf16>, vector<32x128xbf16>, vector<16x128xf32> -> vector<16x128xf32>
    %c0_98 = arith.constant 0 : index
    %c0_99 = arith.constant 0 : index
    %262 = vector.load %arg16[%c0_98, %c0_99] : memref<1x128xf32, #tpu.memory_space<vmem>>, vector<1x128xf32>
    %263 = vector.broadcast %262 : vector<1x128xf32> to vector<16x128xf32>
    %264 = arith.addf %261, %263 : vector<16x128xf32>
    %c0_100 = arith.constant 0 : index
    %c0_101 = arith.constant 0 : index
    %265 = vector.load %arg17[%c0_100, %c0_101] : memref<16x128xf32, #tpu.memory_space<vmem>>, vector<16x128xf32>
    tpu.vector_store %arg17[%c0_100, %c0_101], %264 {strides = array<i32>} : memref<16x128xf32, #tpu.memory_space<vmem>>, vector<16x128xf32>,
    return
  }
  func.func @transform_0(%arg0: i32) -> (i32, i32) {
    %c0_i32 = arith.constant 0 : i32
    %c0_i32_0 = arith.constant 0 : i32
    return %arg0, %c0_i32 : i32, i32
  }
  func.func @transform_1(%arg0: i32) -> (i32, i32) {
    %c0_i32 = arith.constant 0 : i32
    %c0_i32_0 = arith.constant 0 : i32
    %c0_i32_1 = arith.constant 0 : i32
    return %c0_i32, %c0_i32_0 : i32, i32
  }
  func.func @transform_2(%arg0: i32) -> (i32, i32) {
    %c0_i32 = arith.constant 0 : i32
    %c0_i32_0 = arith.constant 0 : i32
    %c0_i32_1 = arith.constant 0 : i32
    return %c0_i32, %c0_i32_0 : i32, i32
  }
  func.func @transform_3(%arg0: i32) -> (i32, i32) {
    %c0_i32 = arith.constant 0 : i32
    %c0_i32_0 = arith.constant 0 : i32
    %c0_i32_1 = arith.constant 0 : i32
    return %c0_i32, %c0_i32_0 : i32, i32
  }
  func.func @transform_4(%arg0: i32) -> (i32, i32) {
    %c0_i32 = arith.constant 0 : i32
    %c0_i32_0 = arith.constant 0 : i32
    %c0_i32_1 = arith.constant 0 : i32
    return %c0_i32, %c0_i32_0 : i32, i32
  }
  func.func @transform_5(%arg0: i32) -> (i32, i32) {
    %c0_i32 = arith.constant 0 : i32
    %c0_i32_0 = arith.constant 0 : i32
    %c0_i32_1 = arith.constant 0 : i32
    return %c0_i32, %c0_i32_0 : i32, i32
  }
  func.func @transform_6(%arg0: i32) -> (i32, i32) {
    %c0_i32 = arith.constant 0 : i32
    %c0_i32_0 = arith.constant 0 : i32
    %c0_i32_1 = arith.constant 0 : i32
    return %c0_i32, %c0_i32_0 : i32, i32
  }
  func.func @transform_7(%arg0: i32) -> (i32, i32, i32) {
    %c0_i32 = arith.constant 0 : i32
    %c0_i32_0 = arith.constant 0 : i32
    %c0_i32_1 = arith.constant 0 : i32
    %c0_i32_2 = arith.constant 0 : i32
    return %c0_i32, %c0_i32_0, %c0_i32_1 : i32, i32, i32
  }
  func.func @transform_8(%arg0: i32) -> (i32, i32, i32) {
    %c0_i32 = arith.constant 0 : i32
    %c0_i32_0 = arith.constant 0 : i32
    %c0_i32_1 = arith.constant 0 : i32
    %c0_i32_2 = arith.constant 0 : i32
    return %c0_i32, %c0_i32_0, %c0_i32_1 : i32, i32, i32
  }
  func.func @transform_9(%arg0: i32) -> (i32, i32, i32) {
    %c0_i32 = arith.constant 0 : i32
    %c0_i32_0 = arith.constant 0 : i32
    %c0_i32_1 = arith.constant 0 : i32
    %c0_i32_2 = arith.constant 0 : i32
    return %c0_i32, %c0_i32_0, %c0_i32_1 : i32, i32, i32
  }
  func.func @transform_10(%arg0: i32) -> (i32, i32, i32) {
    %c0_i32 = arith.constant 0 : i32
    %c0_i32_0 = arith.constant 0 : i32
    %c0_i32_1 = arith.constant 0 : i32
    %c0_i32_2 = arith.constant 0 : i32
    return %c0_i32, %c0_i32_0, %c0_i32_1 : i32, i32, i32
  }
  func.func @transform_11(%arg0: i32) -> (i32, i32, i32) {
    %c0_i32 = arith.constant 0 : i32
    %c0_i32_0 = arith.constant 0 : i32
    %c0_i32_1 = arith.constant 0 : i32
    %c0_i32_2 = arith.constant 0 : i32
    return %c0_i32, %c0_i32_0, %c0_i32_1 : i32, i32, i32
  }
  func.func @transform_12(%arg0: i32) -> (i32, i32, i32) {
    %c0_i32 = arith.constant 0 : i32
    %c0_i32_0 = arith.constant 0 : i32
    %c0_i32_1 = arith.constant 0 : i32
    %c0_i32_2 = arith.constant 0 : i32
    return %c0_i32, %c0_i32_0, %c0_i32_1 : i32, i32, i32
  }
  func.func @transform_13(%arg0: i32) -> (i32, i32) {
    %c0_i32 = arith.constant 0 : i32
    %c0_i32_0 = arith.constant 0 : i32
    %c0_i32_1 = arith.constant 0 : i32
    return %c0_i32, %c0_i32_0 : i32, i32
  }
  func.func @transform_14(%arg0: i32) -> (i32, i32) {
    %c0_i32 = arith.constant 0 : i32
    %c0_i32_0 = arith.constant 0 : i32
    %c0_i32_1 = arith.constant 0 : i32
    return %c0_i32, %c0_i32_0 : i32, i32
  }
  func.func @transform_15(%arg0: i32) -> (i32, i32) {
    %c0_i32 = arith.constant 0 : i32
    %c0_i32_0 = arith.constant 0 : i32
    %c0_i32_1 = arith.constant 0 : i32
    return %c0_i32, %c0_i32_0 : i32, i32
  }
  func.func @transform_16(%arg0: i32) -> (i32, i32) {
    %c0_i32 = arith.constant 0 : i32
    %c0_i32_0 = arith.constant 0 : i32
    return %arg0, %c0_i32 : i32, i32
  }
}

</mosaic_0001>

<llo_original>
// kernel: tile.13
$region0: #{tile.13}
  #allocation0 [shape = 's32[1]{0}', space=sflag, size = 0x4, scoped, tag = 'scoped memory for tile.13']
  %s0 = inlined_call_operand.vmem [shape: f32[8,8], index: 0, kind: input, shape index: {}]
  %s1 = inlined_call_operand.vmem [shape: f32[2,8,4,8], index: 1, kind: output, shape index: {}]
  // Predicated region
  $region2: #{tile.13} parent=0 // pred_check
    _
  $region3: #{tile.13} parent=0 // pred_check_branch
    %3 = sbr.rel (0) target = $region5
  $region4: #{tile.13} parent=0 // pred_region
    _
  $region5: #{tile.13} parent=0 // pred_fallthru
    _
  %v4 = vld [vmem:[%s0] ss:$0 sm:$0xff]
  %5 = vst [vmem:[%s1] sm:$0xf] %v4
  %s6 = scalar_lea.vmem %s1, 32
  %7 = vst [vmem:[%s6] sm:$0xf] %v4
  %s8 = scalar_lea.vmem %s0, 1
  %v9 = vld [vmem:[%s8] ss:$0 sm:$0xff]
  %s10 = scalar_lea.vmem %s1, 4
  %11 = vst [vmem:[%s10] sm:$0xf] %v9
  %s12 = scalar_lea.vmem %s1, 36
  %13 = vst [vmem:[%s12] sm:$0xf] %v9
  %s14 = scalar_lea.vmem %s0, 2
  %v15 = vld [vmem:[%s14] ss:$0 sm:$0xff]
  %s16 = scalar_lea.vmem %s1, 8
  %17 = vst [vmem:[%s16] sm:$0xf] %v15
  %s18 = scalar_lea.vmem %s1, 40
  %19 = vst [vmem:[%s18] sm:$0xf] %v15
  %s20 = scalar_lea.vmem %s0, 3
  %v21 = vld [vmem:[%s20] ss:$0 sm:$0xff]
  %s22 = scalar_lea.vmem %s1, 12
  %23 = vst [vmem:[%s22] sm:$0xf] %v21
  %s24 = scalar_lea.vmem %s1, 44
  %25 = vst [vmem:[%s24] sm:$0xf] %v21
  %s26 = scalar_lea.vmem %s0, 4
  %v27 = vld [vmem:[%s26] ss:$0 sm:$0xff]
  %s28 = scalar_lea.vmem %s1, 16
  %29 = vst [vmem:[%s28] sm:$0xf] %v27
  %s30 = scalar_lea.vmem %s1, 48
  %31 = vst [vmem:[%s30] sm:$0xf] %v27
  %s32 = scalar_lea.vmem %s0, 5
  %v33 = vld [vmem:[%s32] ss:$0 sm:$0xff]
  %s34 = scalar_lea.vmem %s1, 20
  %35 = vst [vmem:[%s34] sm:$0xf] %v33
  %s36 = scalar_lea.vmem %s1, 52
  %37 = vst [vmem:[%s36] sm:$0xf] %v33
  %s38 = scalar_lea.vmem %s0, 6
  %v39 = vld [vmem:[%s38] ss:$0 sm:$0xff]
  %s40 = scalar_lea.vmem %s1, 24
  %41 = vst [vmem:[%s40] sm:$0xf] %v39
  %s42 = scalar_lea.vmem %s1, 56
  %43 = vst [vmem:[%s42] sm:$0xf] %v39
  %s44 = scalar_lea.vmem %s0, 7
  %v45 = vld [vmem:[%s44] ss:$0 sm:$0xff]
  %s46 = scalar_lea.vmem %s1, 28
  %47 = vst [vmem:[%s46] sm:$0xf] %v45
  %s48 = scalar_lea.vmem %s1, 60
  %49 = vst [vmem:[%s48] sm:$0xf] %v45

// kernel: tile.14
$region0: #{tile.14}
  %s0 = inlined_call_operand.vmem [shape: f32[2,8,4,8], index: 0, kind: input, shape index: {}]
  %s1 = inlined_call_operand.vmem [shape: f32[16,32], index: 1, kind: output, shape index: {}]
  $region1: #{tile.14} parent=0
    #allocation0 [shape = 'u8[65536]{0}', space=vmem, size = 0x10000, scoped, tag = 'scoped mem for input reshape']
    %s3 = sshllo.u32 0, 4
    %s4 = smul.addr 4, 15
    %s5 = scalar_lea.vmem %s0, %s4
    %v6 = vld [vmem:[%s5] sm:%s3]
    %s7 = scalar_lea.vmem [#allocation0], 120
    %8 = vst [vmem:[%s7] sm:%s3] %v6
    %s9 = smul.addr 4, 14
    %s10 = scalar_lea.vmem %s0, %s9
    %v11 = vld [vmem:[%s10] sm:%s3]
    %s12 = scalar_lea.vmem [#allocation0], 112
    %13 = vst [vmem:[%s12] sm:%s3] %v11
    %s14 = smul.addr 4, 13
    %s15 = scalar_lea.vmem %s0, %s14
    %v16 = vld [vmem:[%s15] sm:%s3]
    %s17 = scalar_lea.vmem [#allocation0], 104
    %18 = vst [vmem:[%s17] sm:%s3] %v16
    %s19 = smul.addr 4, 12
    %s20 = scalar_lea.vmem %s0, %s19
    %v21 = vld [vmem:[%s20] sm:%s3]
    %s22 = scalar_lea.vmem [#allocation0], 96
    %23 = vst [vmem:[%s22] sm:%s3] %v21
    %s24 = smul.addr 4, 11
    %s25 = scalar_lea.vmem %s0, %s24
    %v26 = vld [vmem:[%s25] sm:%s3]
    %s27 = scalar_lea.vmem [#allocation0], 88
    %28 = vst [vmem:[%s27] sm:%s3] %v26
    %s29 = smul.addr 4, 10
    %s30 = scalar_lea.vmem %s0, %s29
    %v31 = vld [vmem:[%s30] sm:%s3]
    %s32 = scalar_lea.vmem [#allocation0], 80
    %33 = vst [vmem:[%s32] sm:%s3] %v31
    %s34 = smul.addr 4, 9
    %s35 = scalar_lea.vmem %s0, %s34
    %v36 = vld [vmem:[%s35] sm:%s3]
    %s37 = scalar_lea.vmem [#allocation0], 72
    %38 = vst [vmem:[%s37] sm:%s3] %v36
    %s39 = smul.addr 4, 8
    %s40 = scalar_lea.vmem %s0, %s39
    %v41 = vld [vmem:[%s40] sm:%s3]
    %s42 = scalar_lea.vmem [#allocation0], 64
    %43 = vst [vmem:[%s42] sm:%s3] %v41
    %s44 = smul.addr 4, 7
    %s45 = scalar_lea.vmem %s0, %s44
    %v46 = vld [vmem:[%s45] sm:%s3]
    %s47 = scalar_lea.vmem [#allocation0], 56
    %48 = vst [vmem:[%s47] sm:%s3] %v46
    %s49 = smul.addr 4, 6
    %s50 = scalar_lea.vmem %s0, %s49
    %v51 = vld [vmem:[%s50] sm:%s3]
    %s52 = scalar_lea.vmem [#allocation0], 48
    %53 = vst [vmem:[%s52] sm:%s3] %v51
    %s54 = smul.addr 4, 5
    %s55 = scalar_lea.vmem %s0, %s54
    %v56 = vld [vmem:[%s55] sm:%s3]
    %s57 = scalar_lea.vmem [#allocation0], 40
    %58 = vst [vmem:[%s57] sm:%s3] %v56
    %s59 = smul.addr 4, 4
    %s60 = scalar_lea.vmem %s0, %s59
    %v61 = vld [vmem:[%s60] sm:%s3]
    %s62 = scalar_lea.vmem [#allocation0], 32
    %63 = vst [vmem:[%s62] sm:%s3] %v61
    %s64 = smul.addr 4, 3
    %s65 = scalar_lea.vmem %s0, %s64
    %v66 = vld [vmem:[%s65] sm:%s3]
    %s67 = scalar_lea.vmem [#allocation0], 24
    %68 = vst [vmem:[%s67] sm:%s3] %v66
    %s69 = smul.addr 4, 2
    %s70 = scalar_lea.vmem %s0, %s69
    %v71 = vld [vmem:[%s70] sm:%s3]
    %s72 = scalar_lea.vmem [#allocation0], 16
    %73 = vst [vmem:[%s72] sm:%s3] %v71
    %s74 = scalar_lea.vmem %s0, 4
    %v75 = vld [vmem:[%s74] sm:%s3]
    %s76 = scalar_lea.vmem [#allocation0], 8
    %77 = vst [vmem:[%s76] sm:%s3] %v75
    %v78 = vld [vmem:[%s0] sm:%s3]
    %79 = vst [vmem:[#allocation0] sm:%s3] %v78
    %v80 = vld [vmem:[#allocation0] ss:$8 sm:$0xf]
    %v81 = vld [vmem:[#allocation0] ss:$8 sm:$0xf0]
    %vm82 = vcmask 1047556
    %v83 = vsel %vm82, %v81, %v80
    %vm84 = vcmask 64512
    %85 = vst.msk [vmem:[%s1] sm:$0xff] %vm84, %v83
    %s86 = scalar_lea.vmem [#allocation0], 64
    %v87 = vld [vmem:[%s86] ss:$8 sm:$0xf]
    %s88 = scalar_lea.vmem [#allocation0], 64
    %v89 = vld [vmem:[%s88] ss:$8 sm:$0xf0]
    %vm90 = vcmask 1047556
    %v91 = vsel %vm90, %v89, %v87
    %vm92 = vcmask 64512
    %s93 = scalar_lea.vmem %s1, 8
    %94 = vst.msk [vmem:[%s93] sm:$0xff] %vm92, %v91
    %s95 = scalar_lea.vmem [#allocation0], 3
    %v96 = vld [vmem:[%s95] ss:$8 sm:$0xf]
    %s97 = scalar_lea.vmem [#allocation0], 3
    %v98 = vld [vmem:[%s97] ss:$8 sm:$0xf0]
    %vm99 = vcmask 1047556
    %v100 = vsel %vm99, %v98, %v96
    %101 = vrot.lane.b32.xlu0 %v100, 24
    %v102 = vpop.permute.xlu0 %101
    %vm103 = vcmask 261312
    %104 = vst.msk [vmem:[%s1] sm:$0xff] %vm103, %v102
    %s105 = scalar_lea.vmem [#allocation0], 67
    %v106 = vld [vmem:[%s105] ss:$8 sm:$0xf]
    %s107 = scalar_lea.vmem [#allocation0], 67
    %v108 = vld [vmem:[%s107] ss:$8 sm:$0xf0]
    %vm109 = vcmask 1047556
    %v110 = vsel %vm109, %v108, %v106
    %111 = vrot.lane.b32.xlu0 %v110, 24
    %v112 = vpop.permute.xlu0 %111
    %vm113 = vcmask 261312
    %s114 = scalar_lea.vmem %s1, 8
    %115 = vst.msk [vmem:[%s114] sm:$0xff] %vm113, %v112
    %s116 = scalar_lea.vmem [#allocation0], 2
    %v117 = vld [vmem:[%s116] ss:$8 sm:$0xf]
    %s118 = scalar_lea.vmem [#allocation0], 2
    %v119 = vld [vmem:[%s118] ss:$8 sm:$0xf0]
    %vm120 = vcmask 1047556
    %v121 = vsel %vm120, %v119, %v117
    %122 = vrot.lane.b32.xlu0 %v121, 16
    %v123 = vpop.permute.xlu0 %122
    %vm124 = vcmask 195712
    %125 = vst.msk [vmem:[%s1] sm:$0xff] %vm124, %v123
    %s126 = scalar_lea.vmem [#allocation0], 66
    %v127 = vld [vmem:[%s126] ss:$8 sm:$0xf]
    %s128 = scalar_lea.vmem [#allocation0], 66
    %v129 = vld [vmem:[%s128] ss:$8 sm:$0xf0]
    %vm130 = vcmask 1047556
    %v131 = vsel %vm130, %v129, %v127
    %132 = vrot.lane.b32.xlu0 %v131, 16
    %v133 = vpop.permute.xlu0 %132
    %vm134 = vcmask 195712
    %s135 = scalar_lea.vmem %s1, 8
    %136 = vst.msk [vmem:[%s135] sm:$0xff] %vm134, %v133
    %s137 = scalar_lea.vmem [#allocation0], 1
    %v138 = vld [vmem:[%s137] ss:$8 sm:$0xf]
    %s139 = scalar_lea.vmem [#allocation0], 1
    %v140 = vld [vmem:[%s139] ss:$8 sm:$0xf0]
    %vm141 = vcmask 1047556
    %v142 = vsel %vm141, %v140, %v138
    %143 = vrot.lane.b32.xlu0 %v142, 8
    %v144 = vpop.permute.xlu0 %143
    %vm145 = vcmask 130112
    %146 = vst.msk [vmem:[%s1] sm:$0xff] %vm145, %v144
    %s147 = scalar_lea.vmem [#allocation0], 65
    %v148 = vld [vmem:[%s147] ss:$8 sm:$0xf]
    %s149 = scalar_lea.vmem [#allocation0], 65
    %v150 = vld [vmem:[%s149] ss:$8 sm:$0xf0]
    %vm151 = vcmask 1047556
    %v152 = vsel %vm151, %v150, %v148
    %153 = vrot.lane.b32.xlu0 %v152, 8
    %v154 = vpop.permute.xlu0 %153
    %vm155 = vcmask 130112
    %s156 = scalar_lea.vmem %s1, 8
    %157 = vst.msk [vmem:[%s156] sm:$0xff] %vm155, %v154

// kernel: eq.15
$region0: #{eq.15}
  %s0 = inlined_call_operand.vmem [shape: s32[4,8], index: 0, kind: input, shape index: {}]
  %s1 = inlined_call_operand.vmem [shape: s32[32], index: 1, kind: output, shape index: {}]
  $region1: #{eq.15} parent=0
    #allocation0 [shape = 'u8[4096]{0}', space=vmem, size = 0x1000, scoped, tag = 'scoped mem for output reshape']
    #allocation1 [shape = 'u8[4096]{0}', space=vmem, size = 0x1000, scoped, tag = 'scoped mem for input reshape']
    %s3 = sshllo.u32 0, 4
    %v4 = vld [vmem:[%s0] sm:%s3]
    %5 = vst [vmem:[#allocation1] sm:%s3] %v4
    %v6 = vld [vmem:[#allocation1] sm:$0x1]
    %vm7 = vcmask 64512
    %8 = vst.msk [vmem:[#allocation0] sm:$0x1] %vm7, %v6
    %s9 = scalar_lea.vmem [#allocation1], 3
    %v10 = vld [vmem:[%s9] sm:$0x1]
    %11 = vrot.lane.b32.xlu0 %v10, 24
    %v12 = vpop.permute.xlu0 %11
    %vm13 = vcmask 261312
    %14 = vst.msk [vmem:[#allocation0] sm:$0x1] %vm13, %v12
    %s15 = scalar_lea.vmem [#allocation1], 2
    %v16 = vld [vmem:[%s15] sm:$0x1]
    %17 = vrot.lane.b32.xlu0 %v16, 16
    %v18 = vpop.permute.xlu0 %17
    %vm19 = vcmask 195712
    %20 = vst.msk [vmem:[#allocation0] sm:$0x1] %vm19, %v18
    %s21 = scalar_lea.vmem [#allocation1], 1
    %v22 = vld [vmem:[%s21] sm:$0x1]
    %23 = vrot.lane.b32.xlu0 %v22, 8
    %v24 = vpop.permute.xlu0 %23
    %vm25 = vcmask 130112
    %26 = vst.msk [vmem:[#allocation0] sm:$0x1] %vm25, %v24
    %s28 = sshllo.u32 0, 1
    %v30 = vld [vmem:[#allocation0] sm:%s28]
    %s31 = sshllo.u32 0, 1
    %32 = vst [vmem:[%s1] sm:%s31] %v30

// kernel: llama_encoder_forward.1
$region0: #{llama_encoder_forward.1}
  #allocation0 [shape = 'u32[]', space=smem, size = 0x4, offset = 0x4, fixed_abs, tag = 'smem constant byte address 0x4 - core index']
  #allocation1 [shape = 'u32[144,128]{1,0:T(1,128)}', space=vmem, size = 0x12000, scoped, tag = 'internal scratch']
  %s0 = inlined_call_operand.vmem [shape: f32[16,8], index: 0, kind: input, shape index: {}]
  %s1 = inlined_call_operand.vmem [shape: bf16[8,32], index: 1, kind: input, shape index: {}]
  %s2 = inlined_call_operand.vmem [shape: f32[1,32], index: 2, kind: input, shape index: {}]
  %s3 = inlined_call_operand.vmem [shape: f32[16,32], index: 3, kind: input, shape index: {}]
  %s4 = inlined_call_operand.vmem [shape: f32[16,32], index: 4, kind: input, shape index: {}]
  %s5 = inlined_call_operand.vmem [shape: f32[32,32], index: 5, kind: input, shape index: {}]
  %s6 = inlined_call_operand.vmem [shape: bf16[32,32], index: 6, kind: input, shape index: {}]
  %s7 = inlined_call_operand.vmem [shape: f32[2,1,32], index: 7, kind: input, shape index: {}]
  %s8 = inlined_call_operand.vmem [shape: bf16[2,32,160], index: 8, kind: input, shape index: {}]
  %s9 = inlined_call_operand.vmem [shape: bf16[2,32,32], index: 9, kind: input, shape index: {}]
  %s10 = inlined_call_operand.vmem [shape: f32[2,1,32], index: 10, kind: input, shape index: {}]
  %s11 = inlined_call_operand.vmem [shape: bf16[2,32,128], index: 11, kind: input, shape index: {}]
  %s12 = inlined_call_operand.vmem [shape: bf16[2,64,32], index: 12, kind: input, shape index: {}]
  %s13 = inlined_call_operand.vmem [shape: f32[1,32], index: 13, kind: input, shape index: {}]
  %s14 = inlined_call_operand.vmem [shape: bf16[32,128], index: 14, kind: input, shape index: {}]
  %s15 = inlined_call_operand.vmem [shape: f32[1,128], index: 15, kind: input, shape index: {}]
  %s16 = inlined_call_operand.vmem [shape: f32[16,128], index: 16, kind: output, shape index: {}]
  %s17 = sld [smem:[#allocation0]]
  $region74: #{llama_encoder_forward.1} parent=0
    _
  %s19 = ssub.s32 1, %s17
  %s20 = scalar_select 0, %s19, %s17
  // Predicated region
  $region2: #{llama_encoder_forward.1} parent=0 // pred_check
    _
  $region3: #{llama_encoder_forward.1} parent=0 // pred_check_branch
    %22 = sbr.rel (0) target = $region5
  $region4: #{llama_encoder_forward.1} parent=0 // pred_region
    _
  $region5: #{llama_encoder_forward.1} parent=0 // pred_fallthru
    _
  // Predicated region
  $region6: #{llama_encoder_forward.1} parent=0 // pred_check
    _
  $region7: #{llama_encoder_forward.1} parent=0 // pred_check_branch
    %24 = sbr.rel (0) target = $region9
  $region8: #{llama_encoder_forward.1} parent=0 // pred_region
    _
  $region9: #{llama_encoder_forward.1} parent=0 // pred_fallthru
    _
  // Predicated region
  $region10: #{llama_encoder_forward.1} parent=0 // pred_check
    _
  $region11: #{llama_encoder_forward.1} parent=0 // pred_check_branch
    %26 = sbr.rel (0) target = $region13
  $region12: #{llama_encoder_forward.1} parent=0 // pred_region
    _
  $region13: #{llama_encoder_forward.1} parent=0 // pred_fallthru
    _
  // Predicated region
  $region14: #{llama_encoder_forward.1} parent=0 // pred_check
    _
  $region15: #{llama_encoder_forward.1} parent=0 // pred_check_branch
    %28 = sbr.rel (0) target = $region17
  $region16: #{llama_encoder_forward.1} parent=0 // pred_region
    _
  $region17: #{llama_encoder_forward.1} parent=0 // pred_fallthru
    _
  // Predicated region
  $region18: #{llama_encoder_forward.1} parent=0 // pred_check
    _
  $region19: #{llama_encoder_forward.1} parent=0 // pred_check_branch
    %30 = sbr.rel (0) target = $region21
  $region20: #{llama_encoder_forward.1} parent=0 // pred_region
    _
  $region21: #{llama_encoder_forward.1} parent=0 // pred_fallthru
    _
  // Predicated region
  $region22: #{llama_encoder_forward.1} parent=0 // pred_check
    _
  $region23: #{llama_encoder_forward.1} parent=0 // pred_check_branch
    %32 = sbr.rel (0) target = $region25
  $region24: #{llama_encoder_forward.1} parent=0 // pred_region
    _
  $region25: #{llama_encoder_forward.1} parent=0 // pred_fallthru
    _
  // Predicated region
  $region26: #{llama_encoder_forward.1} parent=0 // pred_check
    _
  $region27: #{llama_encoder_forward.1} parent=0 // pred_check_branch
    %34 = sbr.rel (0) target = $region29
  $region28: #{llama_encoder_forward.1} parent=0 // pred_region
    _
  $region29: #{llama_encoder_forward.1} parent=0 // pred_fallthru
    _
  // Predicated region
  $region30: #{llama_encoder_forward.1} parent=0 // pred_check
    _
  $region31: #{llama_encoder_forward.1} parent=0 // pred_check_branch
    %36 = sbr.rel (0) target = $region33
  $region32: #{llama_encoder_forward.1} parent=0 // pred_region
    _
  $region33: #{llama_encoder_forward.1} parent=0 // pred_fallthru
    _
  // Predicated region
  $region34: #{llama_encoder_forward.1} parent=0 // pred_check
    _
  $region35: #{llama_encoder_forward.1} parent=0 // pred_check_branch
    %38 = sbr.rel (0) target = $region37
  $region36: #{llama_encoder_forward.1} parent=0 // pred_region
    _
  $region37: #{llama_encoder_forward.1} parent=0 // pred_fallthru
    _
  // Predicated region
  $region38: #{llama_encoder_forward.1} parent=0 // pred_check
    _
  $region39: #{llama_encoder_forward.1} parent=0 // pred_check_branch
    %40 = sbr.rel (0) target = $region41
  $region40: #{llama_encoder_forward.1} parent=0 // pred_region
    _
  $region41: #{llama_encoder_forward.1} parent=0 // pred_fallthru
    _
  // Predicated region
  $region42: #{llama_encoder_forward.1} parent=0 // pred_check
    _
  $region43: #{llama_encoder_forward.1} parent=0 // pred_check_branch
    %42 = sbr.rel (0) target = $region45
  $region44: #{llama_encoder_forward.1} parent=0 // pred_region
    _
  $region45: #{llama_encoder_forward.1} parent=0 // pred_fallthru
    _
  // Predicated region
  $region46: #{llama_encoder_forward.1} parent=0 // pred_check
    _
  $region47: #{llama_encoder_forward.1} parent=0 // pred_check_branch
    %44 = sbr.rel (0) target = $region49
  $region48: #{llama_encoder_forward.1} parent=0 // pred_region
    _
  $region49: #{llama_encoder_forward.1} parent=0 // pred_fallthru
    _
  // Predicated region
  $region50: #{llama_encoder_forward.1} parent=0 // pred_check
    _
  $region51: #{llama_encoder_forward.1} parent=0 // pred_check_branch
    %46 = sbr.rel (0) target = $region53
  $region52: #{llama_encoder_forward.1} parent=0 // pred_region
    _
  $region53: #{llama_encoder_forward.1} parent=0 // pred_fallthru
    _
  // Predicated region
  $region54: #{llama_encoder_forward.1} parent=0 // pred_check
    _
  $region55: #{llama_encoder_forward.1} parent=0 // pred_check_branch
    %48 = sbr.rel (0) target = $region57
  $region56: #{llama_encoder_forward.1} parent=0 // pred_region
    _
  $region57: #{llama_encoder_forward.1} parent=0 // pred_fallthru
    _
  // Predicated region
  $region58: #{llama_encoder_forward.1} parent=0 // pred_check
    _
  $region59: #{llama_encoder_forward.1} parent=0 // pred_check_branch
    %50 = sbr.rel (0) target = $region61
  $region60: #{llama_encoder_forward.1} parent=0 // pred_region
    _
  $region61: #{llama_encoder_forward.1} parent=0 // pred_fallthru
    _
  // Predicated region
  $region62: #{llama_encoder_forward.1} parent=0 // pred_check
    _
  $region63: #{llama_encoder_forward.1} parent=0 // pred_check_branch
    %52 = sbr.rel (0) target = $region65
  $region64: #{llama_encoder_forward.1} parent=0 // pred_region
    _
  $region65: #{llama_encoder_forward.1} parent=0 // pred_fallthru
    _
  %v54 = vld [vmem:[%s0] sm:$0xff]
  %v55 = vld [vmem:[%s0 + $0x8] sm:$0xff]
  %vm56 = vcmask 64512
  %v57 = vsel %vm56, %v54, 0.0
  %v58 = vrot.slane %v57, 4
  %v59 = vadd.f32 %v57, %v58
  %v60 = vrot.slane %v59, 2
  %v61 = vadd.f32 %v59, %v60
  %v62 = vrot.slane %v61, 1
  %v63 = vadd.f32 %v61, %v62
  %v64 = vrcp.pop %v63
  %v65 = vmul.f32 %v54, %v64
  %v66 = vsel %vm56, %v55, 0.0
  %v67 = vrot.slane %v66, 4
  %v68 = vadd.f32 %v66, %v67
  %v69 = vrot.slane %v68, 2
  %v70 = vadd.f32 %v68, %v69
  %v71 = vrot.slane %v70, 1
  %v72 = vadd.f32 %v70, %v71
  %v73 = vrcp.pop %v72
  %v74 = vmul.f32 %v55, %v73
  %v75 = vpack.c.bf16 %v74, %v65
  %v76 = vld [vmem:[%s1] sm:$0xf]
  %v77 = vld [vmem:[%s2] sm:$0x1]
  %v79 = vlaneseq
  %v80 = vshrl.u32 %v79, 7
  %v81 = vsub.s32 0, %v80
  %v82 = vrot.slane %v77, %v81
  %v85 = vsel %vm56, %v75, 0
  %vm87 = vcmask 1043456
  %v89 = vsel %vm87, %v76, 0
  %91 = vmatprep.subr.bf16.mxu0 0
  %92 = vmatpush1.bf16.msra.mxu0 %v89
  %93 = vmatprep.subr.bf16.mxu0 0
  %94 = vmatpush1.bf16.msra.mxu0 0
  %95 = vmatprep.subr.bf16.mxu0 0
  %96 = vmatpush1.bf16.msra.mxu0 0
  %97 = vmatprep.subr.bf16.mxu0 0
  %98 = vmatpush1.bf16.msra.mxu0 0
  %99 = vmatprep.subr.bf16.mxu0 0
  %100 = vmatpush1.bf16.msra.mxu0 0
  %101 = vmatprep.subr.bf16.mxu0 0
  %102 = vmatpush1.bf16.msra.mxu0 0
  %103 = vmatprep.subr.bf16.mxu0 0
  %104 = vmatpush1.bf16.msra.mxu0 0
  %105 = vmatprep.subr.bf16.mxu0 0
  %106 = vmatpush1.bf16.msra.mxu0 0
  %107 = vmatprep.subr.bf16.mxu0 0
  %108 = vmatpush1.bf16.msra.mxu0 0
  %109 = vmatprep.subr.bf16.mxu0 0
  %110 = vmatpush1.bf16.msra.mxu0 0
  %111 = vmatprep.subr.bf16.mxu0 0
  %112 = vmatpush1.bf16.msra.mxu0 0
  %113 = vmatprep.subr.bf16.mxu0 0
  %114 = vmatpush1.bf16.msra.mxu0 0
  %115 = vmatprep.subr.bf16.mxu0 0
  %116 = vmatpush1.bf16.msra.mxu0 0
  %117 = vmatprep.subr.bf16.mxu0 0
  %118 = vmatpush1.bf16.msra.mxu0 0
  %119 = vmatprep.subr.bf16.mxu0 0
  %120 = vmatpush1.bf16.msra.mxu0 0
  %121 = vmatprep.subr.bf16.mxu0 0
  %122 = vmatpush1.bf16.msra.mxu0 0
  %123 = vmatprep.mubr.bf16.mxu0 0
  %124 = vmatmul.mubr.bf16.gmra.mrb[0].mxu0 %v85
  %v125 = vpop.f32.mrb[0].mxu0
  %v126 = vadd.f32 %v82, %v125
  %v127 = vpop.f32.mrb[0].mxu0
  %v128 = vpop.f32.mrb[0].mxu0
  %v129 = vadd.f32 %v82, %v128
  %v130 = vpop.f32.mrb[0].mxu0
  %131 = vdwg.mxu0
  %v132 = vld [vmem:[%s3] sm:$0xff]
  %v133 = vld [vmem:[%s3 + $0x8] sm:$0xff]
  %v134 = vld [vmem:[%s4] sm:$0xff]
  %v135 = vld [vmem:[%s4 + $0x8] sm:$0xff]
  %v136 = vld [vmem:[%s5] sm:$0xff]
  %v137 = vld [vmem:[%s5 + $0x8] sm:$0xff]
  %v138 = vld [vmem:[%s5 + $0x10] sm:$0xff]
  %v139 = vld [vmem:[%s5 + $0x18] sm:$0xff]
  %v140 = vld [vmem:[%s6] sm:$0xf]
  %v141 = vld [vmem:[%s6 + $0x4] sm:$0xf]
  %v142 = vld [vmem:[%s6 + $0x8] sm:$0xf]
  %v143 = vld [vmem:[%s6 + $0xc] sm:$0xf]
  %v144 = vld [vmem:[%s7] sm:$0x1]
  %v145 = vmul.f32 %v126, %v126
  %v146 = vmul.f32 %v129, %v129
  %vm147 = vcmask 261120
  %v148 = vsel %vm147, %v145, 0.0
  %149 = vadd.xlane.f32.xlu0 %v148
  %v150 = vpop.xlane.xlu0 %149
  %v151 = vsel %vm147, %v146, 0.0
  %152 = vadd.xlane.f32.xlu0 %v151
  %v153 = vpop.xlane.xlu0 %152
  %v154 = vrcp.pop 32.0
  %v155 = vmul.f32 %v150, %v154
  %v156 = vmul.f32 %v153, %v154
  %v157 = vadd.f32 %v155, 1e-06
  %v158 = vadd.f32 %v156, 1e-06
  %v159 = vrsqrt.pop %v157
  %v160 = vrsqrt.pop %v158
  %v161 = vmul.f32 %v126, %v159
  %v162 = vmul.f32 %v129, %v160
  %v164 = vlaneseq
  %v165 = vshrl.u32 %v164, 7
  %v166 = vsub.s32 0, %v165
  %v167 = vrot.slane %v144, %v166
  %v169 = vmul.f32 %v161, %v167
  %v170 = vmul.f32 %v162, %v167
  %v171 = vpack.c.bf16 %v170, %v169
  %v172 = vld [vmem:[%s8] sm:$0xff]
  %v173 = vld [vmem:[%s8 + $0x8] sm:$0xff]
  %v174 = vld [vmem:[%s8 + $0x10] sm:$0xff]
  %v175 = vld [vmem:[%s8 + $0x18] sm:$0xff]
  %v180 = vunpack.c.l.b16 %v172
  %v181 = vunpack.c.h.b16 %v172
  %v182 = vunpack.c.l.b16 %v173
  %v183 = vunpack.c.h.b16 %v173
  %v184 = vunpack.c.l.b16 %v174
  %v185 = vunpack.c.h.b16 %v174
  %v186 = vunpack.c.l.b16 %v175
  %v187 = vunpack.c.h.b16 %v175
  %v188 = vpack.c.b16 %v182, %v180
  %v189 = vpack.c.b16 %v183, %v181
  %v190 = vpack.c.b16 %v186, %v184
  %v191 = vpack.c.b16 %v187, %v185
  %v197 = vsel %vm147, %v171, 0
  %199 = vmatprep.subr.bf16.mxu0 %v189
  %200 = vmatpush1.bf16.msra.mxu0 %v188
  %201 = vmatprep.subr.bf16.mxu0 %v191
  %202 = vmatpush1.bf16.msra.mxu0 %v190
  %203 = vmatprep.subr.bf16.mxu0 0
  %204 = vmatpush1.bf16.msra.mxu0 0
  %205 = vmatprep.subr.bf16.mxu0 0
  %206 = vmatpush1.bf16.msra.mxu0 0
  %207 = vmatprep.subr.bf16.mxu0 0
  %208 = vmatpush1.bf16.msra.mxu0 0
  %209 = vmatprep.subr.bf16.mxu0 0
  %210 = vmatpush1.bf16.msra.mxu0 0
  %211 = vmatprep.subr.bf16.mxu0 0
  %212 = vmatpush1.bf16.msra.mxu0 0
  %213 = vmatprep.subr.bf16.mxu0 0
  %214 = vmatpush1.bf16.msra.mxu0 0
  %215 = vmatprep.subr.bf16.mxu0 0
  %216 = vmatpush1.bf16.msra.mxu0 0
  %217 = vmatprep.subr.bf16.mxu0 0
  %218 = vmatpush1.bf16.msra.mxu0 0
  %219 = vmatprep.subr.bf16.mxu0 0
  %220 = vmatpush1.bf16.msra.mxu0 0
  %221 = vmatprep.subr.bf16.mxu0 0
  %222 = vmatpush1.bf16.msra.mxu0 0
  %223 = vmatprep.subr.bf16.mxu0 0
  %224 = vmatpush1.bf16.msra.mxu0 0
  %225 = vmatprep.subr.bf16.mxu0 0
  %226 = vmatpush1.bf16.msra.mxu0 0
  %227 = vmatprep.subr.bf16.mxu0 0
  %228 = vmatpush1.bf16.msra.mxu0 0
  %229 = vmatprep.subr.bf16.mxu0 0
  %230 = vmatpush1.bf16.msra.mxu0 0
  %231 = vmatprep.mubr.bf16.mxu0 0
  %232 = vmatmul.mubr.bf16.gmra.mrb[0].mxu0 %v197
  %v233 = vpop.f32.mrb[0].mxu0
  %v234 = vadd.f32 0.0, %v233
  %v235 = vpop.f32.mrb[0].mxu0
  %v236 = vadd.f32 0.0, %v235
  %v237 = vpop.f32.mrb[0].mxu0
  %v238 = vadd.f32 0.0, %v237
  %v239 = vpop.f32.mrb[0].mxu0
  %v240 = vadd.f32 0.0, %v239
  %241 = vdwg.mxu0
  %v242 = vmul.f32 %v234, %v132
  %v243 = vmul.f32 %v238, %v133
  %246 = vrot.lane.b32.xlu0 %v134, 32
  %v247 = vpop.permute.xlu0 %246
  %248 = vrot.lane.b32.xlu0 %v135, 32
  %v249 = vpop.permute.xlu0 %248
  %v252 = vmul.f32 %v234, %v247
  %v253 = vmul.f32 %v238, %v249
  %256 = vrot.lane.b32.xlu0 %v252, 96
  %v257 = vpop.permute.xlu0 %256
  %258 = vrot.lane.b32.xlu0 %v253, 96
  %v259 = vpop.permute.xlu0 %258
  %v262 = vadd.f32 %v242, %v257
  %v263 = vadd.f32 %v243, %v259
  %266 = vrot.lane.b32.xlu0 %v132, 64
  %v267 = vpop.permute.xlu0 %266
  %268 = vrot.lane.b32.xlu0 %v133, 64
  %v269 = vpop.permute.xlu0 %268
  %v272 = vmul.f32 %v234, %v267
  %v273 = vmul.f32 %v238, %v269
  %274 = vrot.lane.b32.xlu0 %v134, 96
  %v275 = vpop.permute.xlu0 %274
  %276 = vrot.lane.b32.xlu0 %v135, 96
  %v277 = vpop.permute.xlu0 %276
  %v280 = vmul.f32 %v234, %v275
  %v281 = vmul.f32 %v238, %v277
  %284 = vrot.lane.b32.xlu0 %v280, 96
  %v285 = vpop.permute.xlu0 %284
  %286 = vrot.lane.b32.xlu0 %v281, 96
  %v287 = vpop.permute.xlu0 %286
  %v290 = vadd.f32 %v272, %v285
  %v291 = vadd.f32 %v273, %v287
  %v292 = vpack.c.bf16 %v262, %v262
  %297 = vrot.lane.b32.xlu0 %v136, 64
  %v298 = vpop.permute.xlu0 %297
  %299 = vrot.lane.b32.xlu0 %v137, 64
  %v300 = vpop.permute.xlu0 %299
  %301 = vrot.lane.b32.xlu0 %v138, 64
  %v302 = vpop.permute.xlu0 %301
  %303 = vrot.lane.b32.xlu0 %v139, 64
  %v304 = vpop.permute.xlu0 %303
  %v309 = vmul.f32 %v290, %v298
  %v310 = vmul.f32 %v290, %v300
  %v311 = vmul.f32 %v290, %v302
  %v312 = vmul.f32 %v290, %v304
  %v313 = vpack.c.bf16 %v310, %v309
  %v314 = vpack.c.bf16 %v312, %v311
  %v315 = vmul.f32 %v236, %v136
  %v316 = vmul.f32 %v236, %v137
  %v317 = vmul.f32 %v236, %v138
  %v318 = vmul.f32 %v236, %v139
  %v319 = vpack.c.bf16 %v316, %v315
  %v320 = vpack.c.bf16 %v318, %v317
  %323 = vrot.lane.b32.xlu0 %v313, 64
  %v324 = vpop.permute.xlu0 %323
  %325 = vrot.lane.b32.xlu0 %v314, 64
  %v326 = vpop.permute.xlu0 %325
  %v328 = vsel %vm147, %v292, 0
  %v331 = vsel %vm147, %v324, 0
  %v334 = vsel %vm147, %v326, 0
  %336 = vmatprep.subr.bf16.mxu0 0
  %337 = vmatpush1.bf16.xpose.msra.mxu0 %v331
  %338 = vmatprep.subr.bf16.mxu0 0
  %339 = vmatpush1.bf16.xpose.msra.mxu0 %v334
  %340 = vmatprep.subr.bf16.mxu0 0
  %341 = vmatpush1.bf16.xpose.msra.mxu0 0
  %342 = vmatprep.subr.bf16.mxu0 0
  %343 = vmatpush1.bf16.xpose.msra.mxu0 0
  %344 = vmatprep.subr.bf16.mxu0 0
  %345 = vmatpush1.bf16.xpose.msra.mxu0 0
  %346 = vmatprep.subr.bf16.mxu0 0
  %347 = vmatpush1.bf16.xpose.msra.mxu0 0
  %348 = vmatprep.subr.bf16.mxu0 0
  %349 = vmatpush1.bf16.xpose.msra.mxu0 0
  %350 = vmatprep.subr.bf16.mxu0 0
  %351 = vmatpush1.bf16.xpose.msra.mxu0 0
  %352 = vmatprep.subr.bf16.mxu0 0
  %353 = vmatpush1.bf16.xpose.msra.mxu0 0
  %354 = vmatprep.subr.bf16.mxu0 0
  %355 = vmatpush1.bf16.xpose.msra.mxu0 0
  %356 = vmatprep.subr.bf16.mxu0 0
  %357 = vmatpush1.bf16.xpose.msra.mxu0 0
  %358 = vmatprep.subr.bf16.mxu0 0
  %359 = vmatpush1.bf16.xpose.msra.mxu0 0
  %360 = vmatprep.subr.bf16.mxu0 0
  %361 = vmatpush1.bf16.xpose.msra.mxu0 0
  %362 = vmatprep.subr.bf16.mxu0 0
  %363 = vmatpush1.bf16.xpose.msra.mxu0 0
  %364 = vmatprep.subr.bf16.mxu0 0
  %365 = vmatpush1.bf16.xpose.msra.mxu0 0
  %366 = vmatprep.subr.bf16.mxu0 0
  %367 = vmatpush1.bf16.xpose.msra.mxu0 0
  %368 = vmatprep.mubr.bf16.mxu0 0
  %369 = vmatmul.mubr.bf16.gmra.mrb[0].mxu0 %v328
  %v370 = vpop.f32.mrb[0].mxu0
  %v371 = vadd.f32 0.0, %v370
  %v372 = vpop.f32.mrb[0].mxu0
  %v373 = vpop.f32.mrb[0].mxu0
  %v374 = vpop.f32.mrb[0].mxu0
  %375 = vdwg.mxu0
  %v376 = vsel %vm147, %v371, -inf
  %377 = vmax.xlane.f32.xlu0 %v376
  %v378 = vpop.xlane.xlu0 %377
  %v379 = vsub.f32 %v371, %v378
  %v380 = vmul.f32 %v379, 1.442695
  %v381 = vpow.pop %v380
  %v382 = vpack.c.bf16 %v381, %v381
  %v387 = vunpack.c.l.b16 %v140
  %v388 = vunpack.c.l.b16 %v141
  %v389 = vunpack.c.l.b16 %v142
  %v390 = vunpack.c.l.b16 %v143
  %v391 = vpack.c.b16 %v388, %v387
  %v392 = vpack.c.b16 %v390, %v389
  %v396 = vsel %vm147, %v382, 0
  %398 = vmatprep.subr.bf16.mxu0 0
  %399 = vmatpush1.bf16.msra.mxu0 %v391
  %400 = vmatprep.subr.bf16.mxu0 0
  %401 = vmatpush1.bf16.msra.mxu0 %v392
  %402 = vmatprep.subr.bf16.mxu0 0
  %403 = vmatpush1.bf16.msra.mxu0 0
  %404 = vmatprep.subr.bf16.mxu0 0
  %405 = vmatpush1.bf16.msra.mxu0 0
  %406 = vmatprep.subr.bf16.mxu0 0
  %407 = vmatpush1.bf16.msra.mxu0 0
  %408 = vmatprep.subr.bf16.mxu0 0
  %409 = vmatpush1.bf16.msra.mxu0 0
  %410 = vmatprep.subr.bf16.mxu0 0
  %411 = vmatpush1.bf16.msra.mxu0 0
  %412 = vmatprep.subr.bf16.mxu0 0
  %413 = vmatpush1.bf16.msra.mxu0 0
  %414 = vmatprep.subr.bf16.mxu0 0
  %415 = vmatpush1.bf16.msra.mxu0 0
  %416 = vmatprep.subr.bf16.mxu0 0
  %417 = vmatpush1.bf16.msra.mxu0 0
  %418 = vmatprep.subr.bf16.mxu0 0
  %419 = vmatpush1.bf16.msra.mxu0 0
  %420 = vmatprep.subr.bf16.mxu0 0
  %421 = vmatpush1.bf16.msra.mxu0 0
  %422 = vmatprep.subr.bf16.mxu0 0
  %423 = vmatpush1.bf16.msra.mxu0 0
  %424 = vmatprep.subr.bf16.mxu0 0
  %425 = vmatpush1.bf16.msra.mxu0 0
  %426 = vmatprep.subr.bf16.mxu0 0
  %427 = vmatpush1.bf16.msra.mxu0 0
  %428 = vmatprep.subr.bf16.mxu0 0
  %429 = vmatpush1.bf16.msra.mxu0 0
  %430 = vmatprep.mubr.bf16.mxu0 0
  %431 = vmatmul.mubr.bf16.gmra.mrb[0].mxu0 %v396
  %v432 = vpop.f32.mrb[0].mxu0
  %v433 = vadd.f32 0.0, %v432
  %v434 = vpop.f32.mrb[0].mxu0
  %v435 = vpop.f32.mrb[0].mxu0
  %v436 = vpop.f32.mrb[0].mxu0
  %437 = vdwg.mxu0
  %v438 = vrcp.pop %v433
  %v439 = vmul.f32 %v381, %v438
  %v440 = vpack.c.bf16 %v439, %v439
  %v442 = vsel %vm147, %v440, 0
  %444 = vmatprep.subr.bf16.mxu0 0
  %445 = vmatpush1.bf16.msra.mxu0 %v319
  %446 = vmatprep.subr.bf16.mxu0 0
  %447 = vmatpush1.bf16.msra.mxu0 %v320
  %448 = vmatprep.subr.bf16.mxu0 0
  %449 = vmatpush1.bf16.msra.mxu0 0
  %450 = vmatprep.subr.bf16.mxu0 0
  %451 = vmatpush1.bf16.msra.mxu0 0
  %452 = vmatprep.subr.bf16.mxu0 0
  %453 = vmatpush1.bf16.msra.mxu0 0
  %454 = vmatprep.subr.bf16.mxu0 0
  %455 = vmatpush1.bf16.msra.mxu0 0
  %456 = vmatprep.subr.bf16.mxu0 0
  %457 = vmatpush1.bf16.msra.mxu0 0
  %458 = vmatprep.subr.bf16.mxu0 0
  %459 = vmatpush1.bf16.msra.mxu0 0
  %460 = vmatprep.subr.bf16.mxu0 0
  %461 = vmatpush1.bf16.msra.mxu0 0
  %462 = vmatprep.subr.bf16.mxu0 0
  %463 = vmatpush1.bf16.msra.mxu0 0
  %464 = vmatprep.subr.bf16.mxu0 0
  %465 = vmatpush1.bf16.msra.mxu0 0
  %466 = vmatprep.subr.bf16.mxu0 0
  %467 = vmatpush1.bf16.msra.mxu0 0
  %468 = vmatprep.subr.bf16.mxu0 0
  %469 = vmatpush1.bf16.msra.mxu0 0
  %470 = vmatprep.subr.bf16.mxu0 0
  %471 = vmatpush1.bf16.msra.mxu0 0
  %472 = vmatprep.subr.bf16.mxu0 0
  %473 = vmatpush1.bf16.msra.mxu0 0
  %474 = vmatprep.subr.bf16.mxu0 0
  %475 = vmatpush1.bf16.msra.mxu0 0
  %476 = vmatprep.mubr.bf16.mxu0 0
  %477 = vmatmul.mubr.bf16.gmra.mrb[0].mxu0 %v442
  %v478 = vpop.f32.mrb[0].mxu0
  %v479 = vadd.f32 0.0, %v478
  %v480 = vpop.f32.mrb[0].mxu0
  %v481 = vpop.f32.mrb[0].mxu0
  %v482 = vpop.f32.mrb[0].mxu0
  %483 = vdwg.mxu0
  %v484 = vpack.c.bf16 %v263, %v263
  %v485 = vmul.f32 %v291, %v298
  %v486 = vmul.f32 %v291, %v300
  %v487 = vmul.f32 %v291, %v302
  %v488 = vmul.f32 %v291, %v304
  %v489 = vpack.c.bf16 %v486, %v485
  %v490 = vpack.c.bf16 %v488, %v487
  %v491 = vmul.f32 %v240, %v136
  %v492 = vmul.f32 %v240, %v137
  %v493 = vmul.f32 %v240, %v138
  %v494 = vmul.f32 %v240, %v139
  %v495 = vpack.c.bf16 %v492, %v491
  %v496 = vpack.c.bf16 %v494, %v493
  %499 = vrot.lane.b32.xlu0 %v489, 64
  %v500 = vpop.permute.xlu0 %499
  %501 = vrot.lane.b32.xlu0 %v490, 64
  %v502 = vpop.permute.xlu0 %501
  %v504 = vsel %vm147, %v484, 0
  %v507 = vsel %vm147, %v500, 0
  %v510 = vsel %vm147, %v502, 0
  %512 = vmatprep.subr.bf16.mxu0 0
  %513 = vmatpush1.bf16.xpose.msra.mxu0 %v507
  %514 = vmatprep.subr.bf16.mxu0 0
  %515 = vmatpush1.bf16.xpose.msra.mxu0 %v510
  %516 = vmatprep.subr.bf16.mxu0 0
  %517 = vmatpush1.bf16.xpose.msra.mxu0 0
  %518 = vmatprep.subr.bf16.mxu0 0
  %519 = vmatpush1.bf16.xpose.msra.mxu0 0
  %520 = vmatprep.subr.bf16.mxu0 0
  %521 = vmatpush1.bf16.xpose.msra.mxu0 0
  %522 = vmatprep.subr.bf16.mxu0 0
  %523 = vmatpush1.bf16.xpose.msra.mxu0 0
  %524 = vmatprep.subr.bf16.mxu0 0
  %525 = vmatpush1.bf16.xpose.msra.mxu0 0
  %526 = vmatprep.subr.bf16.mxu0 0
  %527 = vmatpush1.bf16.xpose.msra.mxu0 0
  %528 = vmatprep.subr.bf16.mxu0 0
  %529 = vmatpush1.bf16.xpose.msra.mxu0 0
  %530 = vmatprep.subr.bf16.mxu0 0
  %531 = vmatpush1.bf16.xpose.msra.mxu0 0
  %532 = vmatprep.subr.bf16.mxu0 0
  %533 = vmatpush1.bf16.xpose.msra.mxu0 0
  %534 = vmatprep.subr.bf16.mxu0 0
  %535 = vmatpush1.bf16.xpose.msra.mxu0 0
  %536 = vmatprep.subr.bf16.mxu0 0
  %537 = vmatpush1.bf16.xpose.msra.mxu0 0
  %538 = vmatprep.subr.bf16.mxu0 0
  %539 = vmatpush1.bf16.xpose.msra.mxu0 0
  %540 = vmatprep.subr.bf16.mxu0 0
  %541 = vmatpush1.bf16.xpose.msra.mxu0 0
  %542 = vmatprep.subr.bf16.mxu0 0
  %543 = vmatpush1.bf16.xpose.msra.mxu0 0
  %544 = vmatprep.mubr.bf16.mxu0 0
  %545 = vmatmul.mubr.bf16.gmra.mrb[0].mxu0 %v504
  %v546 = vpop.f32.mrb[0].mxu0
  %v547 = vadd.f32 0.0, %v546
  %v548 = vpop.f32.mrb[0].mxu0
  %v549 = vpop.f32.mrb[0].mxu0
  %v550 = vpop.f32.mrb[0].mxu0
  %551 = vdwg.mxu0
  %v552 = vsel %vm147, %v547, -inf
  %553 = vmax.xlane.f32.xlu0 %v552
  %v554 = vpop.xlane.xlu0 %553
  %v555 = vsub.f32 %v547, %v554
  %v556 = vmul.f32 %v555, 1.442695
  %v557 = vpow.pop %v556
  %v558 = vpack.c.bf16 %v557, %v557
  %v560 = vsel %vm147, %v558, 0
  %562 = vmatprep.subr.bf16.mxu0 0
  %563 = vmatpush1.bf16.msra.mxu0 %v391
  %564 = vmatprep.subr.bf16.mxu0 0
  %565 = vmatpush1.bf16.msra.mxu0 %v392
  %566 = vmatprep.subr.bf16.mxu0 0
  %567 = vmatpush1.bf16.msra.mxu0 0
  %568 = vmatprep.subr.bf16.mxu0 0
  %569 = vmatpush1.bf16.msra.mxu0 0
  %570 = vmatprep.subr.bf16.mxu0 0
  %571 = vmatpush1.bf16.msra.mxu0 0
  %572 = vmatprep.subr.bf16.mxu0 0
  %573 = vmatpush1.bf16.msra.mxu0 0
  %574 = vmatprep.subr.bf16.mxu0 0
  %575 = vmatpush1.bf16.msra.mxu0 0
  %576 = vmatprep.subr.bf16.mxu0 0
  %577 = vmatpush1.bf16.msra.mxu0 0
  %578 = vmatprep.subr.bf16.mxu0 0
  %579 = vmatpush1.bf16.msra.mxu0 0
  %580 = vmatprep.subr.bf16.mxu0 0
  %581 = vmatpush1.bf16.msra.mxu0 0
  %582 = vmatprep.subr.bf16.mxu0 0
  %583 = vmatpush1.bf16.msra.mxu0 0
  %584 = vmatprep.subr.bf16.mxu0 0
  %585 = vmatpush1.bf16.msra.mxu0 0
  %586 = vmatprep.subr.bf16.mxu0 0
  %587 = vmatpush1.bf16.msra.mxu0 0
  %588 = vmatprep.subr.bf16.mxu0 0
  %589 = vmatpush1.bf16.msra.mxu0 0
  %590 = vmatprep.subr.bf16.mxu0 0
  %591 = vmatpush1.bf16.msra.mxu0 0
  %592 = vmatprep.subr.bf16.mxu0 0
  %593 = vmatpush1.bf16.msra.mxu0 0
  %594 = vmatprep.mubr.bf16.mxu0 0
  %595 = vmatmul.mubr.bf16.gmra.mrb[0].mxu0 %v560
  %v596 = vpop.f32.mrb[0].mxu0
  %v597 = vadd.f32 0.0, %v596
  %v598 = vpop.f32.mrb[0].mxu0
  %v599 = vpop.f32.mrb[0].mxu0
  %v600 = vpop.f32.mrb[0].mxu0
  %601 = vdwg.mxu0
  %v602 = vrcp.pop %v597
  %v603 = vmul.f32 %v557, %v602
  %v604 = vpack.c.bf16 %v603, %v603
  %v606 = vsel %vm147, %v604, 0
  %608 = vmatprep.subr.bf16.mxu0 0
  %609 = vmatpush1.bf16.msra.mxu0 %v495
  %610 = vmatprep.subr.bf16.mxu0 0
  %611 = vmatpush1.bf16.msra.mxu0 %v496
  %612 = vmatprep.subr.bf16.mxu0 0
  %613 = vmatpush1.bf16.msra.mxu0 0
  %614 = vmatprep.subr.bf16.mxu0 0
  %615 = vmatpush1.bf16.msra.mxu0 0
  %616 = vmatprep.subr.bf16.mxu0 0
  %617 = vmatpush1.bf16.msra.mxu0 0
  %618 = vmatprep.subr.bf16.mxu0 0
  %619 = vmatpush1.bf16.msra.mxu0 0
  %620 = vmatprep.subr.bf16.mxu0 0
  %621 = vmatpush1.bf16.msra.mxu0 0
  %622 = vmatprep.subr.bf16.mxu0 0
  %623 = vmatpush1.bf16.msra.mxu0 0
  %624 = vmatprep.subr.bf16.mxu0 0
  %625 = vmatpush1.bf16.msra.mxu0 0
  %626 = vmatprep.subr.bf16.mxu0 0
  %627 = vmatpush1.bf16.msra.mxu0 0
  %628 = vmatprep.subr.bf16.mxu0 0
  %629 = vmatpush1.bf16.msra.mxu0 0
  %630 = vmatprep.subr.bf16.mxu0 0
  %631 = vmatpush1.bf16.msra.mxu0 0
  %632 = vmatprep.subr.bf16.mxu0 0
  %633 = vmatpush1.bf16.msra.mxu0 0
  %634 = vmatprep.subr.bf16.mxu0 0
  %635 = vmatpush1.bf16.msra.mxu0 0
  %636 = vmatprep.subr.bf16.mxu0 0
  %637 = vmatpush1.bf16.msra.mxu0 0
  %638 = vmatprep.subr.bf16.mxu0 0
  %639 = vmatpush1.bf16.msra.mxu0 0
  %640 = vmatprep.mubr.bf16.mxu0 0
  %641 = vmatmul.mubr.bf16.gmra.mrb[0].mxu0 %v606
  %v642 = vpop.f32.mrb[0].mxu0
  %v643 = vadd.f32 0.0, %v642
  %v644 = vpop.f32.mrb[0].mxu0
  %v645 = vpop.f32.mrb[0].mxu0
  %v646 = vpop.f32.mrb[0].mxu0
  %647 = vdwg.mxu0
  %v648 = vpack.c.bf16 %v643, %v479
  %v649 = vld [vmem:[%s9] sm:$0xf]
  %v650 = vld [vmem:[%s9 + $0x4] sm:$0xf]
  %v651 = vld [vmem:[%s9 + $0x8] sm:$0xf]
  %v652 = vld [vmem:[%s9 + $0xc] sm:$0xf]
  %v657 = vunpack.c.l.b16 %v649
  %v658 = vunpack.c.l.b16 %v650
  %v659 = vunpack.c.l.b16 %v651
  %v660 = vunpack.c.l.b16 %v652
  %v661 = vpack.c.b16 %v658, %v657
  %v662 = vpack.c.b16 %v660, %v659
  %v666 = vsel %vm147, %v648, 0
  %668 = vmatprep.subr.bf16.mxu0 0
  %669 = vmatpush1.bf16.msra.mxu0 %v661
  %670 = vmatprep.subr.bf16.mxu0 0
  %671 = vmatpush1.bf16.msra.mxu0 %v662
  %672 = vmatprep.subr.bf16.mxu0 0
  %673 = vmatpush1.bf16.msra.mxu0 0
  %674 = vmatprep.subr.bf16.mxu0 0
  %675 = vmatpush1.bf16.msra.mxu0 0
  %676 = vmatprep.subr.bf16.mxu0 0
  %677 = vmatpush1.bf16.msra.mxu0 0
  %678 = vmatprep.subr.bf16.mxu0 0
  %679 = vmatpush1.bf16.msra.mxu0 0
  %680 = vmatprep.subr.bf16.mxu0 0
  %681 = vmatpush1.bf16.msra.mxu0 0
  %682 = vmatprep.subr.bf16.mxu0 0
  %683 = vmatpush1.bf16.msra.mxu0 0
  %684 = vmatprep.subr.bf16.mxu0 0
  %685 = vmatpush1.bf16.msra.mxu0 0
  %686 = vmatprep.subr.bf16.mxu0 0
  %687 = vmatpush1.bf16.msra.mxu0 0
  %688 = vmatprep.subr.bf16.mxu0 0
  %689 = vmatpush1.bf16.msra.mxu0 0
  %690 = vmatprep.subr.bf16.mxu0 0
  %691 = vmatpush1.bf16.msra.mxu0 0
  %692 = vmatprep.subr.bf16.mxu0 0
  %693 = vmatpush1.bf16.msra.mxu0 0
  %694 = vmatprep.subr.bf16.mxu0 0
  %695 = vmatpush1.bf16.msra.mxu0 0
  %696 = vmatprep.subr.bf16.mxu0 0
  %697 = vmatpush1.bf16.msra.mxu0 0
  %698 = vmatprep.subr.bf16.mxu0 0
  %699 = vmatpush1.bf16.msra.mxu0 0
  %700 = vmatprep.mubr.bf16.mxu0 0
  %701 = vmatmul.mubr.bf16.gmra.mrb[0].mxu0 %v666
  %v702 = vpop.f32.mrb[0].mxu0
  %v703 = vadd.f32 0.0, %v702
  %v704 = vpop.f32.mrb[0].mxu0
  %v705 = vpop.f32.mrb[0].mxu0
  %v706 = vadd.f32 0.0, %v705
  %v707 = vpop.f32.mrb[0].mxu0
  %708 = vdwg.mxu0
  %v709 = vadd.f32 %v126, %v703
  %v710 = vadd.f32 %v129, %v706
  %v711 = vld [vmem:[%s10] sm:$0x1]
  %v712 = vmul.f32 %v709, %v709
  %v713 = vmul.f32 %v710, %v710
  %v714 = vsel %vm147, %v712, 0.0
  %715 = vadd.xlane.f32.xlu0 %v714
  %v716 = vpop.xlane.xlu0 %715
  %v717 = vsel %vm147, %v713, 0.0
  %718 = vadd.xlane.f32.xlu0 %v717
  %v719 = vpop.xlane.xlu0 %718
  %v720 = vmul.f32 %v716, %v154
  %v721 = vmul.f32 %v719, %v154
  %v722 = vadd.f32 %v720, 1e-06
  %v723 = vadd.f32 %v721, 1e-06
  %v724 = vrsqrt.pop %v722
  %v725 = vrsqrt.pop %v723
  %v726 = vmul.f32 %v709, %v724
  %v727 = vmul.f32 %v710, %v725
  %v729 = vlaneseq
  %v730 = vshrl.u32 %v729, 7
  %v731 = vsub.s32 0, %v730
  %v732 = vrot.slane %v711, %v731
  %v734 = vmul.f32 %v726, %v732
  %v735 = vmul.f32 %v727, %v732
  %v736 = vpack.c.bf16 %v735, %v734
  %v737 = vld [vmem:[%s11] sm:$0xf]
  %v738 = vld [vmem:[%s11 + $0x4] sm:$0xf]
  %v739 = vld [vmem:[%s11 + $0x8] sm:$0xf]
  %v740 = vld [vmem:[%s11 + $0xc] sm:$0xf]
  %v745 = vunpack.c.l.b16 %v737
  %v746 = vunpack.c.l.b16 %v738
  %v747 = vunpack.c.l.b16 %v739
  %v748 = vunpack.c.l.b16 %v740
  %v749 = vpack.c.b16 %v746, %v745
  %v750 = vpack.c.b16 %v748, %v747
  %v754 = vsel %vm147, %v736, 0
  %756 = vmatprep.subr.bf16.mxu0 0
  %757 = vmatpush1.bf16.msra.mxu0 %v749
  %758 = vmatprep.subr.bf16.mxu0 0
  %759 = vmatpush1.bf16.msra.mxu0 %v750
  %760 = vmatprep.subr.bf16.mxu0 0
  %761 = vmatpush1.bf16.msra.mxu0 0
  %762 = vmatprep.subr.bf16.mxu0 0
  %763 = vmatpush1.bf16.msra.mxu0 0
  %764 = vmatprep.subr.bf16.mxu0 0
  %765 = vmatpush1.bf16.msra.mxu0 0
  %766 = vmatprep.subr.bf16.mxu0 0
  %767 = vmatpush1.bf16.msra.mxu0 0
  %768 = vmatprep.subr.bf16.mxu0 0
  %769 = vmatpush1.bf16.msra.mxu0 0
  %770 = vmatprep.subr.bf16.mxu0 0
  %771 = vmatpush1.bf16.msra.mxu0 0
  %772 = vmatprep.subr.bf16.mxu0 0
  %773 = vmatpush1.bf16.msra.mxu0 0
  %774 = vmatprep.subr.bf16.mxu0 0
  %775 = vmatpush1.bf16.msra.mxu0 0
  %776 = vmatprep.subr.bf16.mxu0 0
  %777 = vmatpush1.bf16.msra.mxu0 0
  %778 = vmatprep.subr.bf16.mxu0 0
  %779 = vmatpush1.bf16.msra.mxu0 0
  %780 = vmatprep.subr.bf16.mxu0 0
  %781 = vmatpush1.bf16.msra.mxu0 0
  %782 = vmatprep.subr.bf16.mxu0 0
  %783 = vmatpush1.bf16.msra.mxu0 0
  %784 = vmatprep.subr.bf16.mxu0 0
  %785 = vmatpush1.bf16.msra.mxu0 0
  %786 = vmatprep.subr.bf16.mxu0 0
  %787 = vmatpush1.bf16.msra.mxu0 0
  %788 = vmatprep.mubr.bf16.mxu0 0
  %789 = vmatmul.mubr.bf16.gmra.mrb[0].mxu0 %v754
  %v790 = vpop.f32.mrb[0].mxu0
  %v791 = vadd.f32 0.0, %v790
  %v792 = vpop.f32.mrb[0].mxu0
  %v793 = vpop.f32.mrb[0].mxu0
  %v794 = vadd.f32 0.0, %v793
  %v795 = vpop.f32.mrb[0].mxu0
  %796 = vdwg.mxu0
  %v797 = vsub.f32 0.0, %v791
  %v798 = vsub.f32 0.0, %v794
  %v799 = vmul.f32 %v797, 1.442695
  %v800 = vpow.pop %v799
  %v801 = vmul.f32 %v798, 1.442695
  %v802 = vpow.pop %v801
  %v803 = vadd.f32 %v800, 1.0
  %v804 = vadd.f32 %v802, 1.0
  %v805 = vrcp.pop %v803
  %v806 = vrcp.pop %v804
  %v807 = vmul.f32 %v791, %v805
  %v808 = vmul.f32 %v794, %v806
  %811 = vrot.lane.b32.xlu0 %v791, 64
  %v812 = vpop.permute.xlu0 %811
  %813 = vrot.lane.b32.xlu0 %v794, 64
  %v814 = vpop.permute.xlu0 %813
  %v817 = vmul.f32 %v807, %v812
  %v818 = vmul.f32 %v808, %v814
  %v819 = vpack.c.bf16 %v818, %v817
  %v820 = vld [vmem:[%s12] sm:$0xf]
  %v821 = vld [vmem:[%s12 + $0x4] sm:$0xf]
  %v822 = vld [vmem:[%s12 + $0x8] sm:$0xf]
  %v823 = vld [vmem:[%s12 + $0xc] sm:$0xf]
  %v824 = vld [vmem:[%s12 + $0x10] sm:$0xf]
  %v825 = vld [vmem:[%s12 + $0x14] sm:$0xf]
  %v826 = vld [vmem:[%s12 + $0x18] sm:$0xf]
  %v827 = vld [vmem:[%s12 + $0x1c] sm:$0xf]
  %v836 = vunpack.c.l.b16 %v820
  %v837 = vunpack.c.l.b16 %v821
  %v838 = vunpack.c.l.b16 %v822
  %v839 = vunpack.c.l.b16 %v823
  %v840 = vunpack.c.l.b16 %v824
  %v841 = vunpack.c.l.b16 %v825
  %v842 = vunpack.c.l.b16 %v826
  %v843 = vunpack.c.l.b16 %v827
  %v844 = vpack.c.b16 %v837, %v836
  %v845 = vpack.c.b16 %v839, %v838
  %v846 = vpack.c.b16 %v841, %v840
  %v847 = vpack.c.b16 %v843, %v842
  %vm852 = vcmask 523264
  %v854 = vsel %vm852, %v819, 0
  %856 = vmatprep.subr.bf16.mxu0 0
  %857 = vmatpush1.bf16.msra.mxu0 %v844
  %858 = vmatprep.subr.bf16.mxu0 0
  %859 = vmatpush1.bf16.msra.mxu0 %v845
  %860 = vmatprep.subr.bf16.mxu0 0
  %861 = vmatpush1.bf16.msra.mxu0 %v846
  %862 = vmatprep.subr.bf16.mxu0 0
  %863 = vmatpush1.bf16.msra.mxu0 %v847
  %864 = vmatprep.subr.bf16.mxu0 0
  %865 = vmatpush1.bf16.msra.mxu0 0
  %866 = vmatprep.subr.bf16.mxu0 0
  %867 = vmatpush1.bf16.msra.mxu0 0
  %868 = vmatprep.subr.bf16.mxu0 0
  %869 = vmatpush1.bf16.msra.mxu0 0
  %870 = vmatprep.subr.bf16.mxu0 0
  %871 = vmatpush1.bf16.msra.mxu0 0
  %872 = vmatprep.subr.bf16.mxu0 0
  %873 = vmatpush1.bf16.msra.mxu0 0
  %874 = vmatprep.subr.bf16.mxu0 0
  %875 = vmatpush1.bf16.msra.mxu0 0
  %876 = vmatprep.subr.bf16.mxu0 0
  %877 = vmatpush1.bf16.msra.mxu0 0
  %878 = vmatprep.subr.bf16.mxu0 0
  %879 = vmatpush1.bf16.msra.mxu0 0
  %880 = vmatprep.subr.bf16.mxu0 0
  %881 = vmatpush1.bf16.msra.mxu0 0
  %882 = vmatprep.subr.bf16.mxu0 0
  %883 = vmatpush1.bf16.msra.mxu0 0
  %884 = vmatprep.subr.bf16.mxu0 0
  %885 = vmatpush1.bf16.msra.mxu0 0
  %886 = vmatprep.subr.bf16.mxu0 0
  %887 = vmatpush1.bf16.msra.mxu0 0
  %888 = vmatprep.mubr.bf16.mxu0 0
  %889 = vmatmul.mubr.bf16.gmra.mrb[0].mxu0 %v854
  %v890 = vpop.f32.mrb[0].mxu0
  %v891 = vadd.f32 0.0, %v890
  %v892 = vpop.f32.mrb[0].mxu0
  %v893 = vpop.f32.mrb[0].mxu0
  %v894 = vadd.f32 0.0, %v893
  %v895 = vpop.f32.mrb[0].mxu0
  %896 = vdwg.mxu0
  %v897 = vadd.f32 %v709, %v891
  %v898 = vadd.f32 %v710, %v894
  %s899 = scalar_lea.vmem %s7, 1
  %v900 = vld [vmem:[%s899] sm:$0x1]
  %v901 = vmul.f32 %v897, %v897
  %v902 = vmul.f32 %v898, %v898
  %v903 = vsel %vm147, %v901, 0.0
  %904 = vadd.xlane.f32.xlu0 %v903
  %v905 = vpop.xlane.xlu0 %904
  %v906 = vsel %vm147, %v902, 0.0
  %907 = vadd.xlane.f32.xlu0 %v906
  %v908 = vpop.xlane.xlu0 %907
  %v909 = vmul.f32 %v905, %v154
  %v910 = vmul.f32 %v908, %v154
  %v911 = vadd.f32 %v909, 1e-06
  %v912 = vadd.f32 %v910, 1e-06
  %v913 = vrsqrt.pop %v911
  %v914 = vrsqrt.pop %v912
  %v915 = vmul.f32 %v897, %v913
  %v916 = vmul.f32 %v898, %v914
  %v918 = vlaneseq
  %v919 = vshrl.u32 %v918, 7
  %v920 = vsub.s32 0, %v919
  %v921 = vrot.slane %v900, %v920
  %v923 = vmul.f32 %v915, %v921
  %v924 = vmul.f32 %v916, %v921
  %v925 = vpack.c.bf16 %v924, %v923
  %s926 = scalar_lea.vmem %s8, 32
  %v927 = vld [vmem:[%s926] sm:$0xff]
  %v928 = vld [vmem:[%s926 + $0x8] sm:$0xff]
  %v929 = vld [vmem:[%s926 + $0x10] sm:$0xff]
  %v930 = vld [vmem:[%s926 + $0x18] sm:$0xff]
  %v935 = vunpack.c.l.b16 %v927
  %v936 = vunpack.c.h.b16 %v927
  %v937 = vunpack.c.l.b16 %v928
  %v938 = vunpack.c.h.b16 %v928
  %v939 = vunpack.c.l.b16 %v929
  %v940 = vunpack.c.h.b16 %v929
  %v941 = vunpack.c.l.b16 %v930
  %v942 = vunpack.c.h.b16 %v930
  %v943 = vpack.c.b16 %v937, %v935
  %v944 = vpack.c.b16 %v938, %v936
  %v945 = vpack.c.b16 %v941, %v939
  %v946 = vpack.c.b16 %v942, %v940
  %v952 = vsel %vm147, %v925, 0
  %954 = vmatprep.subr.bf16.mxu0 %v944
  %955 = vmatpush1.bf16.msra.mxu0 %v943
  %956 = vmatprep.subr.bf16.mxu0 %v946
  %957 = vmatpush1.bf16.msra.mxu0 %v945
  %958 = vmatprep.subr.bf16.mxu0 0
  %959 = vmatpush1.bf16.msra.mxu0 0
  %960 = vmatprep.subr.bf16.mxu0 0
  %961 = vmatpush1.bf16.msra.mxu0 0
  %962 = vmatprep.subr.bf16.mxu0 0
  %963 = vmatpush1.bf16.msra.mxu0 0
  %964 = vmatprep.subr.bf16.mxu0 0
  %965 = vmatpush1.bf16.msra.mxu0 0
  %966 = vmatprep.subr.bf16.mxu0 0
  %967 = vmatpush1.bf16.msra.mxu0 0
  %968 = vmatprep.subr.bf16.mxu0 0
  %969 = vmatpush1.bf16.msra.mxu0 0
  %970 = vmatprep.subr.bf16.mxu0 0
  %971 = vmatpush1.bf16.msra.mxu0 0
  %972 = vmatprep.subr.bf16.mxu0 0
  %973 = vmatpush1.bf16.msra.mxu0 0
  %974 = vmatprep.subr.bf16.mxu0 0
  %975 = vmatpush1.bf16.msra.mxu0 0
  %976 = vmatprep.subr.bf16.mxu0 0
  %977 = vmatpush1.bf16.msra.mxu0 0
  %978 = vmatprep.subr.bf16.mxu0 0
  %979 = vmatpush1.bf16.msra.mxu0 0
  %980 = vmatprep.subr.bf16.mxu0 0
  %981 = vmatpush1.bf16.msra.mxu0 0
  %982 = vmatprep.subr.bf16.mxu0 0
  %983 = vmatpush1.bf16.msra.mxu0 0
  %984 = vmatprep.subr.bf16.mxu0 0
  %985 = vmatpush1.bf16.msra.mxu0 0
  %986 = vmatprep.mubr.bf16.mxu0 0
  %987 = vmatmul.mubr.bf16.gmra.mrb[0].mxu0 %v952
  %v988 = vpop.f32.mrb[0].mxu0
  %v989 = vadd.f32 0.0, %v988
  %v990 = vpop.f32.mrb[0].mxu0
  %v991 = vadd.f32 0.0, %v990
  %v992 = vpop.f32.mrb[0].mxu0
  %v993 = vadd.f32 0.0, %v992
  %v994 = vpop.f32.mrb[0].mxu0
  %v995 = vadd.f32 0.0, %v994
  %996 = vdwg.mxu0
  %v997 = vmul.f32 %v989, %v132
  %v998 = vmul.f32 %v993, %v133
  %v999 = vmul.f32 %v989, %v247
  %v1000 = vmul.f32 %v993, %v249
  %1003 = vrot.lane.b32.xlu0 %v999, 96
  %v1004 = vpop.permute.xlu0 %1003
  %1005 = vrot.lane.b32.xlu0 %v1000, 96
  %v1006 = vpop.permute.xlu0 %1005
  %v1009 = vadd.f32 %v997, %v1004
  %v1010 = vadd.f32 %v998, %v1006
  %v1011 = vmul.f32 %v989, %v267
  %v1012 = vmul.f32 %v993, %v269
  %v1013 = vmul.f32 %v989, %v275
  %v1014 = vmul.f32 %v993, %v277
  %1017 = vrot.lane.b32.xlu0 %v1013, 96
  %v1018 = vpop.permute.xlu0 %1017
  %1019 = vrot.lane.b32.xlu0 %v1014, 96
  %v1020 = vpop.permute.xlu0 %1019
  %v1023 = vadd.f32 %v1011, %v1018
  %v1024 = vadd.f32 %v1012, %v1020
  %v1025 = vpack.c.bf16 %v1009, %v1009
  %v1026 = vmul.f32 %v1023, %v298
  %v1027 = vmul.f32 %v1023, %v300
  %v1028 = vmul.f32 %v1023, %v302
  %v1029 = vmul.f32 %v1023, %v304
  %v1030 = vpack.c.bf16 %v1027, %v1026
  %v1031 = vpack.c.bf16 %v1029, %v1028
  %v1032 = vmul.f32 %v991, %v136
  %v1033 = vmul.f32 %v991, %v137
  %v1034 = vmul.f32 %v991, %v138
  %v1035 = vmul.f32 %v991, %v139
  %v1036 = vpack.c.bf16 %v1033, %v1032
  %v1037 = vpack.c.bf16 %v1035, %v1034
  %1040 = vrot.lane.b32.xlu0 %v1030, 64
  %v1041 = vpop.permute.xlu0 %1040
  %1042 = vrot.lane.b32.xlu0 %v1031, 64
  %v1043 = vpop.permute.xlu0 %1042
  %v1045 = vsel %vm147, %v1025, 0
  %v1048 = vsel %vm147, %v1041, 0
  %v1051 = vsel %vm147, %v1043, 0
  %1053 = vmatprep.subr.bf16.mxu0 0
  %1054 = vmatpush1.bf16.xpose.msra.mxu0 %v1048
  %1055 = vmatprep.subr.bf16.mxu0 0
  %1056 = vmatpush1.bf16.xpose.msra.mxu0 %v1051
  %1057 = vmatprep.subr.bf16.mxu0 0
  %1058 = vmatpush1.bf16.xpose.msra.mxu0 0
  %1059 = vmatprep.subr.bf16.mxu0 0
  %1060 = vmatpush1.bf16.xpose.msra.mxu0 0
  %1061 = vmatprep.subr.bf16.mxu0 0
  %1062 = vmatpush1.bf16.xpose.msra.mxu0 0
  %1063 = vmatprep.subr.bf16.mxu0 0
  %1064 = vmatpush1.bf16.xpose.msra.mxu0 0
  %1065 = vmatprep.subr.bf16.mxu0 0
  %1066 = vmatpush1.bf16.xpose.msra.mxu0 0
  %1067 = vmatprep.subr.bf16.mxu0 0
  %1068 = vmatpush1.bf16.xpose.msra.mxu0 0
  %1069 = vmatprep.subr.bf16.mxu0 0
  %1070 = vmatpush1.bf16.xpose.msra.mxu0 0
  %1071 = vmatprep.subr.bf16.mxu0 0
  %1072 = vmatpush1.bf16.xpose.msra.mxu0 0
  %1073 = vmatprep.subr.bf16.mxu0 0
  %1074 = vmatpush1.bf16.xpose.msra.mxu0 0
  %1075 = vmatprep.subr.bf16.mxu0 0
  %1076 = vmatpush1.bf16.xpose.msra.mxu0 0
  %1077 = vmatprep.subr.bf16.mxu0 0
  %1078 = vmatpush1.bf16.xpose.msra.mxu0 0
  %1079 = vmatprep.subr.bf16.mxu0 0
  %1080 = vmatpush1.bf16.xpose.msra.mxu0 0
  %1081 = vmatprep.subr.bf16.mxu0 0
  %1082 = vmatpush1.bf16.xpose.msra.mxu0 0
  %1083 = vmatprep.subr.bf16.mxu0 0
  %1084 = vmatpush1.bf16.xpose.msra.mxu0 0
  %1085 = vmatprep.mubr.bf16.mxu0 0
  %1086 = vmatmul.mubr.bf16.gmra.mrb[0].mxu0 %v1045
  %v1087 = vpop.f32.mrb[0].mxu0
  %v1088 = vadd.f32 0.0, %v1087
  %v1089 = vpop.f32.mrb[0].mxu0
  %v1090 = vpop.f32.mrb[0].mxu0
  %v1091 = vpop.f32.mrb[0].mxu0
  %1092 = vdwg.mxu0
  %v1093 = vsel %vm147, %v1088, -inf
  %1094 = vmax.xlane.f32.xlu0 %v1093
  %v1095 = vpop.xlane.xlu0 %1094
  %v1096 = vsub.f32 %v1088, %v1095
  %v1097 = vmul.f32 %v1096, 1.442695
  %v1098 = vpow.pop %v1097
  %v1099 = vpack.c.bf16 %v1098, %v1098
  %v1101 = vsel %vm147, %v1099, 0
  %1103 = vmatprep.subr.bf16.mxu0 0
  %1104 = vmatpush1.bf16.msra.mxu0 %v391
  %1105 = vmatprep.subr.bf16.mxu0 0
  %1106 = vmatpush1.bf16.msra.mxu0 %v392
  %1107 = vmatprep.subr.bf16.mxu0 0
  %1108 = vmatpush1.bf16.msra.mxu0 0
  %1109 = vmatprep.subr.bf16.mxu0 0
  %1110 = vmatpush1.bf16.msra.mxu0 0
  %1111 = vmatprep.subr.bf16.mxu0 0
  %1112 = vmatpush1.bf16.msra.mxu0 0
  %1113 = vmatprep.subr.bf16.mxu0 0
  %1114 = vmatpush1.bf16.msra.mxu0 0
  %1115 = vmatprep.subr.bf16.mxu0 0
  %1116 = vmatpush1.bf16.msra.mxu0 0
  %1117 = vmatprep.subr.bf16.mxu0 0
  %1118 = vmatpush1.bf16.msra.mxu0 0
  %1119 = vmatprep.subr.bf16.mxu0 0
  %1120 = vmatpush1.bf16.msra.mxu0 0
  %1121 = vmatprep.subr.bf16.mxu0 0
  %1122 = vmatpush1.bf16.msra.mxu0 0
  %1123 = vmatprep.subr.bf16.mxu0 0
  %1124 = vmatpush1.bf16.msra.mxu0 0
  %1125 = vmatprep.subr.bf16.mxu0 0
  %1126 = vmatpush1.bf16.msra.mxu0 0
  %1127 = vmatprep.subr.bf16.mxu0 0
  %1128 = vmatpush1.bf16.msra.mxu0 0
  %1129 = vmatprep.subr.bf16.mxu0 0
  %1130 = vmatpush1.bf16.msra.mxu0 0
  %1131 = vmatprep.subr.bf16.mxu0 0
  %1132 = vmatpush1.bf16.msra.mxu0 0
  %1133 = vmatprep.subr.bf16.mxu0 0
  %1134 = vmatpush1.bf16.msra.mxu0 0
  %1135 = vmatprep.mubr.bf16.mxu0 0
  %1136 = vmatmul.mubr.bf16.gmra.mrb[0].mxu0 %v1101
  %v1137 = vpop.f32.mrb[0].mxu0
  %v1138 = vadd.f32 0.0, %v1137
  %v1139 = vpop.f32.mrb[0].mxu0
  %v1140 = vpop.f32.mrb[0].mxu0
  %v1141 = vpop.f32.mrb[0].mxu0
  %1142 = vdwg.mxu0
  %v1143 = vrcp.pop %v1138
  %v1144 = vmul.f32 %v1098, %v1143
  %v1145 = vpack.c.bf16 %v1144, %v1144
  %v1147 = vsel %vm147, %v1145, 0
  %1149 = vmatprep.subr.bf16.mxu0 0
  %1150 = vmatpush1.bf16.msra.mxu0 %v1036
  %1151 = vmatprep.subr.bf16.mxu0 0
  %1152 = vmatpush1.bf16.msra.mxu0 %v1037
  %1153 = vmatprep.subr.bf16.mxu0 0
  %1154 = vmatpush1.bf16.msra.mxu0 0
  %1155 = vmatprep.subr.bf16.mxu0 0
  %1156 = vmatpush1.bf16.msra.mxu0 0
  %1157 = vmatprep.subr.bf16.mxu0 0
  %1158 = vmatpush1.bf16.msra.mxu0 0
  %1159 = vmatprep.subr.bf16.mxu0 0
  %1160 = vmatpush1.bf16.msra.mxu0 0
  %1161 = vmatprep.subr.bf16.mxu0 0
  %1162 = vmatpush1.bf16.msra.mxu0 0
  %1163 = vmatprep.subr.bf16.mxu0 0
  %1164 = vmatpush1.bf16.msra.mxu0 0
  %1165 = vmatprep.subr.bf16.mxu0 0
  %1166 = vmatpush1.bf16.msra.mxu0 0
  %1167 = vmatprep.subr.bf16.mxu0 0
  %1168 = vmatpush1.bf16.msra.mxu0 0
  %1169 = vmatprep.subr.bf16.mxu0 0
  %1170 = vmatpush1.bf16.msra.mxu0 0
  %1171 = vmatprep.subr.bf16.mxu0 0
  %1172 = vmatpush1.bf16.msra.mxu0 0
  %1173 = vmatprep.subr.bf16.mxu0 0
  %1174 = vmatpush1.bf16.msra.mxu0 0
  %1175 = vmatprep.subr.bf16.mxu0 0
  %1176 = vmatpush1.bf16.msra.mxu0 0
  %1177 = vmatprep.subr.bf16.mxu0 0
  %1178 = vmatpush1.bf16.msra.mxu0 0
  %1179 = vmatprep.subr.bf16.mxu0 0
  %1180 = vmatpush1.bf16.msra.mxu0 0
  %1181 = vmatprep.mubr.bf16.mxu0 0
  %1182 = vmatmul.mubr.bf16.gmra.mrb[0].mxu0 %v1147
  %v1183 = vpop.f32.mrb[0].mxu0
  %v1184 = vadd.f32 0.0, %v1183
  %v1185 = vpop.f32.mrb[0].mxu0
  %v1186 = vpop.f32.mrb[0].mxu0
  %v1187 = vpop.f32.mrb[0].mxu0
  %1188 = vdwg.mxu0
  %v1189 = vpack.c.bf16 %v1010, %v1010
  %v1190 = vmul.f32 %v1024, %v298
  %v1191 = vmul.f32 %v1024, %v300
  %v1192 = vmul.f32 %v1024, %v302
  %v1193 = vmul.f32 %v1024, %v304
  %v1194 = vpack.c.bf16 %v1191, %v1190
  %v1195 = vpack.c.bf16 %v1193, %v1192
  %v1196 = vmul.f32 %v995, %v136
  %v1197 = vmul.f32 %v995, %v137
  %v1198 = vmul.f32 %v995, %v138
  %v1199 = vmul.f32 %v995, %v139
  %v1200 = vpack.c.bf16 %v1197, %v1196
  %v1201 = vpack.c.bf16 %v1199, %v1198
  %1204 = vrot.lane.b32.xlu0 %v1194, 64
  %v1205 = vpop.permute.xlu0 %1204
  %1206 = vrot.lane.b32.xlu0 %v1195, 64
  %v1207 = vpop.permute.xlu0 %1206
  %v1209 = vsel %vm147, %v1189, 0
  %v1212 = vsel %vm147, %v1205, 0
  %v1215 = vsel %vm147, %v1207, 0
  %1217 = vmatprep.subr.bf16.mxu0 0
  %1218 = vmatpush1.bf16.xpose.msra.mxu0 %v1212
  %1219 = vmatprep.subr.bf16.mxu0 0
  %1220 = vmatpush1.bf16.xpose.msra.mxu0 %v1215
  %1221 = vmatprep.subr.bf16.mxu0 0
  %1222 = vmatpush1.bf16.xpose.msra.mxu0 0
  %1223 = vmatprep.subr.bf16.mxu0 0
  %1224 = vmatpush1.bf16.xpose.msra.mxu0 0
  %1225 = vmatprep.subr.bf16.mxu0 0
  %1226 = vmatpush1.bf16.xpose.msra.mxu0 0
  %1227 = vmatprep.subr.bf16.mxu0 0
  %1228 = vmatpush1.bf16.xpose.msra.mxu0 0
  %1229 = vmatprep.subr.bf16.mxu0 0
  %1230 = vmatpush1.bf16.xpose.msra.mxu0 0
  %1231 = vmatprep.subr.bf16.mxu0 0
  %1232 = vmatpush1.bf16.xpose.msra.mxu0 0
  %1233 = vmatprep.subr.bf16.mxu0 0
  %1234 = vmatpush1.bf16.xpose.msra.mxu0 0
  %1235 = vmatprep.subr.bf16.mxu0 0
  %1236 = vmatpush1.bf16.xpose.msra.mxu0 0
  %1237 = vmatprep.subr.bf16.mxu0 0
  %1238 = vmatpush1.bf16.xpose.msra.mxu0 0
  %1239 = vmatprep.subr.bf16.mxu0 0
  %1240 = vmatpush1.bf16.xpose.msra.mxu0 0
  %1241 = vmatprep.subr.bf16.mxu0 0
  %1242 = vmatpush1.bf16.xpose.msra.mxu0 0
  %1243 = vmatprep.subr.bf16.mxu0 0
  %1244 = vmatpush1.bf16.xpose.msra.mxu0 0
  %1245 = vmatprep.subr.bf16.mxu0 0
  %1246 = vmatpush1.bf16.xpose.msra.mxu0 0
  %1247 = vmatprep.subr.bf16.mxu0 0
  %1248 = vmatpush1.bf16.xpose.msra.mxu0 0
  %1249 = vmatprep.mubr.bf16.mxu0 0
  %1250 = vmatmul.mubr.bf16.gmra.mrb[0].mxu0 %v1209
  %v1251 = vpop.f32.mrb[0].mxu0
  %v1252 = vadd.f32 0.0, %v1251
  %v1253 = vpop.f32.mrb[0].mxu0
  %v1254 = vpop.f32.mrb[0].mxu0
  %v1255 = vpop.f32.mrb[0].mxu0
  %1256 = vdwg.mxu0
  %v1257 = vsel %vm147, %v1252, -inf
  %1258 = vmax.xlane.f32.xlu0 %v1257
  %v1259 = vpop.xlane.xlu0 %1258
  %v1260 = vsub.f32 %v1252, %v1259
  %v1261 = vmul.f32 %v1260, 1.442695
  %v1262 = vpow.pop %v1261
  %v1263 = vpack.c.bf16 %v1262, %v1262
  %v1265 = vsel %vm147, %v1263, 0
  %1267 = vmatprep.subr.bf16.mxu0 0
  %1268 = vmatpush1.bf16.msra.mxu0 %v391
  %1269 = vmatprep.subr.bf16.mxu0 0
  %1270 = vmatpush1.bf16.msra.mxu0 %v392
  %1271 = vmatprep.subr.bf16.mxu0 0
  %1272 = vmatpush1.bf16.msra.mxu0 0
  %1273 = vmatprep.subr.bf16.mxu0 0
  %1274 = vmatpush1.bf16.msra.mxu0 0
  %1275 = vmatprep.subr.bf16.mxu0 0
  %1276 = vmatpush1.bf16.msra.mxu0 0
  %1277 = vmatprep.subr.bf16.mxu0 0
  %1278 = vmatpush1.bf16.msra.mxu0 0
  %1279 = vmatprep.subr.bf16.mxu0 0
  %1280 = vmatpush1.bf16.msra.mxu0 0
  %1281 = vmatprep.subr.bf16.mxu0 0
  %1282 = vmatpush1.bf16.msra.mxu0 0
  %1283 = vmatprep.subr.bf16.mxu0 0
  %1284 = vmatpush1.bf16.msra.mxu0 0
  %1285 = vmatprep.subr.bf16.mxu0 0
  %1286 = vmatpush1.bf16.msra.mxu0 0
  %1287 = vmatprep.subr.bf16.mxu0 0
  %1288 = vmatpush1.bf16.msra.mxu0 0
  %1289 = vmatprep.subr.bf16.mxu0 0
  %1290 = vmatpush1.bf16.msra.mxu0 0
  %1291 = vmatprep.subr.bf16.mxu0 0
  %1292 = vmatpush1.bf16.msra.mxu0 0
  %1293 = vmatprep.subr.bf16.mxu0 0
  %1294 = vmatpush1.bf16.msra.mxu0 0
  %1295 = vmatprep.subr.bf16.mxu0 0
  %1296 = vmatpush1.bf16.msra.mxu0 0
  %1297 = vmatprep.subr.bf16.mxu0 0
  %1298 = vmatpush1.bf16.msra.mxu0 0
  %1299 = vmatprep.mubr.bf16.mxu0 0
  %1300 = vmatmul.mubr.bf16.gmra.mrb[0].mxu0 %v1265
  %v1301 = vpop.f32.mrb[0].mxu0
  %v1302 = vadd.f32 0.0, %v1301
  %v1303 = vpop.f32.mrb[0].mxu0
  %v1304 = vpop.f32.mrb[0].mxu0
  %v1305 = vpop.f32.mrb[0].mxu0
  %1306 = vdwg.mxu0
  %v1307 = vrcp.pop %v1302
  %v1308 = vmul.f32 %v1262, %v1307
  %v1309 = vpack.c.bf16 %v1308, %v1308
  %v1311 = vsel %vm147, %v1309, 0
  %1313 = vmatprep.subr.bf16.mxu0 0
  %1314 = vmatpush1.bf16.msra.mxu0 %v1200
  %1315 = vmatprep.subr.bf16.mxu0 0
  %1316 = vmatpush1.bf16.msra.mxu0 %v1201
  %1317 = vmatprep.subr.bf16.mxu0 0
  %1318 = vmatpush1.bf16.msra.mxu0 0
  %1319 = vmatprep.subr.bf16.mxu0 0
  %1320 = vmatpush1.bf16.msra.mxu0 0
  %1321 = vmatprep.subr.bf16.mxu0 0
  %1322 = vmatpush1.bf16.msra.mxu0 0
  %1323 = vmatprep.subr.bf16.mxu0 0
  %1324 = vmatpush1.bf16.msra.mxu0 0
  %1325 = vmatprep.subr.bf16.mxu0 0
  %1326 = vmatpush1.bf16.msra.mxu0 0
  %1327 = vmatprep.subr.bf16.mxu0 0
  %1328 = vmatpush1.bf16.msra.mxu0 0
  %1329 = vmatprep.subr.bf16.mxu0 0
  %1330 = vmatpush1.bf16.msra.mxu0 0
  %1331 = vmatprep.subr.bf16.mxu0 0
  %1332 = vmatpush1.bf16.msra.mxu0 0
  %1333 = vmatprep.subr.bf16.mxu0 0
  %1334 = vmatpush1.bf16.msra.mxu0 0
  %1335 = vmatprep.subr.bf16.mxu0 0
  %1336 = vmatpush1.bf16.msra.mxu0 0
  %1337 = vmatprep.subr.bf16.mxu0 0
  %1338 = vmatpush1.bf16.msra.mxu0 0
  %1339 = vmatprep.subr.bf16.mxu0 0
  %1340 = vmatpush1.bf16.msra.mxu0 0
  %1341 = vmatprep.subr.bf16.mxu0 0
  %1342 = vmatpush1.bf16.msra.mxu0 0
  %1343 = vmatprep.subr.bf16.mxu0 0
  %1344 = vmatpush1.bf16.msra.mxu0 0
  %1345 = vmatprep.mubr.bf16.mxu0 0
  %1346 = vmatmul.mubr.bf16.gmra.mrb[0].mxu0 %v1311
  %v1347 = vpop.f32.mrb[0].mxu0
  %v1348 = vadd.f32 0.0, %v1347
  %v1349 = vpop.f32.mrb[0].mxu0
  %v1350 = vpop.f32.mrb[0].mxu0
  %v1351 = vpop.f32.mrb[0].mxu0
  %1352 = vdwg.mxu0
  %v1353 = vpack.c.bf16 %v1348, %v1184
  %s1354 = scalar_lea.vmem %s9, 16
  %v1355 = vld [vmem:[%s1354] sm:$0xf]
  %v1356 = vld [vmem:[%s1354 + $0x4] sm:$0xf]
  %v1357 = vld [vmem:[%s1354 + $0x8] sm:$0xf]
  %v1358 = vld [vmem:[%s1354 + $0xc] sm:$0xf]
  %v1363 = vunpack.c.l.b16 %v1355
  %v1364 = vunpack.c.l.b16 %v1356
  %v1365 = vunpack.c.l.b16 %v1357
  %v1366 = vunpack.c.l.b16 %v1358
  %v1367 = vpack.c.b16 %v1364, %v1363
  %v1368 = vpack.c.b16 %v1366, %v1365
  %v1372 = vsel %vm147, %v1353, 0
  %1374 = vmatprep.subr.bf16.mxu0 0
  %1375 = vmatpush1.bf16.msra.mxu0 %v1367
  %1376 = vmatprep.subr.bf16.mxu0 0
  %1377 = vmatpush1.bf16.msra.mxu0 %v1368
  %1378 = vmatprep.subr.bf16.mxu0 0
  %1379 = vmatpush1.bf16.msra.mxu0 0
  %1380 = vmatprep.subr.bf16.mxu0 0
  %1381 = vmatpush1.bf16.msra.mxu0 0
  %1382 = vmatprep.subr.bf16.mxu0 0
  %1383 = vmatpush1.bf16.msra.mxu0 0
  %1384 = vmatprep.subr.bf16.mxu0 0
  %1385 = vmatpush1.bf16.msra.mxu0 0
  %1386 = vmatprep.subr.bf16.mxu0 0
  %1387 = vmatpush1.bf16.msra.mxu0 0
  %1388 = vmatprep.subr.bf16.mxu0 0
  %1389 = vmatpush1.bf16.msra.mxu0 0
  %1390 = vmatprep.subr.bf16.mxu0 0
  %1391 = vmatpush1.bf16.msra.mxu0 0
  %1392 = vmatprep.subr.bf16.mxu0 0
  %1393 = vmatpush1.bf16.msra.mxu0 0
  %1394 = vmatprep.subr.bf16.mxu0 0
  %1395 = vmatpush1.bf16.msra.mxu0 0
  %1396 = vmatprep.subr.bf16.mxu0 0
  %1397 = vmatpush1.bf16.msra.mxu0 0
  %1398 = vmatprep.subr.bf16.mxu0 0
  %1399 = vmatpush1.bf16.msra.mxu0 0
  %1400 = vmatprep.subr.bf16.mxu0 0
  %1401 = vmatpush1.bf16.msra.mxu0 0
  %1402 = vmatprep.subr.bf16.mxu0 0
  %1403 = vmatpush1.bf16.msra.mxu0 0
  %1404 = vmatprep.subr.bf16.mxu0 0
  %1405 = vmatpush1.bf16.msra.mxu0 0
  %1406 = vmatprep.mubr.bf16.mxu0 0
  %1407 = vmatmul.mubr.bf16.gmra.mrb[0].mxu0 %v1372
  %v1408 = vpop.f32.mrb[0].mxu0
  %v1409 = vadd.f32 0.0, %v1408
  %v1410 = vpop.f32.mrb[0].mxu0
  %v1411 = vpop.f32.mrb[0].mxu0
  %v1412 = vadd.f32 0.0, %v1411
  %v1413 = vpop.f32.mrb[0].mxu0
  %1414 = vdwg.mxu0
  %v1415 = vadd.f32 %v897, %v1409
  %v1416 = vadd.f32 %v898, %v1412
  %s1417 = scalar_lea.vmem %s10, 1
  %v1418 = vld [vmem:[%s1417] sm:$0x1]
  %v1419 = vmul.f32 %v1415, %v1415
  %v1420 = vmul.f32 %v1416, %v1416
  %v1421 = vsel %vm147, %v1419, 0.0
  %1422 = vadd.xlane.f32.xlu0 %v1421
  %v1423 = vpop.xlane.xlu0 %1422
  %v1424 = vsel %vm147, %v1420, 0.0
  %1425 = vadd.xlane.f32.xlu0 %v1424
  %v1426 = vpop.xlane.xlu0 %1425
  %v1427 = vmul.f32 %v1423, %v154
  %v1428 = vmul.f32 %v1426, %v154
  %v1429 = vadd.f32 %v1427, 1e-06
  %v1430 = vadd.f32 %v1428, 1e-06
  %v1431 = vrsqrt.pop %v1429
  %v1432 = vrsqrt.pop %v1430
  %v1433 = vmul.f32 %v1415, %v1431
  %v1434 = vmul.f32 %v1416, %v1432
  %v1436 = vlaneseq
  %v1437 = vshrl.u32 %v1436, 7
  %v1438 = vsub.s32 0, %v1437
  %v1439 = vrot.slane %v1418, %v1438
  %v1441 = vmul.f32 %v1433, %v1439
  %v1442 = vmul.f32 %v1434, %v1439
  %v1443 = vpack.c.bf16 %v1442, %v1441
  %s1444 = scalar_lea.vmem %s11, 16
  %v1445 = vld [vmem:[%s1444] sm:$0xf]
  %v1446 = vld [vmem:[%s1444 + $0x4] sm:$0xf]
  %v1447 = vld [vmem:[%s1444 + $0x8] sm:$0xf]
  %v1448 = vld [vmem:[%s1444 + $0xc] sm:$0xf]
  %v1453 = vunpack.c.l.b16 %v1445
  %v1454 = vunpack.c.l.b16 %v1446
  %v1455 = vunpack.c.l.b16 %v1447
  %v1456 = vunpack.c.l.b16 %v1448
  %v1457 = vpack.c.b16 %v1454, %v1453
  %v1458 = vpack.c.b16 %v1456, %v1455
  %v1462 = vsel %vm147, %v1443, 0
  %1464 = vmatprep.subr.bf16.mxu0 0
  %1465 = vmatpush1.bf16.msra.mxu0 %v1457
  %1466 = vmatprep.subr.bf16.mxu0 0
  %1467 = vmatpush1.bf16.msra.mxu0 %v1458
  %1468 = vmatprep.subr.bf16.mxu0 0
  %1469 = vmatpush1.bf16.msra.mxu0 0
  %1470 = vmatprep.subr.bf16.mxu0 0
  %1471 = vmatpush1.bf16.msra.mxu0 0
  %1472 = vmatprep.subr.bf16.mxu0 0
  %1473 = vmatpush1.bf16.msra.mxu0 0
  %1474 = vmatprep.subr.bf16.mxu0 0
  %1475 = vmatpush1.bf16.msra.mxu0 0
  %1476 = vmatprep.subr.bf16.mxu0 0
  %1477 = vmatpush1.bf16.msra.mxu0 0
  %1478 = vmatprep.subr.bf16.mxu0 0
  %1479 = vmatpush1.bf16.msra.mxu0 0
  %1480 = vmatprep.subr.bf16.mxu0 0
  %1481 = vmatpush1.bf16.msra.mxu0 0
  %1482 = vmatprep.subr.bf16.mxu0 0
  %1483 = vmatpush1.bf16.msra.mxu0 0
  %1484 = vmatprep.subr.bf16.mxu0 0
  %1485 = vmatpush1.bf16.msra.mxu0 0
  %1486 = vmatprep.subr.bf16.mxu0 0
  %1487 = vmatpush1.bf16.msra.mxu0 0
  %1488 = vmatprep.subr.bf16.mxu0 0
  %1489 = vmatpush1.bf16.msra.mxu0 0
  %1490 = vmatprep.subr.bf16.mxu0 0
  %1491 = vmatpush1.bf16.msra.mxu0 0
  %1492 = vmatprep.subr.bf16.mxu0 0
  %1493 = vmatpush1.bf16.msra.mxu0 0
  %1494 = vmatprep.subr.bf16.mxu0 0
  %1495 = vmatpush1.bf16.msra.mxu0 0
  %1496 = vmatprep.mubr.bf16.mxu0 0
  %1497 = vmatmul.mubr.bf16.gmra.mrb[0].mxu0 %v1462
  %v1498 = vpop.f32.mrb[0].mxu0
  %v1499 = vadd.f32 0.0, %v1498
  %v1500 = vpop.f32.mrb[0].mxu0
  %v1501 = vpop.f32.mrb[0].mxu0
  %v1502 = vadd.f32 0.0, %v1501
  %v1503 = vpop.f32.mrb[0].mxu0
  %1504 = vdwg.mxu0
  %v1505 = vsub.f32 0.0, %v1499
  %v1506 = vsub.f32 0.0, %v1502
  %v1507 = vmul.f32 %v1505, 1.442695
  %v1508 = vpow.pop %v1507
  %v1509 = vmul.f32 %v1506, 1.442695
  %v1510 = vpow.pop %v1509
  %v1511 = vadd.f32 %v1508, 1.0
  %v1512 = vadd.f32 %v1510, 1.0
  %v1513 = vrcp.pop %v1511
  %v1514 = vrcp.pop %v1512
  %v1515 = vmul.f32 %v1499, %v1513
  %v1516 = vmul.f32 %v1502, %v1514
  %1519 = vrot.lane.b32.xlu0 %v1499, 64
  %v1520 = vpop.permute.xlu0 %1519
  %1521 = vrot.lane.b32.xlu0 %v1502, 64
  %v1522 = vpop.permute.xlu0 %1521
  %v1525 = vmul.f32 %v1515, %v1520
  %v1526 = vmul.f32 %v1516, %v1522
  %v1527 = vpack.c.bf16 %v1526, %v1525
  %s1528 = scalar_lea.vmem %s12, 32
  %v1529 = vld [vmem:[%s1528] sm:$0xf]
  %v1530 = vld [vmem:[%s1528 + $0x4] sm:$0xf]
  %v1531 = vld [vmem:[%s1528 + $0x8] sm:$0xf]
  %v1532 = vld [vmem:[%s1528 + $0xc] sm:$0xf]
  %v1533 = vld [vmem:[%s1528 + $0x10] sm:$0xf]
  %v1534 = vld [vmem:[%s1528 + $0x14] sm:$0xf]
  %v1535 = vld [vmem:[%s1528 + $0x18] sm:$0xf]
  %v1536 = vld [vmem:[%s1528 + $0x1c] sm:$0xf]
  %v1545 = vunpack.c.l.b16 %v1529
  %v1546 = vunpack.c.l.b16 %v1530
  %v1547 = vunpack.c.l.b16 %v1531
  %v1548 = vunpack.c.l.b16 %v1532
  %v1549 = vunpack.c.l.b16 %v1533
  %v1550 = vunpack.c.l.b16 %v1534
  %v1551 = vunpack.c.l.b16 %v1535
  %v1552 = vunpack.c.l.b16 %v1536
  %v1553 = vpack.c.b16 %v1546, %v1545
  %v1554 = vpack.c.b16 %v1548, %v1547
  %v1555 = vpack.c.b16 %v1550, %v1549
  %v1556 = vpack.c.b16 %v1552, %v1551
  %v1562 = vsel %vm852, %v1527, 0
  %1564 = vmatprep.subr.bf16.mxu0 0
  %1565 = vmatpush1.bf16.msra.mxu0 %v1553
  %1566 = vmatprep.subr.bf16.mxu0 0
  %1567 = vmatpush1.bf16.msra.mxu0 %v1554
  %1568 = vmatprep.subr.bf16.mxu0 0
  %1569 = vmatpush1.bf16.msra.mxu0 %v1555
  %1570 = vmatprep.subr.bf16.mxu0 0
  %1571 = vmatpush1.bf16.msra.mxu0 %v1556
  %1572 = vmatprep.subr.bf16.mxu0 0
  %1573 = vmatpush1.bf16.msra.mxu0 0
  %1574 = vmatprep.subr.bf16.mxu0 0
  %1575 = vmatpush1.bf16.msra.mxu0 0
  %1576 = vmatprep.subr.bf16.mxu0 0
  %1577 = vmatpush1.bf16.msra.mxu0 0
  %1578 = vmatprep.subr.bf16.mxu0 0
  %1579 = vmatpush1.bf16.msra.mxu0 0
  %1580 = vmatprep.subr.bf16.mxu0 0
  %1581 = vmatpush1.bf16.msra.mxu0 0
  %1582 = vmatprep.subr.bf16.mxu0 0
  %1583 = vmatpush1.bf16.msra.mxu0 0
  %1584 = vmatprep.subr.bf16.mxu0 0
  %1585 = vmatpush1.bf16.msra.mxu0 0
  %1586 = vmatprep.subr.bf16.mxu0 0
  %1587 = vmatpush1.bf16.msra.mxu0 0
  %1588 = vmatprep.subr.bf16.mxu0 0
  %1589 = vmatpush1.bf16.msra.mxu0 0
  %1590 = vmatprep.subr.bf16.mxu0 0
  %1591 = vmatpush1.bf16.msra.mxu0 0
  %1592 = vmatprep.subr.bf16.mxu0 0
  %1593 = vmatpush1.bf16.msra.mxu0 0
  %1594 = vmatprep.subr.bf16.mxu0 0
  %1595 = vmatpush1.bf16.msra.mxu0 0
  %1596 = vmatprep.mubr.bf16.mxu0 0
  %1597 = vmatmul.mubr.bf16.gmra.mrb[0].mxu0 %v1562
  %v1598 = vpop.f32.mrb[0].mxu0
  %v1599 = vadd.f32 0.0, %v1598
  %v1600 = vpop.f32.mrb[0].mxu0
  %v1601 = vpop.f32.mrb[0].mxu0
  %v1602 = vadd.f32 0.0, %v1601
  %v1603 = vpop.f32.mrb[0].mxu0
  %1604 = vdwg.mxu0
  %v1605 = vadd.f32 %v1415, %v1599
  %v1606 = vadd.f32 %v1416, %v1602
  %v1607 = vld [vmem:[%s13] sm:$0x1]
  %v1608 = vmul.f32 %v1605, %v1605
  %v1609 = vmul.f32 %v1606, %v1606
  %v1610 = vsel %vm147, %v1608, 0.0
  %1611 = vadd.xlane.f32.xlu0 %v1610
  %v1612 = vpop.xlane.xlu0 %1611
  %v1613 = vsel %vm147, %v1609, 0.0
  %1614 = vadd.xlane.f32.xlu0 %v1613
  %v1615 = vpop.xlane.xlu0 %1614
  %v1616 = vmul.f32 %v1612, %v154
  %v1617 = vmul.f32 %v1615, %v154
  %v1618 = vadd.f32 %v1616, 1e-06
  %v1619 = vadd.f32 %v1617, 1e-06
  %v1620 = vrsqrt.pop %v1618
  %v1621 = vrsqrt.pop %v1619
  %v1622 = vmul.f32 %v1605, %v1620
  %v1623 = vmul.f32 %v1606, %v1621
  %v1625 = vlaneseq
  %v1626 = vshrl.u32 %v1625, 7
  %v1627 = vsub.s32 0, %v1626
  %v1628 = vrot.slane %v1607, %v1627
  %v1630 = vmul.f32 %v1622, %v1628
  %v1631 = vmul.f32 %v1623, %v1628
  %v1632 = vpack.c.bf16 %v1631, %v1630
  %v1633 = vld [vmem:[%s14] sm:$0xf]
  %v1634 = vld [vmem:[%s14 + $0x4] sm:$0xf]
  %v1635 = vld [vmem:[%s14 + $0x8] sm:$0xf]
  %v1636 = vld [vmem:[%s14 + $0xc] sm:$0xf]
  %v1637 = vld [vmem:[%s15] sm:$0x1]
  %v1639 = vlaneseq
  %v1640 = vshrl.u32 %v1639, 7
  %v1641 = vsub.s32 0, %v1640
  %v1642 = vrot.slane %v1637, %v1641
  %v1648 = vunpack.c.l.b16 %v1633
  %v1649 = vunpack.c.l.b16 %v1634
  %v1650 = vunpack.c.l.b16 %v1635
  %v1651 = vunpack.c.l.b16 %v1636
  %v1652 = vpack.c.b16 %v1649, %v1648
  %v1653 = vpack.c.b16 %v1651, %v1650
  %v1657 = vsel %vm147, %v1632, 0
  %1659 = vmatprep.subr.bf16.mxu0 0
  %1660 = vmatpush1.bf16.msra.mxu0 %v1652
  %1661 = vmatprep.subr.bf16.mxu0 0
  %1662 = vmatpush1.bf16.msra.mxu0 %v1653
  %1663 = vmatprep.subr.bf16.mxu0 0
  %1664 = vmatpush1.bf16.msra.mxu0 0
  %1665 = vmatprep.subr.bf16.mxu0 0
  %1666 = vmatpush1.bf16.msra.mxu0 0
  %1667 = vmatprep.subr.bf16.mxu0 0
  %1668 = vmatpush1.bf16.msra.mxu0 0
  %1669 = vmatprep.subr.bf16.mxu0 0
  %1670 = vmatpush1.bf16.msra.mxu0 0
  %1671 = vmatprep.subr.bf16.mxu0 0
  %1672 = vmatpush1.bf16.msra.mxu0 0
  %1673 = vmatprep.subr.bf16.mxu0 0
  %1674 = vmatpush1.bf16.msra.mxu0 0
  %1675 = vmatprep.subr.bf16.mxu0 0
  %1676 = vmatpush1.bf16.msra.mxu0 0
  %1677 = vmatprep.subr.bf16.mxu0 0
  %1678 = vmatpush1.bf16.msra.mxu0 0
  %1679 = vmatprep.subr.bf16.mxu0 0
  %1680 = vmatpush1.bf16.msra.mxu0 0
  %1681 = vmatprep.subr.bf16.mxu0 0
  %1682 = vmatpush1.bf16.msra.mxu0 0
  %1683 = vmatprep.subr.bf16.mxu0 0
  %1684 = vmatpush1.bf16.msra.mxu0 0
  %1685 = vmatprep.subr.bf16.mxu0 0
  %1686 = vmatpush1.bf16.msra.mxu0 0
  %1687 = vmatprep.subr.bf16.mxu0 0
  %1688 = vmatpush1.bf16.msra.mxu0 0
  %1689 = vmatprep.subr.bf16.mxu0 0
  %1690 = vmatpush1.bf16.msra.mxu0 0
  %1691 = vmatprep.mubr.bf16.mxu0 0
  %1692 = vmatmul.mubr.bf16.gmra.mrb[0].mxu0 %v1657
  %v1693 = vpop.f32.mrb[0].mxu0
  %v1694 = vadd.f32 %v1642, %v1693
  %v1695 = vpop.f32.mrb[0].mxu0
  %v1696 = vpop.f32.mrb[0].mxu0
  %v1697 = vadd.f32 %v1642, %v1696
  %v1698 = vpop.f32.mrb[0].mxu0
  %1699 = vdwg.mxu0
  %1700 = vst [vmem:[%s16] sm:$0xff] %v1694
  %1701 = vst [vmem:[%s16 + $0x8] sm:$0xff] %v1697
  // Predicated region
  $region66: #{llama_encoder_forward.1} parent=0 // pred_check
    _
  $region67: #{llama_encoder_forward.1} parent=0 // pred_check_branch
    %1703 = sbr.rel (0) target = $region69
  $region68: #{llama_encoder_forward.1} parent=0 // pred_region
    _
  $region69: #{llama_encoder_forward.1} parent=0 // pred_fallthru
    _
  // Predicated region
  $region70: #{llama_encoder_forward.1} parent=0 // pred_check
    _
  $region71: #{llama_encoder_forward.1} parent=0 // pred_check_branch
    %1705 = sbr.rel (0) target = $region73
  $region72: #{llama_encoder_forward.1} parent=0 // pred_region
    _
  $region73: #{llama_encoder_forward.1} parent=0 // pred_fallthru
    _

// kernel: tile.13
$region0: #{tile.13}
  #allocation0 [shape = 's32[1]{0}', space=sflag, size = 0x4, scoped, tag = 'scoped memory for tile.13']
  %s0 = inlined_call_operand.vmem [shape: f32[8,8], index: 0, kind: input, shape index: {}]
  %s1 = inlined_call_operand.vmem [shape: f32[2,8,4,8], index: 1, kind: output, shape index: {}]
  // Predicated region
  $region2: #{tile.13} parent=0 // pred_check
    _
  $region3: #{tile.13} parent=0 // pred_check_branch
    %3 = sbr.rel (0) target = $region5
  $region4: #{tile.13} parent=0 // pred_region
    _
  $region5: #{tile.13} parent=0 // pred_fallthru
    _
  %v4 = vld [vmem:[%s0] ss:$0 sm:$0xff]
  %5 = vst [vmem:[%s1] sm:$0xf] %v4
  %s6 = scalar_lea.vmem %s1, 32
  %7 = vst [vmem:[%s6] sm:$0xf] %v4
  %s8 = scalar_lea.vmem %s0, 1
  %v9 = vld [vmem:[%s8] ss:$0 sm:$0xff]
  %s10 = scalar_lea.vmem %s1, 4
  %11 = vst [vmem:[%s10] sm:$0xf] %v9
  %s12 = scalar_lea.vmem %s1, 36
  %13 = vst [vmem:[%s12] sm:$0xf] %v9
  %s14 = scalar_lea.vmem %s0, 2
  %v15 = vld [vmem:[%s14] ss:$0 sm:$0xff]
  %s16 = scalar_lea.vmem %s1, 8
  %17 = vst [vmem:[%s16] sm:$0xf] %v15
  %s18 = scalar_lea.vmem %s1, 40
  %19 = vst [vmem:[%s18] sm:$0xf] %v15
  %s20 = scalar_lea.vmem %s0, 3
  %v21 = vld [vmem:[%s20] ss:$0 sm:$0xff]
  %s22 = scalar_lea.vmem %s1, 12
  %23 = vst [vmem:[%s22] sm:$0xf] %v21
  %s24 = scalar_lea.vmem %s1, 44
  %25 = vst [vmem:[%s24] sm:$0xf] %v21
  %s26 = scalar_lea.vmem %s0, 4
  %v27 = vld [vmem:[%s26] ss:$0 sm:$0xff]
  %s28 = scalar_lea.vmem %s1, 16
  %29 = vst [vmem:[%s28] sm:$0xf] %v27
  %s30 = scalar_lea.vmem %s1, 48
  %31 = vst [vmem:[%s30] sm:$0xf] %v27
  %s32 = scalar_lea.vmem %s0, 5
  %v33 = vld [vmem:[%s32] ss:$0 sm:$0xff]
  %s34 = scalar_lea.vmem %s1, 20
  %35 = vst [vmem:[%s34] sm:$0xf] %v33
  %s36 = scalar_lea.vmem %s1, 52
  %37 = vst [vmem:[%s36] sm:$0xf] %v33
  %s38 = scalar_lea.vmem %s0, 6
  %v39 = vld [vmem:[%s38] ss:$0 sm:$0xff]
  %s40 = scalar_lea.vmem %s1, 24
  %41 = vst [vmem:[%s40] sm:$0xf] %v39
  %s42 = scalar_lea.vmem %s1, 56
  %43 = vst [vmem:[%s42] sm:$0xf] %v39
  %s44 = scalar_lea.vmem %s0, 7
  %v45 = vld [vmem:[%s44] ss:$0 sm:$0xff]
  %s46 = scalar_lea.vmem %s1, 28
  %47 = vst [vmem:[%s46] sm:$0xf] %v45
  %s48 = scalar_lea.vmem %s1, 60
  %49 = vst [vmem:[%s48] sm:$0xf] %v45

// kernel: tile.14
$region0: #{tile.14}
  %s0 = inlined_call_operand.vmem [shape: f32[2,8,4,8], index: 0, kind: input, shape index: {}]
  %s1 = inlined_call_operand.vmem [shape: f32[16,32], index: 1, kind: output, shape index: {}]
  $region1: #{tile.14} parent=0
    #allocation0 [shape = 'u8[65536]{0}', space=vmem, size = 0x10000, scoped, tag = 'scoped mem for input reshape']
    %s3 = sshllo.u32 0, 4
    %s4 = smul.addr 4, 15
    %s5 = scalar_lea.vmem %s0, %s4
    %v6 = vld [vmem:[%s5] sm:%s3]
    %s7 = scalar_lea.vmem [#allocation0], 120
    %8 = vst [vmem:[%s7] sm:%s3] %v6
    %s9 = smul.addr 4, 14
    %s10 = scalar_lea.vmem %s0, %s9
    %v11 = vld [vmem:[%s10] sm:%s3]
    %s12 = scalar_lea.vmem [#allocation0], 112
    %13 = vst [vmem:[%s12] sm:%s3] %v11
    %s14 = smul.addr 4, 13
    %s15 = scalar_lea.vmem %s0, %s14
    %v16 = vld [vmem:[%s15] sm:%s3]
    %s17 = scalar_lea.vmem [#allocation0], 104
    %18 = vst [vmem:[%s17] sm:%s3] %v16
    %s19 = smul.addr 4, 12
    %s20 = scalar_lea.vmem %s0, %s19
    %v21 = vld [vmem:[%s20] sm:%s3]
    %s22 = scalar_lea.vmem [#allocation0], 96
    %23 = vst [vmem:[%s22] sm:%s3] %v21
    %s24 = smul.addr 4, 11
    %s25 = scalar_lea.vmem %s0, %s24
    %v26 = vld [vmem:[%s25] sm:%s3]
    %s27 = scalar_lea.vmem [#allocation0], 88
    %28 = vst [vmem:[%s27] sm:%s3] %v26
    %s29 = smul.addr 4, 10
    %s30 = scalar_lea.vmem %s0, %s29
    %v31 = vld [vmem:[%s30] sm:%s3]
    %s32 = scalar_lea.vmem [#allocation0], 80
    %33 = vst [vmem:[%s32] sm:%s3] %v31
    %s34 = smul.addr 4, 9
    %s35 = scalar_lea.vmem %s0, %s34
    %v36 = vld [vmem:[%s35] sm:%s3]
    %s37 = scalar_lea.vmem [#allocation0], 72
    %38 = vst [vmem:[%s37] sm:%s3] %v36
    %s39 = smul.addr 4, 8
    %s40 = scalar_lea.vmem %s0, %s39
    %v41 = vld [vmem:[%s40] sm:%s3]
    %s42 = scalar_lea.vmem [#allocation0], 64
    %43 = vst [vmem:[%s42] sm:%s3] %v41
    %s44 = smul.addr 4, 7
    %s45 = scalar_lea.vmem %s0, %s44
    %v46 = vld [vmem:[%s45] sm:%s3]
    %s47 = scalar_lea.vmem [#allocation0], 56
    %48 = vst [vmem:[%s47] sm:%s3] %v46
    %s49 = smul.addr 4, 6
    %s50 = scalar_lea.vmem %s0, %s49
    %v51 = vld [vmem:[%s50] sm:%s3]
    %s52 = scalar_lea.vmem [#allocation0], 48
    %53 = vst [vmem:[%s52] sm:%s3] %v51
    %s54 = smul.addr 4, 5
    %s55 = scalar_lea.vmem %s0, %s54
    %v56 = vld [vmem:[%s55] sm:%s3]
    %s57 = scalar_lea.vmem [#allocation0], 40
    %58 = vst [vmem:[%s57] sm:%s3] %v56
    %s59 = smul.addr 4, 4
    %s60 = scalar_lea.vmem %s0, %s59
    %v61 = vld [vmem:[%s60] sm:%s3]
    %s62 = scalar_lea.vmem [#allocation0], 32
    %63 = vst [vmem:[%s62] sm:%s3] %v61
    %s64 = smul.addr 4, 3
    %s65 = scalar_lea.vmem %s0, %s64
    %v66 = vld [vmem:[%s65] sm:%s3]
    %s67 = scalar_lea.vmem [#allocation0], 24
    %68 = vst [vmem:[%s67] sm:%s3] %v66
    %s69 = smul.addr 4, 2
    %s70 = scalar_lea.vmem %s0, %s69
    %v71 = vld [vmem:[%s70] sm:%s3]
    %s72 = scalar_lea.vmem [#allocation0], 16
    %73 = vst [vmem:[%s72] sm:%s3] %v71
    %s74 = scalar_lea.vmem %s0, 4
    %v75 = vld [vmem:[%s74] sm:%s3]
    %s76 = scalar_lea.vmem [#allocation0], 8
    %77 = vst [vmem:[%s76] sm:%s3] %v75
    %v78 = vld [vmem:[%s0] sm:%s3]
    %79 = vst [vmem:[#allocation0] sm:%s3] %v78
    %v80 = vld [vmem:[#allocation0] ss:$8 sm:$0xf]
    %v81 = vld [vmem:[#allocation0] ss:$8 sm:$0xf0]
    %vm82 = vcmask 1047556
    %v83 = vsel %vm82, %v81, %v80
    %vm84 = vcmask 64512
    %85 = vst.msk [vmem:[%s1] sm:$0xff] %vm84, %v83
    %s86 = scalar_lea.vmem [#allocation0], 64
    %v87 = vld [vmem:[%s86] ss:$8 sm:$0xf]
    %s88 = scalar_lea.vmem [#allocation0], 64
    %v89 = vld [vmem:[%s88] ss:$8 sm:$0xf0]
    %vm90 = vcmask 1047556
    %v91 = vsel %vm90, %v89, %v87
    %vm92 = vcmask 64512
    %s93 = scalar_lea.vmem %s1, 8
    %94 = vst.msk [vmem:[%s93] sm:$0xff] %vm92, %v91
    %s95 = scalar_lea.vmem [#allocation0], 3
    %v96 = vld [vmem:[%s95] ss:$8 sm:$0xf]
    %s97 = scalar_lea.vmem [#allocation0], 3
    %v98 = vld [vmem:[%s97] ss:$8 sm:$0xf0]
    %vm99 = vcmask 1047556
    %v100 = vsel %vm99, %v98, %v96
    %101 = vrot.lane.b32.xlu0 %v100, 24
    %v102 = vpop.permute.xlu0 %101
    %vm103 = vcmask 261312
    %104 = vst.msk [vmem:[%s1] sm:$0xff] %vm103, %v102
    %s105 = scalar_lea.vmem [#allocation0], 67
    %v106 = vld [vmem:[%s105] ss:$8 sm:$0xf]
    %s107 = scalar_lea.vmem [#allocation0], 67
    %v108 = vld [vmem:[%s107] ss:$8 sm:$0xf0]
    %vm109 = vcmask 1047556
    %v110 = vsel %vm109, %v108, %v106
    %111 = vrot.lane.b32.xlu0 %v110, 24
    %v112 = vpop.permute.xlu0 %111
    %vm113 = vcmask 261312
    %s114 = scalar_lea.vmem %s1, 8
    %115 = vst.msk [vmem:[%s114] sm:$0xff] %vm113, %v112
    %s116 = scalar_lea.vmem [#allocation0], 2
    %v117 = vld [vmem:[%s116] ss:$8 sm:$0xf]
    %s118 = scalar_lea.vmem [#allocation0], 2
    %v119 = vld [vmem:[%s118] ss:$8 sm:$0xf0]
    %vm120 = vcmask 1047556
    %v121 = vsel %vm120, %v119, %v117
    %122 = vrot.lane.b32.xlu0 %v121, 16
    %v123 = vpop.permute.xlu0 %122
    %vm124 = vcmask 195712
    %125 = vst.msk [vmem:[%s1] sm:$0xff] %vm124, %v123
    %s126 = scalar_lea.vmem [#allocation0], 66
    %v127 = vld [vmem:[%s126] ss:$8 sm:$0xf]
    %s128 = scalar_lea.vmem [#allocation0], 66
    %v129 = vld [vmem:[%s128] ss:$8 sm:$0xf0]
    %vm130 = vcmask 1047556
    %v131 = vsel %vm130, %v129, %v127
    %132 = vrot.lane.b32.xlu0 %v131, 16
    %v133 = vpop.permute.xlu0 %132
    %vm134 = vcmask 195712
    %s135 = scalar_lea.vmem %s1, 8
    %136 = vst.msk [vmem:[%s135] sm:$0xff] %vm134, %v133
    %s137 = scalar_lea.vmem [#allocation0], 1
    %v138 = vld [vmem:[%s137] ss:$8 sm:$0xf]
    %s139 = scalar_lea.vmem [#allocation0], 1
    %v140 = vld [vmem:[%s139] ss:$8 sm:$0xf0]
    %vm141 = vcmask 1047556
    %v142 = vsel %vm141, %v140, %v138
    %143 = vrot.lane.b32.xlu0 %v142, 8
    %v144 = vpop.permute.xlu0 %143
    %vm145 = vcmask 130112
    %146 = vst.msk [vmem:[%s1] sm:$0xff] %vm145, %v144
    %s147 = scalar_lea.vmem [#allocation0], 65
    %v148 = vld [vmem:[%s147] ss:$8 sm:$0xf]
    %s149 = scalar_lea.vmem [#allocation0], 65
    %v150 = vld [vmem:[%s149] ss:$8 sm:$0xf0]
    %vm151 = vcmask 1047556
    %v152 = vsel %vm151, %v150, %v148
    %153 = vrot.lane.b32.xlu0 %v152, 8
    %v154 = vpop.permute.xlu0 %153
    %vm155 = vcmask 130112
    %s156 = scalar_lea.vmem %s1, 8
    %157 = vst.msk [vmem:[%s156] sm:$0xff] %vm155, %v154

// kernel: eq.15
$region0: #{eq.15}
  %s0 = inlined_call_operand.vmem [shape: s32[4,8], index: 0, kind: input, shape index: {}]
  %s1 = inlined_call_operand.vmem [shape: s32[32], index: 1, kind: output, shape index: {}]
  $region1: #{eq.15} parent=0
    #allocation0 [shape = 'u8[4096]{0}', space=vmem, size = 0x1000, scoped, tag = 'scoped mem for output reshape']
    #allocation1 [shape = 'u8[4096]{0}', space=vmem, size = 0x1000, scoped, tag = 'scoped mem for input reshape']
    %s3 = sshllo.u32 0, 4
    %v4 = vld [vmem:[%s0] sm:%s3]
    %5 = vst [vmem:[#allocation1] sm:%s3] %v4
    %v6 = vld [vmem:[#allocation1] sm:$0x1]
    %vm7 = vcmask 64512
    %8 = vst.msk [vmem:[#allocation0] sm:$0x1] %vm7, %v6
    %s9 = scalar_lea.vmem [#allocation1], 3
    %v10 = vld [vmem:[%s9] sm:$0x1]
    %11 = vrot.lane.b32.xlu0 %v10, 24
    %v12 = vpop.permute.xlu0 %11
    %vm13 = vcmask 261312
    %14 = vst.msk [vmem:[#allocation0] sm:$0x1] %vm13, %v12
    %s15 = scalar_lea.vmem [#allocation1], 2
    %v16 = vld [vmem:[%s15] sm:$0x1]
    %17 = vrot.lane.b32.xlu0 %v16, 16
    %v18 = vpop.permute.xlu0 %17
    %vm19 = vcmask 195712
    %20 = vst.msk [vmem:[#allocation0] sm:$0x1] %vm19, %v18
    %s21 = scalar_lea.vmem [#allocation1], 1
    %v22 = vld [vmem:[%s21] sm:$0x1]
    %23 = vrot.lane.b32.xlu0 %v22, 8
    %v24 = vpop.permute.xlu0 %23
    %vm25 = vcmask 130112
    %26 = vst.msk [vmem:[#allocation0] sm:$0x1] %vm25, %v24
    %s28 = sshllo.u32 0, 1
    %v30 = vld [vmem:[#allocation0] sm:%s28]
    %s31 = sshllo.u32 0, 1
    %32 = vst [vmem:[%s1] sm:%s31] %v30

// kernel: llama_encoder_forward.1
$region0: #{llama_encoder_forward.1}
  #allocation0 [shape = 'u32[]', space=smem, size = 0x4, offset = 0x4, fixed_abs, tag = 'smem constant byte address 0x4 - core index']
  #allocation1 [shape = 'u32[144,128]{1,0:T(1,128)}', space=vmem, size = 0x12000, scoped, tag = 'internal scratch']
  %s0 = inlined_call_operand.vmem [shape: f32[16,8], index: 0, kind: input, shape index: {}]
  %s1 = inlined_call_operand.vmem [shape: bf16[8,32], index: 1, kind: input, shape index: {}]
  %s2 = inlined_call_operand.vmem [shape: f32[1,32], index: 2, kind: input, shape index: {}]
  %s3 = inlined_call_operand.vmem [shape: f32[16,32], index: 3, kind: input, shape index: {}]
  %s4 = inlined_call_operand.vmem [shape: f32[16,32], index: 4, kind: input, shape index: {}]
  %s5 = inlined_call_operand.vmem [shape: f32[32,32], index: 5, kind: input, shape index: {}]
  %s6 = inlined_call_operand.vmem [shape: bf16[32,32], index: 6, kind: input, shape index: {}]
  %s7 = inlined_call_operand.vmem [shape: f32[2,1,32], index: 7, kind: input, shape index: {}]
  %s8 = inlined_call_operand.vmem [shape: bf16[2,32,160], index: 8, kind: input, shape index: {}]
  %s9 = inlined_call_operand.vmem [shape: bf16[2,32,32], index: 9, kind: input, shape index: {}]
  %s10 = inlined_call_operand.vmem [shape: f32[2,1,32], index: 10, kind: input, shape index: {}]
  %s11 = inlined_call_operand.vmem [shape: bf16[2,32,128], index: 11, kind: input, shape index: {}]
  %s12 = inlined_call_operand.vmem [shape: bf16[2,64,32], index: 12, kind: input, shape index: {}]
  %s13 = inlined_call_operand.vmem [shape: f32[1,32], index: 13, kind: input, shape index: {}]
  %s14 = inlined_call_operand.vmem [shape: bf16[32,128], index: 14, kind: input, shape index: {}]
  %s15 = inlined_call_operand.vmem [shape: f32[1,128], index: 15, kind: input, shape index: {}]
  %s16 = inlined_call_operand.vmem [shape: f32[16,128], index: 16, kind: output, shape index: {}]
  %s17 = sld [smem:[#allocation0]]
  $region74: #{llama_encoder_forward.1} parent=0
    _
  %s19 = ssub.s32 1, %s17
  %s20 = scalar_select 0, %s19, %s17
  // Predicated region
  $region2: #{llama_encoder_forward.1} parent=0 // pred_check
    _
  $region3: #{llama_encoder_forward.1} parent=0 // pred_check_branch
    %22 = sbr.rel (0) target = $region5
  $region4: #{llama_encoder_forward.1} parent=0 // pred_region
    _
  $region5: #{llama_encoder_forward.1} parent=0 // pred_fallthru
    _
  // Predicated region
  $region6: #{llama_encoder_forward.1} parent=0 // pred_check
    _
  $region7: #{llama_encoder_forward.1} parent=0 // pred_check_branch
    %24 = sbr.rel (0) target = $region9
  $region8: #{llama_encoder_forward.1} parent=0 // pred_region
    _
  $region9: #{llama_encoder_forward.1} parent=0 // pred_fallthru
    _
  // Predicated region
  $region10: #{llama_encoder_forward.1} parent=0 // pred_check
    _
  $region11: #{llama_encoder_forward.1} parent=0 // pred_check_branch
    %26 = sbr.rel (0) target = $region13
  $region12: #{llama_encoder_forward.1} parent=0 // pred_region
    _
  $region13: #{llama_encoder_forward.1} parent=0 // pred_fallthru
    _
  // Predicated region
  $region14: #{llama_encoder_forward.1} parent=0 // pred_check
    _
  $region15: #{llama_encoder_forward.1} parent=0 // pred_check_branch
    %28 = sbr.rel (0) target = $region17
  $region16: #{llama_encoder_forward.1} parent=0 // pred_region
    _
  $region17: #{llama_encoder_forward.1} parent=0 // pred_fallthru
    _
  // Predicated region
  $region18: #{llama_encoder_forward.1} parent=0 // pred_check
    _
  $region19: #{llama_encoder_forward.1} parent=0 // pred_check_branch
    %30 = sbr.rel (0) target = $region21
  $region20: #{llama_encoder_forward.1} parent=0 // pred_region
    _
  $region21: #{llama_encoder_forward.1} parent=0 // pred_fallthru
    _
  // Predicated region
  $region22: #{llama_encoder_forward.1} parent=0 // pred_check
    _
  $region23: #{llama_encoder_forward.1} parent=0 // pred_check_branch
    %32 = sbr.rel (0) target = $region25
  $region24: #{llama_encoder_forward.1} parent=0 // pred_region
    _
  $region25: #{llama_encoder_forward.1} parent=0 // pred_fallthru
    _
  // Predicated region
  $region26: #{llama_encoder_forward.1} parent=0 // pred_check
    _
  $region27: #{llama_encoder_forward.1} parent=0 // pred_check_branch
    %34 = sbr.rel (0) target = $region29
  $region28: #{llama_encoder_forward.1} parent=0 // pred_region
    _
  $region29: #{llama_encoder_forward.1} parent=0 // pred_fallthru
    _
  // Predicated region
  $region30: #{llama_encoder_forward.1} parent=0 // pred_check
    _
  $region31: #{llama_encoder_forward.1} parent=0 // pred_check_branch
    %36 = sbr.rel (0) target = $region33
  $region32: #{llama_encoder_forward.1} parent=0 // pred_region
    _
  $region33: #{llama_encoder_forward.1} parent=0 // pred_fallthru
    _
  // Predicated region
  $region34: #{llama_encoder_forward.1} parent=0 // pred_check
    _
  $region35: #{llama_encoder_forward.1} parent=0 // pred_check_branch
    %38 = sbr.rel (0) target = $region37
  $region36: #{llama_encoder_forward.1} parent=0 // pred_region
    _
  $region37: #{llama_encoder_forward.1} parent=0 // pred_fallthru
    _
  // Predicated region
  $region38: #{llama_encoder_forward.1} parent=0 // pred_check
    _
  $region39: #{llama_encoder_forward.1} parent=0 // pred_check_branch
    %40 = sbr.rel (0) target = $region41
  $region40: #{llama_encoder_forward.1} parent=0 // pred_region
    _
  $region41: #{llama_encoder_forward.1} parent=0 // pred_fallthru
    _
  // Predicated region
  $region42: #{llama_encoder_forward.1} parent=0 // pred_check
    _
  $region43: #{llama_encoder_forward.1} parent=0 // pred_check_branch
    %42 = sbr.rel (0) target = $region45
  $region44: #{llama_encoder_forward.1} parent=0 // pred_region
    _
  $region45: #{llama_encoder_forward.1} parent=0 // pred_fallthru
    _
  // Predicated region
  $region46: #{llama_encoder_forward.1} parent=0 // pred_check
    _
  $region47: #{llama_encoder_forward.1} parent=0 // pred_check_branch
    %44 = sbr.rel (0) target = $region49
  $region48: #{llama_encoder_forward.1} parent=0 // pred_region
    _
  $region49: #{llama_encoder_forward.1} parent=0 // pred_fallthru
    _
  // Predicated region
  $region50: #{llama_encoder_forward.1} parent=0 // pred_check
    _
  $region51: #{llama_encoder_forward.1} parent=0 // pred_check_branch
    %46 = sbr.rel (0) target = $region53
  $region52: #{llama_encoder_forward.1} parent=0 // pred_region
    _
  $region53: #{llama_encoder_forward.1} parent=0 // pred_fallthru
    _
  // Predicated region
  $region54: #{llama_encoder_forward.1} parent=0 // pred_check
    _
  $region55: #{llama_encoder_forward.1} parent=0 // pred_check_branch
    %48 = sbr.rel (0) target = $region57
  $region56: #{llama_encoder_forward.1} parent=0 // pred_region
    _
  $region57: #{llama_encoder_forward.1} parent=0 // pred_fallthru
    _
  // Predicated region
  $region58: #{llama_encoder_forward.1} parent=0 // pred_check
    _
  $region59: #{llama_encoder_forward.1} parent=0 // pred_check_branch
    %50 = sbr.rel (0) target = $region61
  $region60: #{llama_encoder_forward.1} parent=0 // pred_region
    _
  $region61: #{llama_encoder_forward.1} parent=0 // pred_fallthru
    _
  // Predicated region
  $region62: #{llama_encoder_forward.1} parent=0 // pred_check
    _
  $region63: #{llama_encoder_forward.1} parent=0 // pred_check_branch
    %52 = sbr.rel (0) target = $region65
  $region64: #{llama_encoder_forward.1} parent=0 // pred_region
    _
  $region65: #{llama_encoder_forward.1} parent=0 // pred_fallthru
    _
  %v54 = vld [vmem:[%s0] sm:$0xff]
  %v55 = vld [vmem:[%s0 + $0x8] sm:$0xff]
  %vm56 = vcmask 64512
  %v57 = vsel %vm56, %v54, 0.0
  %v58 = vrot.slane %v57, 4
  %v59 = vadd.f32 %v57, %v58
  %v60 = vrot.slane %v59, 2
  %v61 = vadd.f32 %v59, %v60
  %v62 = vrot.slane %v61, 1
  %v63 = vadd.f32 %v61, %v62
  %v64 = vrcp.pop %v63
  %v65 = vmul.f32 %v54, %v64
  %v66 = vsel %vm56, %v55, 0.0
  %v67 = vrot.slane %v66, 4
  %v68 = vadd.f32 %v66, %v67
  %v69 = vrot.slane %v68, 2
  %v70 = vadd.f32 %v68, %v69
  %v71 = vrot.slane %v70, 1
  %v72 = vadd.f32 %v70, %v71
  %v73 = vrcp.pop %v72
  %v74 = vmul.f32 %v55, %v73
  %v75 = vpack.c.bf16 %v74, %v65
  %v76 = vld [vmem:[%s1] sm:$0xf]
  %v77 = vld [vmem:[%s2] sm:$0x1]
  %v79 = vlaneseq
  %v80 = vshrl.u32 %v79, 7
  %v81 = vsub.s32 0, %v80
  %v82 = vrot.slane %v77, %v81
  %v85 = vsel %vm56, %v75, 0
  %vm87 = vcmask 1043456
  %v89 = vsel %vm87, %v76, 0
  %91 = vmatprep.subr.bf16.mxu0 0
  %92 = vmatpush1.bf16.msra.mxu0 %v89
  %93 = vmatprep.subr.bf16.mxu0 0
  %94 = vmatpush1.bf16.msra.mxu0 0
  %95 = vmatprep.subr.bf16.mxu0 0
  %96 = vmatpush1.bf16.msra.mxu0 0
  %97 = vmatprep.subr.bf16.mxu0 0
  %98 = vmatpush1.bf16.msra.mxu0 0
  %99 = vmatprep.subr.bf16.mxu0 0
  %100 = vmatpush1.bf16.msra.mxu0 0
  %101 = vmatprep.subr.bf16.mxu0 0
  %102 = vmatpush1.bf16.msra.mxu0 0
  %103 = vmatprep.subr.bf16.mxu0 0
  %104 = vmatpush1.bf16.msra.mxu0 0
  %105 = vmatprep.subr.bf16.mxu0 0
  %106 = vmatpush1.bf16.msra.mxu0 0
  %107 = vmatprep.subr.bf16.mxu0 0
  %108 = vmatpush1.bf16.msra.mxu0 0
  %109 = vmatprep.subr.bf16.mxu0 0
  %110 = vmatpush1.bf16.msra.mxu0 0
  %111 = vmatprep.subr.bf16.mxu0 0
  %112 = vmatpush1.bf16.msra.mxu0 0
  %113 = vmatprep.subr.bf16.mxu0 0
  %114 = vmatpush1.bf16.msra.mxu0 0
  %115 = vmatprep.subr.bf16.mxu0 0
  %116 = vmatpush1.bf16.msra.mxu0 0
  %117 = vmatprep.subr.bf16.mxu0 0
  %118 = vmatpush1.bf16.msra.mxu0 0
  %119 = vmatprep.subr.bf16.mxu0 0
  %120 = vmatpush1.bf16.msra.mxu0 0
  %121 = vmatprep.subr.bf16.mxu0 0
  %122 = vmatpush1.bf16.msra.mxu0 0
  %123 = vmatprep.mubr.bf16.mxu0 0
  %124 = vmatmul.mubr.bf16.gmra.mrb[0].mxu0 %v85
  %v125 = vpop.f32.mrb[0].mxu0
  %v126 = vadd.f32 %v82, %v125
  %v127 = vpop.f32.mrb[0].mxu0
  %v128 = vpop.f32.mrb[0].mxu0
  %v129 = vadd.f32 %v82, %v128
  %v130 = vpop.f32.mrb[0].mxu0
  %131 = vdwg.mxu0
  %v132 = vld [vmem:[%s3] sm:$0xff]
  %v133 = vld [vmem:[%s3 + $0x8] sm:$0xff]
  %v134 = vld [vmem:[%s4] sm:$0xff]
  %v135 = vld [vmem:[%s4 + $0x8] sm:$0xff]
  %v136 = vld [vmem:[%s5] sm:$0xff]
  %v137 = vld [vmem:[%s5 + $0x8] sm:$0xff]
  %v138 = vld [vmem:[%s5 + $0x10] sm:$0xff]
  %v139 = vld [vmem:[%s5 + $0x18] sm:$0xff]
  %v140 = vld [vmem:[%s6] sm:$0xf]
  %v141 = vld [vmem:[%s6 + $0x4] sm:$0xf]
  %v142 = vld [vmem:[%s6 + $0x8] sm:$0xf]
  %v143 = vld [vmem:[%s6 + $0xc] sm:$0xf]
  %v144 = vld [vmem:[%s7] sm:$0x1]
  %v145 = vmul.f32 %v126, %v126
  %v146 = vmul.f32 %v129, %v129
  %vm147 = vcmask 261120
  %v148 = vsel %vm147, %v145, 0.0
  %149 = vadd.xlane.f32.xlu0 %v148
  %v150 = vpop.xlane.xlu0 %149
  %v151 = vsel %vm147, %v146, 0.0
  %152 = vadd.xlane.f32.xlu0 %v151
  %v153 = vpop.xlane.xlu0 %152
  %v154 = vrcp.pop 32.0
  %v155 = vmul.f32 %v150, %v154
  %v156 = vmul.f32 %v153, %v154
  %v157 = vadd.f32 %v155, 1e-06
  %v158 = vadd.f32 %v156, 1e-06
  %v159 = vrsqrt.pop %v157
  %v160 = vrsqrt.pop %v158
  %v161 = vmul.f32 %v126, %v159
  %v162 = vmul.f32 %v129, %v160
  %v164 = vlaneseq
  %v165 = vshrl.u32 %v164, 7
  %v166 = vsub.s32 0, %v165
  %v167 = vrot.slane %v144, %v166
  %v169 = vmul.f32 %v161, %v167
  %v170 = vmul.f32 %v162, %v167
  %v171 = vpack.c.bf16 %v170, %v169
  %v172 = vld [vmem:[%s8] sm:$0xff]
  %v173 = vld [vmem:[%s8 + $0x8] sm:$0xff]
  %v174 = vld [vmem:[%s8 + $0x10] sm:$0xff]
  %v175 = vld [vmem:[%s8 + $0x18] sm:$0xff]
  %v180 = vunpack.c.l.b16 %v172
  %v181 = vunpack.c.h.b16 %v172
  %v182 = vunpack.c.l.b16 %v173
  %v183 = vunpack.c.h.b16 %v173
  %v184 = vunpack.c.l.b16 %v174
  %v185 = vunpack.c.h.b16 %v174
  %v186 = vunpack.c.l.b16 %v175
  %v187 = vunpack.c.h.b16 %v175
  %v188 = vpack.c.b16 %v182, %v180
  %v189 = vpack.c.b16 %v183, %v181
  %v190 = vpack.c.b16 %v186, %v184
  %v191 = vpack.c.b16 %v187, %v185
  %v197 = vsel %vm147, %v171, 0
  %199 = vmatprep.subr.bf16.mxu0 %v189
  %200 = vmatpush1.bf16.msra.mxu0 %v188
  %201 = vmatprep.subr.bf16.mxu0 %v191
  %202 = vmatpush1.bf16.msra.mxu0 %v190
  %203 = vmatprep.subr.bf16.mxu0 0
  %204 = vmatpush1.bf16.msra.mxu0 0
  %205 = vmatprep.subr.bf16.mxu0 0
  %206 = vmatpush1.bf16.msra.mxu0 0
  %207 = vmatprep.subr.bf16.mxu0 0
  %208 = vmatpush1.bf16.msra.mxu0 0
  %209 = vmatprep.subr.bf16.mxu0 0
  %210 = vmatpush1.bf16.msra.mxu0 0
  %211 = vmatprep.subr.bf16.mxu0 0
  %212 = vmatpush1.bf16.msra.mxu0 0
  %213 = vmatprep.subr.bf16.mxu0 0
  %214 = vmatpush1.bf16.msra.mxu0 0
  %215 = vmatprep.subr.bf16.mxu0 0
  %216 = vmatpush1.bf16.msra.mxu0 0
  %217 = vmatprep.subr.bf16.mxu0 0
  %218 = vmatpush1.bf16.msra.mxu0 0
  %219 = vmatprep.subr.bf16.mxu0 0
  %220 = vmatpush1.bf16.msra.mxu0 0
  %221 = vmatprep.subr.bf16.mxu0 0
  %222 = vmatpush1.bf16.msra.mxu0 0
  %223 = vmatprep.subr.bf16.mxu0 0
  %224 = vmatpush1.bf16.msra.mxu0 0
  %225 = vmatprep.subr.bf16.mxu0 0
  %226 = vmatpush1.bf16.msra.mxu0 0
  %227 = vmatprep.subr.bf16.mxu0 0
  %228 = vmatpush1.bf16.msra.mxu0 0
  %229 = vmatprep.subr.bf16.mxu0 0
  %230 = vmatpush1.bf16.msra.mxu0 0
  %231 = vmatprep.mubr.bf16.mxu0 0
  %232 = vmatmul.mubr.bf16.gmra.mrb[0].mxu0 %v197
  %v233 = vpop.f32.mrb[0].mxu0
  %v234 = vadd.f32 0.0, %v233
  %v235 = vpop.f32.mrb[0].mxu0
  %v236 = vadd.f32 0.0, %v235
  %v237 = vpop.f32.mrb[0].mxu0
  %v238 = vadd.f32 0.0, %v237
  %v239 = vpop.f32.mrb[0].mxu0
  %v240 = vadd.f32 0.0, %v239
  %241 = vdwg.mxu0
  %v242 = vmul.f32 %v234, %v132
  %v243 = vmul.f32 %v238, %v133
  %246 = vrot.lane.b32.xlu0 %v134, 32
  %v247 = vpop.permute.xlu0 %246
  %248 = vrot.lane.b32.xlu0 %v135, 32
  %v249 = vpop.permute.xlu0 %248
  %v252 = vmul.f32 %v234, %v247
  %v253 = vmul.f32 %v238, %v249
  %256 = vrot.lane.b32.xlu0 %v252, 96
  %v257 = vpop.permute.xlu0 %256
  %258 = vrot.lane.b32.xlu0 %v253, 96
  %v259 = vpop.permute.xlu0 %258
  %v262 = vadd.f32 %v242, %v257
  %v263 = vadd.f32 %v243, %v259
  %266 = vrot.lane.b32.xlu0 %v132, 64
  %v267 = vpop.permute.xlu0 %266
  %268 = vrot.lane.b32.xlu0 %v133, 64
  %v269 = vpop.permute.xlu0 %268
  %v272 = vmul.f32 %v234, %v267
  %v273 = vmul.f32 %v238, %v269
  %274 = vrot.lane.b32.xlu0 %v134, 96
  %v275 = vpop.permute.xlu0 %274
  %276 = vrot.lane.b32.xlu0 %v135, 96
  %v277 = vpop.permute.xlu0 %276
  %v280 = vmul.f32 %v234, %v275
  %v281 = vmul.f32 %v238, %v277
  %284 = vrot.lane.b32.xlu0 %v280, 96
  %v285 = vpop.permute.xlu0 %284
  %286 = vrot.lane.b32.xlu0 %v281, 96
  %v287 = vpop.permute.xlu0 %286
  %v290 = vadd.f32 %v272, %v285
  %v291 = vadd.f32 %v273, %v287
  %v292 = vpack.c.bf16 %v262, %v262
  %297 = vrot.lane.b32.xlu0 %v136, 64
  %v298 = vpop.permute.xlu0 %297
  %299 = vrot.lane.b32.xlu0 %v137, 64
  %v300 = vpop.permute.xlu0 %299
  %301 = vrot.lane.b32.xlu0 %v138, 64
  %v302 = vpop.permute.xlu0 %301
  %303 = vrot.lane.b32.xlu0 %v139, 64
  %v304 = vpop.permute.xlu0 %303
  %v309 = vmul.f32 %v290, %v298
  %v310 = vmul.f32 %v290, %v300
  %v311 = vmul.f32 %v290, %v302
  %v312 = vmul.f32 %v290, %v304
  %v313 = vpack.c.bf16 %v310, %v309
  %v314 = vpack.c.bf16 %v312, %v311
  %v315 = vmul.f32 %v236, %v136
  %v316 = vmul.f32 %v236, %v137
  %v317 = vmul.f32 %v236, %v138
  %v318 = vmul.f32 %v236, %v139
  %v319 = vpack.c.bf16 %v316, %v315
  %v320 = vpack.c.bf16 %v318, %v317
  %323 = vrot.lane.b32.xlu0 %v313, 64
  %v324 = vpop.permute.xlu0 %323
  %325 = vrot.lane.b32.xlu0 %v314, 64
  %v326 = vpop.permute.xlu0 %325
  %v328 = vsel %vm147, %v292, 0
  %v331 = vsel %vm147, %v324, 0
  %v334 = vsel %vm147, %v326, 0
  %336 = vmatprep.subr.bf16.mxu0 0
  %337 = vmatpush1.bf16.xpose.msra.mxu0 %v331
  %338 = vmatprep.subr.bf16.mxu0 0
  %339 = vmatpush1.bf16.xpose.msra.mxu0 %v334
  %340 = vmatprep.subr.bf16.mxu0 0
  %341 = vmatpush1.bf16.xpose.msra.mxu0 0
  %342 = vmatprep.subr.bf16.mxu0 0
  %343 = vmatpush1.bf16.xpose.msra.mxu0 0
  %344 = vmatprep.subr.bf16.mxu0 0
  %345 = vmatpush1.bf16.xpose.msra.mxu0 0
  %346 = vmatprep.subr.bf16.mxu0 0
  %347 = vmatpush1.bf16.xpose.msra.mxu0 0
  %348 = vmatprep.subr.bf16.mxu0 0
  %349 = vmatpush1.bf16.xpose.msra.mxu0 0
  %350 = vmatprep.subr.bf16.mxu0 0
  %351 = vmatpush1.bf16.xpose.msra.mxu0 0
  %352 = vmatprep.subr.bf16.mxu0 0
  %353 = vmatpush1.bf16.xpose.msra.mxu0 0
  %354 = vmatprep.subr.bf16.mxu0 0
  %355 = vmatpush1.bf16.xpose.msra.mxu0 0
  %356 = vmatprep.subr.bf16.mxu0 0
  %357 = vmatpush1.bf16.xpose.msra.mxu0 0
  %358 = vmatprep.subr.bf16.mxu0 0
  %359 = vmatpush1.bf16.xpose.msra.mxu0 0
  %360 = vmatprep.subr.bf16.mxu0 0
  %361 = vmatpush1.bf16.xpose.msra.mxu0 0
  %362 = vmatprep.subr.bf16.mxu0 0
  %363 = vmatpush1.bf16.xpose.msra.mxu0 0
  %364 = vmatprep.subr.bf16.mxu0 0
  %365 = vmatpush1.bf16.xpose.msra.mxu0 0
  %366 = vmatprep.subr.bf16.mxu0 0
  %367 = vmatpush1.bf16.xpose.msra.mxu0 0
  %368 = vmatprep.mubr.bf16.mxu0 0
  %369 = vmatmul.mubr.bf16.gmra.mrb[0].mxu0 %v328
  %v370 = vpop.f32.mrb[0].mxu0
  %v371 = vadd.f32 0.0, %v370
  %v372 = vpop.f32.mrb[0].mxu0
  %v373 = vpop.f32.mrb[0].mxu0
  %v374 = vpop.f32.mrb[0].mxu0
  %375 = vdwg.mxu0
  %v376 = vsel %vm147, %v371, -inf
  %377 = vmax.xlane.f32.xlu0 %v376
  %v378 = vpop.xlane.xlu0 %377
  %v379 = vsub.f32 %v371, %v378
  %v380 = vmul.f32 %v379, 1.442695
  %v381 = vpow.pop %v380
  %v382 = vpack.c.bf16 %v381, %v381
  %v387 = vunpack.c.l.b16 %v140
  %v388 = vunpack.c.l.b16 %v141
  %v389 = vunpack.c.l.b16 %v142
  %v390 = vunpack.c.l.b16 %v143
  %v391 = vpack.c.b16 %v388, %v387
  %v392 = vpack.c.b16 %v390, %v389
  %v396 = vsel %vm147, %v382, 0
  %398 = vmatprep.subr.bf16.mxu0 0
  %399 = vmatpush1.bf16.msra.mxu0 %v391
  %400 = vmatprep.subr.bf16.mxu0 0
  %401 = vmatpush1.bf16.msra.mxu0 %v392
  %402 = vmatprep.subr.bf16.mxu0 0
  %403 = vmatpush1.bf16.msra.mxu0 0
  %404 = vmatprep.subr.bf16.mxu0 0
  %405 = vmatpush1.bf16.msra.mxu0 0
  %406 = vmatprep.subr.bf16.mxu0 0
  %407 = vmatpush1.bf16.msra.mxu0 0
  %408 = vmatprep.subr.bf16.mxu0 0
  %409 = vmatpush1.bf16.msra.mxu0 0
  %410 = vmatprep.subr.bf16.mxu0 0
  %411 = vmatpush1.bf16.msra.mxu0 0
  %412 = vmatprep.subr.bf16.mxu0 0
  %413 = vmatpush1.bf16.msra.mxu0 0
  %414 = vmatprep.subr.bf16.mxu0 0
  %415 = vmatpush1.bf16.msra.mxu0 0
  %416 = vmatprep.subr.bf16.mxu0 0
  %417 = vmatpush1.bf16.msra.mxu0 0
  %418 = vmatprep.subr.bf16.mxu0 0
  %419 = vmatpush1.bf16.msra.mxu0 0
  %420 = vmatprep.subr.bf16.mxu0 0
  %421 = vmatpush1.bf16.msra.mxu0 0
  %422 = vmatprep.subr.bf16.mxu0 0
  %423 = vmatpush1.bf16.msra.mxu0 0
  %424 = vmatprep.subr.bf16.mxu0 0
  %425 = vmatpush1.bf16.msra.mxu0 0
  %426 = vmatprep.subr.bf16.mxu0 0
  %427 = vmatpush1.bf16.msra.mxu0 0
  %428 = vmatprep.subr.bf16.mxu0 0
  %429 = vmatpush1.bf16.msra.mxu0 0
  %430 = vmatprep.mubr.bf16.mxu0 0
  %431 = vmatmul.mubr.bf16.gmra.mrb[0].mxu0 %v396
  %v432 = vpop.f32.mrb[0].mxu0
  %v433 = vadd.f32 0.0, %v432
  %v434 = vpop.f32.mrb[0].mxu0
  %v435 = vpop.f32.mrb[0].mxu0
  %v436 = vpop.f32.mrb[0].mxu0
  %437 = vdwg.mxu0
  %v438 = vrcp.pop %v433
  %v439 = vmul.f32 %v381, %v438
  %v440 = vpack.c.bf16 %v439, %v439
  %v442 = vsel %vm147, %v440, 0
  %444 = vmatprep.subr.bf16.mxu0 0
  %445 = vmatpush1.bf16.msra.mxu0 %v319
  %446 = vmatprep.subr.bf16.mxu0 0
  %447 = vmatpush1.bf16.msra.mxu0 %v320
  %448 = vmatprep.subr.bf16.mxu0 0
  %449 = vmatpush1.bf16.msra.mxu0 0
  %450 = vmatprep.subr.bf16.mxu0 0
  %451 = vmatpush1.bf16.msra.mxu0 0
  %452 = vmatprep.subr.bf16.mxu0 0
  %453 = vmatpush1.bf16.msra.mxu0 0
  %454 = vmatprep.subr.bf16.mxu0 0
  %455 = vmatpush1.bf16.msra.mxu0 0
  %456 = vmatprep.subr.bf16.mxu0 0
  %457 = vmatpush1.bf16.msra.mxu0 0
  %458 = vmatprep.subr.bf16.mxu0 0
  %459 = vmatpush1.bf16.msra.mxu0 0
  %460 = vmatprep.subr.bf16.mxu0 0
  %461 = vmatpush1.bf16.msra.mxu0 0
  %462 = vmatprep.subr.bf16.mxu0 0
  %463 = vmatpush1.bf16.msra.mxu0 0
  %464 = vmatprep.subr.bf16.mxu0 0
  %465 = vmatpush1.bf16.msra.mxu0 0
  %466 = vmatprep.subr.bf16.mxu0 0
  %467 = vmatpush1.bf16.msra.mxu0 0
  %468 = vmatprep.subr.bf16.mxu0 0
  %469 = vmatpush1.bf16.msra.mxu0 0
  %470 = vmatprep.subr.bf16.mxu0 0
  %471 = vmatpush1.bf16.msra.mxu0 0
  %472 = vmatprep.subr.bf16.mxu0 0
  %473 = vmatpush1.bf16.msra.mxu0 0
  %474 = vmatprep.subr.bf16.mxu0 0
  %475 = vmatpush1.bf16.msra.mxu0 0
  %476 = vmatprep.mubr.bf16.mxu0 0
  %477 = vmatmul.mubr.bf16.gmra.mrb[0].mxu0 %v442
  %v478 = vpop.f32.mrb[0].mxu0
  %v479 = vadd.f32 0.0, %v478
  %v480 = vpop.f32.mrb[0].mxu0
  %v481 = vpop.f32.mrb[0].mxu0
  %v482 = vpop.f32.mrb[0].mxu0
  %483 = vdwg.mxu0
  %v484 = vpack.c.bf16 %v263, %v263
  %v485 = vmul.f32 %v291, %v298
  %v486 = vmul.f32 %v291, %v300
  %v487 = vmul.f32 %v291, %v302
  %v488 = vmul.f32 %v291, %v304
  %v489 = vpack.c.bf16 %v486, %v485
  %v490 = vpack.c.bf16 %v488, %v487
  %v491 = vmul.f32 %v240, %v136
  %v492 = vmul.f32 %v240, %v137
  %v493 = vmul.f32 %v240, %v138
  %v494 = vmul.f32 %v240, %v139
  %v495 = vpack.c.bf16 %v492, %v491
  %v496 = vpack.c.bf16 %v494, %v493
  %499 = vrot.lane.b32.xlu0 %v489, 64
  %v500 = vpop.permute.xlu0 %499
  %501 = vrot.lane.b32.xlu0 %v490, 64
  %v502 = vpop.permute.xlu0 %501
  %v504 = vsel %vm147, %v484, 0
  %v507 = vsel %vm147, %v500, 0
  %v510 = vsel %vm147, %v502, 0
  %512 = vmatprep.subr.bf16.mxu0 0
  %513 = vmatpush1.bf16.xpose.msra.mxu0 %v507
  %514 = vmatprep.subr.bf16.mxu0 0
  %515 = vmatpush1.bf16.xpose.msra.mxu0 %v510
  %516 = vmatprep.subr.bf16.mxu0 0
  %517 = vmatpush1.bf16.xpose.msra.mxu0 0
  %518 = vmatprep.subr.bf16.mxu0 0
  %519 = vmatpush1.bf16.xpose.msra.mxu0 0
  %520 = vmatprep.subr.bf16.mxu0 0
  %521 = vmatpush1.bf16.xpose.msra.mxu0 0
  %522 = vmatprep.subr.bf16.mxu0 0
  %523 = vmatpush1.bf16.xpose.msra.mxu0 0
  %524 = vmatprep.subr.bf16.mxu0 0
  %525 = vmatpush1.bf16.xpose.msra.mxu0 0
  %526 = vmatprep.subr.bf16.mxu0 0
  %527 = vmatpush1.bf16.xpose.msra.mxu0 0
  %528 = vmatprep.subr.bf16.mxu0 0
  %529 = vmatpush1.bf16.xpose.msra.mxu0 0
  %530 = vmatprep.subr.bf16.mxu0 0
  %531 = vmatpush1.bf16.xpose.msra.mxu0 0
  %532 = vmatprep.subr.bf16.mxu0 0
  %533 = vmatpush1.bf16.xpose.msra.mxu0 0
  %534 = vmatprep.subr.bf16.mxu0 0
  %535 = vmatpush1.bf16.xpose.msra.mxu0 0
  %536 = vmatprep.subr.bf16.mxu0 0
  %537 = vmatpush1.bf16.xpose.msra.mxu0 0
  %538 = vmatprep.subr.bf16.mxu0 0
  %539 = vmatpush1.bf16.xpose.msra.mxu0 0
  %540 = vmatprep.subr.bf16.mxu0 0
  %541 = vmatpush1.bf16.xpose.msra.mxu0 0
  %542 = vmatprep.subr.bf16.mxu0 0
  %543 = vmatpush1.bf16.xpose.msra.mxu0 0
  %544 = vmatprep.mubr.bf16.mxu0 0
  %545 = vmatmul.mubr.bf16.gmra.mrb[0].mxu0 %v504
  %v546 = vpop.f32.mrb[0].mxu0
  %v547 = vadd.f32 0.0, %v546
  %v548 = vpop.f32.mrb[0].mxu0
  %v549 = vpop.f32.mrb[0].mxu0
  %v550 = vpop.f32.mrb[0].mxu0
  %551 = vdwg.mxu0
  %v552 = vsel %vm147, %v547, -inf
  %553 = vmax.xlane.f32.xlu0 %v552
  %v554 = vpop.xlane.xlu0 %553
  %v555 = vsub.f32 %v547, %v554
  %v556 = vmul.f32 %v555, 1.442695
  %v557 = vpow.pop %v556
  %v558 = vpack.c.bf16 %v557, %v557
  %v560 = vsel %vm147, %v558, 0
  %562 = vmatprep.subr.bf16.mxu0 0
  %563 = vmatpush1.bf16.msra.mxu0 %v391
  %564 = vmatprep.subr.bf16.mxu0 0
  %565 = vmatpush1.bf16.msra.mxu0 %v392
  %566 = vmatprep.subr.bf16.mxu0 0
  %567 = vmatpush1.bf16.msra.mxu0 0
  %568 = vmatprep.subr.bf16.mxu0 0
  %569 = vmatpush1.bf16.msra.mxu0 0
  %570 = vmatprep.subr.bf16.mxu0 0
  %571 = vmatpush1.bf16.msra.mxu0 0
  %572 = vmatprep.subr.bf16.mxu0 0
  %573 = vmatpush1.bf16.msra.mxu0 0
  %574 = vmatprep.subr.bf16.mxu0 0
  %575 = vmatpush1.bf16.msra.mxu0 0
  %576 = vmatprep.subr.bf16.mxu0 0
  %577 = vmatpush1.bf16.msra.mxu0 0
  %578 = vmatprep.subr.bf16.mxu0 0
  %579 = vmatpush1.bf16.msra.mxu0 0
  %580 = vmatprep.subr.bf16.mxu0 0
  %581 = vmatpush1.bf16.msra.mxu0 0
  %582 = vmatprep.subr.bf16.mxu0 0
  %583 = vmatpush1.bf16.msra.mxu0 0
  %584 = vmatprep.subr.bf16.mxu0 0
  %585 = vmatpush1.bf16.msra.mxu0 0
  %586 = vmatprep.subr.bf16.mxu0 0
  %587 = vmatpush1.bf16.msra.mxu0 0
  %588 = vmatprep.subr.bf16.mxu0 0
  %589 = vmatpush1.bf16.msra.mxu0 0
  %590 = vmatprep.subr.bf16.mxu0 0
  %591 = vmatpush1.bf16.msra.mxu0 0
  %592 = vmatprep.subr.bf16.mxu0 0
  %593 = vmatpush1.bf16.msra.mxu0 0
  %594 = vmatprep.mubr.bf16.mxu0 0
  %595 = vmatmul.mubr.bf16.gmra.mrb[0].mxu0 %v560
  %v596 = vpop.f32.mrb[0].mxu0
  %v597 = vadd.f32 0.0, %v596
  %v598 = vpop.f32.mrb[0].mxu0
  %v599 = vpop.f32.mrb[0].mxu0
  %v600 = vpop.f32.mrb[0].mxu0
  %601 = vdwg.mxu0
  %v602 = vrcp.pop %v597
  %v603 = vmul.f32 %v557, %v602
  %v604 = vpack.c.bf16 %v603, %v603
  %v606 = vsel %vm147, %v604, 0
  %608 = vmatprep.subr.bf16.mxu0 0
  %609 = vmatpush1.bf16.msra.mxu0 %v495
  %610 = vmatprep.subr.bf16.mxu0 0
  %611 = vmatpush1.bf16.msra.mxu0 %v496
  %612 = vmatprep.subr.bf16.mxu0 0
  %613 = vmatpush1.bf16.msra.mxu0 0
  %614 = vmatprep.subr.bf16.mxu0 0
  %615 = vmatpush1.bf16.msra.mxu0 0
  %616 = vmatprep.subr.bf16.mxu0 0
  %617 = vmatpush1.bf16.msra.mxu0 0
  %618 = vmatprep.subr.bf16.mxu0 0
  %619 = vmatpush1.bf16.msra.mxu0 0
  %620 = vmatprep.subr.bf16.mxu0 0
  %621 = vmatpush1.bf16.msra.mxu0 0
  %622 = vmatprep.subr.bf16.mxu0 0
  %623 = vmatpush1.bf16.msra.mxu0 0
  %624 = vmatprep.subr.bf16.mxu0 0
  %625 = vmatpush1.bf16.msra.mxu0 0
  %626 = vmatprep.subr.bf16.mxu0 0
  %627 = vmatpush1.bf16.msra.mxu0 0
  %628 = vmatprep.subr.bf16.mxu0 0
  %629 = vmatpush1.bf16.msra.mxu0 0
  %630 = vmatprep.subr.bf16.mxu0 0
  %631 = vmatpush1.bf16.msra.mxu0 0
  %632 = vmatprep.subr.bf16.mxu0 0
  %633 = vmatpush1.bf16.msra.mxu0 0
  %634 = vmatprep.subr.bf16.mxu0 0
  %635 = vmatpush1.bf16.msra.mxu0 0
  %636 = vmatprep.subr.bf16.mxu0 0
  %637 = vmatpush1.bf16.msra.mxu0 0
  %638 = vmatprep.subr.bf16.mxu0 0
  %639 = vmatpush1.bf16.msra.mxu0 0
  %640 = vmatprep.mubr.bf16.mxu0 0
  %641 = vmatmul.mubr.bf16.gmra.mrb[0].mxu0 %v606
  %v642 = vpop.f32.mrb[0].mxu0
  %v643 = vadd.f32 0.0, %v642
  %v644 = vpop.f32.mrb[0].mxu0
  %v645 = vpop.f32.mrb[0].mxu0
  %v646 = vpop.f32.mrb[0].mxu0
  %647 = vdwg.mxu0
  %v648 = vpack.c.bf16 %v643, %v479
  %v649 = vld [vmem:[%s9] sm:$0xf]
  %v650 = vld [vmem:[%s9 + $0x4] sm:$0xf]
  %v651 = vld [vmem:[%s9 + $0x8] sm:$0xf]
  %v652 = vld [vmem:[%s9 + $0xc] sm:$0xf]
  %v657 = vunpack.c.l.b16 %v649
  %v658 = vunpack.c.l.b16 %v650
  %v659 = vunpack.c.l.b16 %v651
  %v660 = vunpack.c.l.b16 %v652
  %v661 = vpack.c.b16 %v658, %v657
  %v662 = vpack.c.b16 %v660, %v659
  %v666 = vsel %vm147, %v648, 0
  %668 = vmatprep.subr.bf16.mxu0 0
  %669 = vmatpush1.bf16.msra.mxu0 %v661
  %670 = vmatprep.subr.bf16.mxu0 0
  %671 = vmatpush1.bf16.msra.mxu0 %v662
  %672 = vmatprep.subr.bf16.mxu0 0
  %673 = vmatpush1.bf16.msra.mxu0 0
  %674 = vmatprep.subr.bf16.mxu0 0
  %675 = vmatpush1.bf16.msra.mxu0 0
  %676 = vmatprep.subr.bf16.mxu0 0
  %677 = vmatpush1.bf16.msra.mxu0 0
  %678 = vmatprep.subr.bf16.mxu0 0
  %679 = vmatpush1.bf16.msra.mxu0 0
  %680 = vmatprep.subr.bf16.mxu0 0
  %681 = vmatpush1.bf16.msra.mxu0 0
  %682 = vmatprep.subr.bf16.mxu0 0
  %683 = vmatpush1.bf16.msra.mxu0 0
  %684 = vmatprep.subr.bf16.mxu0 0
  %685 = vmatpush1.bf16.msra.mxu0 0
  %686 = vmatprep.subr.bf16.mxu0 0
  %687 = vmatpush1.bf16.msra.mxu0 0
  %688 = vmatprep.subr.bf16.mxu0 0
  %689 = vmatpush1.bf16.msra.mxu0 0
  %690 = vmatprep.subr.bf16.mxu0 0
  %691 = vmatpush1.bf16.msra.mxu0 0
  %692 = vmatprep.subr.bf16.mxu0 0
  %693 = vmatpush1.bf16.msra.mxu0 0
  %694 = vmatprep.subr.bf16.mxu0 0
  %695 = vmatpush1.bf16.msra.mxu0 0
  %696 = vmatprep.subr.bf16.mxu0 0
  %697 = vmatpush1.bf16.msra.mxu0 0
  %698 = vmatprep.subr.bf16.mxu0 0
  %699 = vmatpush1.bf16.msra.mxu0 0
  %700 = vmatprep.mubr.bf16.mxu0 0
  %701 = vmatmul.mubr.bf16.gmra.mrb[0].mxu0 %v666
  %v702 = vpop.f32.mrb[0].mxu0
  %v703 = vadd.f32 0.0, %v702
  %v704 = vpop.f32.mrb[0].mxu0
  %v705 = vpop.f32.mrb[0].mxu0
  %v706 = vadd.f32 0.0, %v705
  %v707 = vpop.f32.mrb[0].mxu0
  %708 = vdwg.mxu0
  %v709 = vadd.f32 %v126, %v703
  %v710 = vadd.f32 %v129, %v706
  %v711 = vld [vmem:[%s10] sm:$0x1]
  %v712 = vmul.f32 %v709, %v709
  %v713 = vmul.f32 %v710, %v710
  %v714 = vsel %vm147, %v712, 0.0
  %715 = vadd.xlane.f32.xlu0 %v714
  %v716 = vpop.xlane.xlu0 %715
  %v717 = vsel %vm147, %v713, 0.0
  %718 = vadd.xlane.f32.xlu0 %v717
  %v719 = vpop.xlane.xlu0 %718
  %v720 = vmul.f32 %v716, %v154
  %v721 = vmul.f32 %v719, %v154
  %v722 = vadd.f32 %v720, 1e-06
  %v723 = vadd.f32 %v721, 1e-06
  %v724 = vrsqrt.pop %v722
  %v725 = vrsqrt.pop %v723
  %v726 = vmul.f32 %v709, %v724
  %v727 = vmul.f32 %v710, %v725
  %v729 = vlaneseq
  %v730 = vshrl.u32 %v729, 7
  %v731 = vsub.s32 0, %v730
  %v732 = vrot.slane %v711, %v731
  %v734 = vmul.f32 %v726, %v732
  %v735 = vmul.f32 %v727, %v732
  %v736 = vpack.c.bf16 %v735, %v734
  %v737 = vld [vmem:[%s11] sm:$0xf]
  %v738 = vld [vmem:[%s11 + $0x4] sm:$0xf]
  %v739 = vld [vmem:[%s11 + $0x8] sm:$0xf]
  %v740 = vld [vmem:[%s11 + $0xc] sm:$0xf]
  %v745 = vunpack.c.l.b16 %v737
  %v746 = vunpack.c.l.b16 %v738
  %v747 = vunpack.c.l.b16 %v739
  %v748 = vunpack.c.l.b16 %v740
  %v749 = vpack.c.b16 %v746, %v745
  %v750 = vpack.c.b16 %v748, %v747
  %v754 = vsel %vm147, %v736, 0
  %756 = vmatprep.subr.bf16.mxu0 0
  %757 = vmatpush1.bf16.msra.mxu0 %v749
  %758 = vmatprep.subr.bf16.mxu0 0
  %759 = vmatpush1.bf16.msra.mxu0 %v750
  %760 = vmatprep.subr.bf16.mxu0 0
  %761 = vmatpush1.bf16.msra.mxu0 0
  %762 = vmatprep.subr.bf16.mxu0 0
  %763 = vmatpush1.bf16.msra.mxu0 0
  %764 = vmatprep.subr.bf16.mxu0 0
  %765 = vmatpush1.bf16.msra.mxu0 0
  %766 = vmatprep.subr.bf16.mxu0 0
  %767 = vmatpush1.bf16.msra.mxu0 0
  %768 = vmatprep.subr.bf16.mxu0 0
  %769 = vmatpush1.bf16.msra.mxu0 0
  %770 = vmatprep.subr.bf16.mxu0 0
  %771 = vmatpush1.bf16.msra.mxu0 0
  %772 = vmatprep.subr.bf16.mxu0 0
  %773 = vmatpush1.bf16.msra.mxu0 0
  %774 = vmatprep.subr.bf16.mxu0 0
  %775 = vmatpush1.bf16.msra.mxu0 0
  %776 = vmatprep.subr.bf16.mxu0 0
  %777 = vmatpush1.bf16.msra.mxu0 0
  %778 = vmatprep.subr.bf16.mxu0 0
  %779 = vmatpush1.bf16.msra.mxu0 0
  %780 = vmatprep.subr.bf16.mxu0 0
  %781 = vmatpush1.bf16.msra.mxu0 0
  %782 = vmatprep.subr.bf16.mxu0 0
  %783 = vmatpush1.bf16.msra.mxu0 0
  %784 = vmatprep.subr.bf16.mxu0 0
  %785 = vmatpush1.bf16.msra.mxu0 0
  %786 = vmatprep.subr.bf16.mxu0 0
  %787 = vmatpush1.bf16.msra.mxu0 0
  %788 = vmatprep.mubr.bf16.mxu0 0
  %789 = vmatmul.mubr.bf16.gmra.mrb[0].mxu0 %v754
  %v790 = vpop.f32.mrb[0].mxu0
  %v791 = vadd.f32 0.0, %v790
  %v792 = vpop.f32.mrb[0].mxu0
  %v793 = vpop.f32.mrb[0].mxu0
  %v794 = vadd.f32 0.0, %v793
  %v795 = vpop.f32.mrb[0].mxu0
  %796 = vdwg.mxu0
  %v797 = vsub.f32 0.0, %v791
  %v798 = vsub.f32 0.0, %v794
  %v799 = vmul.f32 %v797, 1.442695
  %v800 = vpow.pop %v799
  %v801 = vmul.f32 %v798, 1.442695
  %v802 = vpow.pop %v801
  %v803 = vadd.f32 %v800, 1.0
  %v804 = vadd.f32 %v802, 1.0
  %v805 = vrcp.pop %v803
  %v806 = vrcp.pop %v804
  %v807 = vmul.f32 %v791, %v805
  %v808 = vmul.f32 %v794, %v806
  %811 = vrot.lane.b32.xlu0 %v791, 64
  %v812 = vpop.permute.xlu0 %811
  %813 = vrot.lane.b32.xlu0 %v794, 64
  %v814 = vpop.permute.xlu0 %813
  %v817 = vmul.f32 %v807, %v812
  %v818 = vmul.f32 %v808, %v814
  %v819 = vpack.c.bf16 %v818, %v817
  %v820 = vld [vmem:[%s12] sm:$0xf]
  %v821 = vld [vmem:[%s12 + $0x4] sm:$0xf]
  %v822 = vld [vmem:[%s12 + $0x8] sm:$0xf]
  %v823 = vld [vmem:[%s12 + $0xc] sm:$0xf]
  %v824 = vld [vmem:[%s12 + $0x10] sm:$0xf]
  %v825 = vld [vmem:[%s12 + $0x14] sm:$0xf]
  %v826 = vld [vmem:[%s12 + $0x18] sm:$0xf]
  %v827 = vld [vmem:[%s12 + $0x1c] sm:$0xf]
  %v836 = vunpack.c.l.b16 %v820
  %v837 = vunpack.c.l.b16 %v821
  %v838 = vunpack.c.l.b16 %v822
  %v839 = vunpack.c.l.b16 %v823
  %v840 = vunpack.c.l.b16 %v824
  %v841 = vunpack.c.l.b16 %v825
  %v842 = vunpack.c.l.b16 %v826
  %v843 = vunpack.c.l.b16 %v827
  %v844 = vpack.c.b16 %v837, %v836
  %v845 = vpack.c.b16 %v839, %v838
  %v846 = vpack.c.b16 %v841, %v840
  %v847 = vpack.c.b16 %v843, %v842
  %vm852 = vcmask 523264
  %v854 = vsel %vm852, %v819, 0
  %856 = vmatprep.subr.bf16.mxu0 0
  %857 = vmatpush1.bf16.msra.mxu0 %v844
  %858 = vmatprep.subr.bf16.mxu0 0
  %859 = vmatpush1.bf16.msra.mxu0 %v845
  %860 = vmatprep.subr.bf16.mxu0 0
  %861 = vmatpush1.bf16.msra.mxu0 %v846
  %862 = vmatprep.subr.bf16.mxu0 0
  %863 = vmatpush1.bf16.msra.mxu0 %v847
  %864 = vmatprep.subr.bf16.mxu0 0
  %865 = vmatpush1.bf16.msra.mxu0 0
  %866 = vmatprep.subr.bf16.mxu0 0
  %867 = vmatpush1.bf16.msra.mxu0 0
  %868 = vmatprep.subr.bf16.mxu0 0
  %869 = vmatpush1.bf16.msra.mxu0 0
  %870 = vmatprep.subr.bf16.mxu0 0
  %871 = vmatpush1.bf16.msra.mxu0 0
  %872 = vmatprep.subr.bf16.mxu0 0
  %873 = vmatpush1.bf16.msra.mxu0 0
  %874 = vmatprep.subr.bf16.mxu0 0
  %875 = vmatpush1.bf16.msra.mxu0 0
  %876 = vmatprep.subr.bf16.mxu0 0
  %877 = vmatpush1.bf16.msra.mxu0 0
  %878 = vmatprep.subr.bf16.mxu0 0
  %879 = vmatpush1.bf16.msra.mxu0 0
  %880 = vmatprep.subr.bf16.mxu0 0
  %881 = vmatpush1.bf16.msra.mxu0 0
  %882 = vmatprep.subr.bf16.mxu0 0
  %883 = vmatpush1.bf16.msra.mxu0 0
  %884 = vmatprep.subr.bf16.mxu0 0
  %885 = vmatpush1.bf16.msra.mxu0 0
  %886 = vmatprep.subr.bf16.mxu0 0
  %887 = vmatpush1.bf16.msra.mxu0 0
  %888 = vmatprep.mubr.bf16.mxu0 0
  %889 = vmatmul.mubr.bf16.gmra.mrb[0].mxu0 %v854
  %v890 = vpop.f32.mrb[0].mxu0
  %v891 = vadd.f32 0.0, %v890
  %v892 = vpop.f32.mrb[0].mxu0
  %v893 = vpop.f32.mrb[0].mxu0
  %v894 = vadd.f32 0.0, %v893
  %v895 = vpop.f32.mrb[0].mxu0
  %896 = vdwg.mxu0
  %v897 = vadd.f32 %v709, %v891
  %v898 = vadd.f32 %v710, %v894
  %s899 = scalar_lea.vmem %s7, 1
  %v900 = vld [vmem:[%s899] sm:$0x1]
  %v901 = vmul.f32 %v897, %v897
  %v902 = vmul.f32 %v898, %v898
  %v903 = vsel %vm147, %v901, 0.0
  %904 = vadd.xlane.f32.xlu0 %v903
  %v905 = vpop.xlane.xlu0 %904
  %v906 = vsel %vm147, %v902, 0.0
  %907 = vadd.xlane.f32.xlu0 %v906
  %v908 = vpop.xlane.xlu0 %907
  %v909 = vmul.f32 %v905, %v154
  %v910 = vmul.f32 %v908, %v154
  %v911 = vadd.f32 %v909, 1e-06
  %v912 = vadd.f32 %v910, 1e-06
  %v913 = vrsqrt.pop %v911
  %v914 = vrsqrt.pop %v912
  %v915 = vmul.f32 %v897, %v913
  %v916 = vmul.f32 %v898, %v914
  %v918 = vlaneseq
  %v919 = vshrl.u32 %v918, 7
  %v920 = vsub.s32 0, %v919
  %v921 = vrot.slane %v900, %v920
  %v923 = vmul.f32 %v915, %v921
  %v924 = vmul.f32 %v916, %v921
  %v925 = vpack.c.bf16 %v924, %v923
  %s926 = scalar_lea.vmem %s8, 32
  %v927 = vld [vmem:[%s926] sm:$0xff]
  %v928 = vld [vmem:[%s926 + $0x8] sm:$0xff]
  %v929 = vld [vmem:[%s926 + $0x10] sm:$0xff]
  %v930 = vld [vmem:[%s926 + $0x18] sm:$0xff]
  %v935 = vunpack.c.l.b16 %v927
  %v936 = vunpack.c.h.b16 %v927
  %v937 = vunpack.c.l.b16 %v928
  %v938 = vunpack.c.h.b16 %v928
  %v939 = vunpack.c.l.b16 %v929
  %v940 = vunpack.c.h.b16 %v929
  %v941 = vunpack.c.l.b16 %v930
  %v942 = vunpack.c.h.b16 %v930
  %v943 = vpack.c.b16 %v937, %v935
  %v944 = vpack.c.b16 %v938, %v936
  %v945 = vpack.c.b16 %v941, %v939
  %v946 = vpack.c.b16 %v942, %v940
  %v952 = vsel %vm147, %v925, 0
  %954 = vmatprep.subr.bf16.mxu0 %v944
  %955 = vmatpush1.bf16.msra.mxu0 %v943
  %956 = vmatprep.subr.bf16.mxu0 %v946
  %957 = vmatpush1.bf16.msra.mxu0 %v945
  %958 = vmatprep.subr.bf16.mxu0 0
  %959 = vmatpush1.bf16.msra.mxu0 0
  %960 = vmatprep.subr.bf16.mxu0 0
  %961 = vmatpush1.bf16.msra.mxu0 0
  %962 = vmatprep.subr.bf16.mxu0 0
  %963 = vmatpush1.bf16.msra.mxu0 0
  %964 = vmatprep.subr.bf16.mxu0 0
  %965 = vmatpush1.bf16.msra.mxu0 0
  %966 = vmatprep.subr.bf16.mxu0 0
  %967 = vmatpush1.bf16.msra.mxu0 0
  %968 = vmatprep.subr.bf16.mxu0 0
  %969 = vmatpush1.bf16.msra.mxu0 0
  %970 = vmatprep.subr.bf16.mxu0 0
  %971 = vmatpush1.bf16.msra.mxu0 0
  %972 = vmatprep.subr.bf16.mxu0 0
  %973 = vmatpush1.bf16.msra.mxu0 0
  %974 = vmatprep.subr.bf16.mxu0 0
  %975 = vmatpush1.bf16.msra.mxu0 0
  %976 = vmatprep.subr.bf16.mxu0 0
  %977 = vmatpush1.bf16.msra.mxu0 0
  %978 = vmatprep.subr.bf16.mxu0 0
  %979 = vmatpush1.bf16.msra.mxu0 0
  %980 = vmatprep.subr.bf16.mxu0 0
  %981 = vmatpush1.bf16.msra.mxu0 0
  %982 = vmatprep.subr.bf16.mxu0 0
  %983 = vmatpush1.bf16.msra.mxu0 0
  %984 = vmatprep.subr.bf16.mxu0 0
  %985 = vmatpush1.bf16.msra.mxu0 0
  %986 = vmatprep.mubr.bf16.mxu0 0
  %987 = vmatmul.mubr.bf16.gmra.mrb[0].mxu0 %v952
  %v988 = vpop.f32.mrb[0].mxu0
  %v989 = vadd.f32 0.0, %v988
  %v990 = vpop.f32.mrb[0].mxu0
  %v991 = vadd.f32 0.0, %v990
  %v992 = vpop.f32.mrb[0].mxu0
  %v993 = vadd.f32 0.0, %v992
  %v994 = vpop.f32.mrb[0].mxu0
  %v995 = vadd.f32 0.0, %v994
  %996 = vdwg.mxu0
  %v997 = vmul.f32 %v989, %v132
  %v998 = vmul.f32 %v993, %v133
  %v999 = vmul.f32 %v989, %v247
  %v1000 = vmul.f32 %v993, %v249
  %1003 = vrot.lane.b32.xlu0 %v999, 96
  %v1004 = vpop.permute.xlu0 %1003
  %1005 = vrot.lane.b32.xlu0 %v1000, 96
  %v1006 = vpop.permute.xlu0 %1005
  %v1009 = vadd.f32 %v997, %v1004
  %v1010 = vadd.f32 %v998, %v1006
  %v1011 = vmul.f32 %v989, %v267
  %v1012 = vmul.f32 %v993, %v269
  %v1013 = vmul.f32 %v989, %v275
  %v1014 = vmul.f32 %v993, %v277
  %1017 = vrot.lane.b32.xlu0 %v1013, 96
  %v1018 = vpop.permute.xlu0 %1017
  %1019 = vrot.lane.b32.xlu0 %v1014, 96
  %v1020 = vpop.permute.xlu0 %1019
  %v1023 = vadd.f32 %v1011, %v1018
  %v1024 = vadd.f32 %v1012, %v1020
  %v1025 = vpack.c.bf16 %v1009, %v1009
  %v1026 = vmul.f32 %v1023, %v298
  %v1027 = vmul.f32 %v1023, %v300
  %v1028 = vmul.f32 %v1023, %v302
  %v1029 = vmul.f32 %v1023, %v304
  %v1030 = vpack.c.bf16 %v1027, %v1026
  %v1031 = vpack.c.bf16 %v1029, %v1028
  %v1032 = vmul.f32 %v991, %v136
  %v1033 = vmul.f32 %v991, %v137
  %v1034 = vmul.f32 %v991, %v138
  %v1035 = vmul.f32 %v991, %v139
  %v1036 = vpack.c.bf16 %v1033, %v1032
  %v1037 = vpack.c.bf16 %v1035, %v1034
  %1040 = vrot.lane.b32.xlu0 %v1030, 64
  %v1041 = vpop.permute.xlu0 %1040
  %1042 = vrot.lane.b32.xlu0 %v1031, 64
  %v1043 = vpop.permute.xlu0 %1042
  %v1045 = vsel %vm147, %v1025, 0
  %v1048 = vsel %vm147, %v1041, 0
  %v1051 = vsel %vm147, %v1043, 0
  %1053 = vmatprep.subr.bf16.mxu0 0
  %1054 = vmatpush1.bf16.xpose.msra.mxu0 %v1048
  %1055 = vmatprep.subr.bf16.mxu0 0
  %1056 = vmatpush1.bf16.xpose.msra.mxu0 %v1051
  %1057 = vmatprep.subr.bf16.mxu0 0
  %1058 = vmatpush1.bf16.xpose.msra.mxu0 0
  %1059 = vmatprep.subr.bf16.mxu0 0
  %1060 = vmatpush1.bf16.xpose.msra.mxu0 0
  %1061 = vmatprep.subr.bf16.mxu0 0
  %1062 = vmatpush1.bf16.xpose.msra.mxu0 0
  %1063 = vmatprep.subr.bf16.mxu0 0
  %1064 = vmatpush1.bf16.xpose.msra.mxu0 0
  %1065 = vmatprep.subr.bf16.mxu0 0
  %1066 = vmatpush1.bf16.xpose.msra.mxu0 0
  %1067 = vmatprep.subr.bf16.mxu0 0
  %1068 = vmatpush1.bf16.xpose.msra.mxu0 0
  %1069 = vmatprep.subr.bf16.mxu0 0
  %1070 = vmatpush1.bf16.xpose.msra.mxu0 0
  %1071 = vmatprep.subr.bf16.mxu0 0
  %1072 = vmatpush1.bf16.xpose.msra.mxu0 0
  %1073 = vmatprep.subr.bf16.mxu0 0
  %1074 = vmatpush1.bf16.xpose.msra.mxu0 0
  %1075 = vmatprep.subr.bf16.mxu0 0
  %1076 = vmatpush1.bf16.xpose.msra.mxu0 0
  %1077 = vmatprep.subr.bf16.mxu0 0
  %1078 = vmatpush1.bf16.xpose.msra.mxu0 0
  %1079 = vmatprep.subr.bf16.mxu0 0
  %1080 = vmatpush1.bf16.xpose.msra.mxu0 0
  %1081 = vmatprep.subr.bf16.mxu0 0
  %1082 = vmatpush1.bf16.xpose.msra.mxu0 0
  %1083 = vmatprep.subr.bf16.mxu0 0
  %1084 = vmatpush1.bf16.xpose.msra.mxu0 0
  %1085 = vmatprep.mubr.bf16.mxu0 0
  %1086 = vmatmul.mubr.bf16.gmra.mrb[0].mxu0 %v1045
  %v1087 = vpop.f32.mrb[0].mxu0
  %v1088 = vadd.f32 0.0, %v1087
  %v1089 = vpop.f32.mrb[0].mxu0
  %v1090 = vpop.f32.mrb[0].mxu0
  %v1091 = vpop.f32.mrb[0].mxu0
  %1092 = vdwg.mxu0
  %v1093 = vsel %vm147, %v1088, -inf
  %1094 = vmax.xlane.f32.xlu0 %v1093
  %v1095 = vpop.xlane.xlu0 %1094
  %v1096 = vsub.f32 %v1088, %v1095
  %v1097 = vmul.f32 %v1096, 1.442695
  %v1098 = vpow.pop %v1097
  %v1099 = vpack.c.bf16 %v1098, %v1098
  %v1101 = vsel %vm147, %v1099, 0
  %1103 = vmatprep.subr.bf16.mxu0 0
  %1104 = vmatpush1.bf16.msra.mxu0 %v391
  %1105 = vmatprep.subr.bf16.mxu0 0
  %1106 = vmatpush1.bf16.msra.mxu0 %v392
  %1107 = vmatprep.subr.bf16.mxu0 0
  %1108 = vmatpush1.bf16.msra.mxu0 0
  %1109 = vmatprep.subr.bf16.mxu0 0
  %1110 = vmatpush1.bf16.msra.mxu0 0
  %1111 = vmatprep.subr.bf16.mxu0 0
  %1112 = vmatpush1.bf16.msra.mxu0 0
  %1113 = vmatprep.subr.bf16.mxu0 0
  %1114 = vmatpush1.bf16.msra.mxu0 0
  %1115 = vmatprep.subr.bf16.mxu0 0
  %1116 = vmatpush1.bf16.msra.mxu0 0
  %1117 = vmatprep.subr.bf16.mxu0 0
  %1118 = vmatpush1.bf16.msra.mxu0 0
  %1119 = vmatprep.subr.bf16.mxu0 0
  %1120 = vmatpush1.bf16.msra.mxu0 0
  %1121 = vmatprep.subr.bf16.mxu0 0
  %1122 = vmatpush1.bf16.msra.mxu0 0
  %1123 = vmatprep.subr.bf16.mxu0 0
  %1124 = vmatpush1.bf16.msra.mxu0 0
  %1125 = vmatprep.subr.bf16.mxu0 0
  %1126 = vmatpush1.bf16.msra.mxu0 0
  %1127 = vmatprep.subr.bf16.mxu0 0
  %1128 = vmatpush1.bf16.msra.mxu0 0
  %1129 = vmatprep.subr.bf16.mxu0 0
  %1130 = vmatpush1.bf16.msra.mxu0 0
  %1131 = vmatprep.subr.bf16.mxu0 0
  %1132 = vmatpush1.bf16.msra.mxu0 0
  %1133 = vmatprep.subr.bf16.mxu0 0
  %1134 = vmatpush1.bf16.msra.mxu0 0
  %1135 = vmatprep.mubr.bf16.mxu0 0
  %1136 = vmatmul.mubr.bf16.gmra.mrb[0].mxu0 %v1101
  %v1137 = vpop.f32.mrb[0].mxu0
  %v1138 = vadd.f32 0.0, %v1137
  %v1139 = vpop.f32.mrb[0].mxu0
  %v1140 = vpop.f32.mrb[0].mxu0
  %v1141 = vpop.f32.mrb[0].mxu0
  %1142 = vdwg.mxu0
  %v1143 = vrcp.pop %v1138
  %v1144 = vmul.f32 %v1098, %v1143
  %v1145 = vpack.c.bf16 %v1144, %v1144
  %v1147 = vsel %vm147, %v1145, 0
  %1149 = vmatprep.subr.bf16.mxu0 0
  %1150 = vmatpush1.bf16.msra.mxu0 %v1036
  %1151 = vmatprep.subr.bf16.mxu0 0
  %1152 = vmatpush1.bf16.msra.mxu0 %v1037
  %1153 = vmatprep.subr.bf16.mxu0 0
  %1154 = vmatpush1.bf16.msra.mxu0 0
  %1155 = vmatprep.subr.bf16.mxu0 0
  %1156 = vmatpush1.bf16.msra.mxu0 0
  %1157 = vmatprep.subr.bf16.mxu0 0
  %1158 = vmatpush1.bf16.msra.mxu0 0
  %1159 = vmatprep.subr.bf16.mxu0 0
  %1160 = vmatpush1.bf16.msra.mxu0 0
  %1161 = vmatprep.subr.bf16.mxu0 0
  %1162 = vmatpush1.bf16.msra.mxu0 0
  %1163 = vmatprep.subr.bf16.mxu0 0
  %1164 = vmatpush1.bf16.msra.mxu0 0
  %1165 = vmatprep.subr.bf16.mxu0 0
  %1166 = vmatpush1.bf16.msra.mxu0 0
  %1167 = vmatprep.subr.bf16.mxu0 0
  %1168 = vmatpush1.bf16.msra.mxu0 0
  %1169 = vmatprep.subr.bf16.mxu0 0
  %1170 = vmatpush1.bf16.msra.mxu0 0
  %1171 = vmatprep.subr.bf16.mxu0 0
  %1172 = vmatpush1.bf16.msra.mxu0 0
  %1173 = vmatprep.subr.bf16.mxu0 0
  %1174 = vmatpush1.bf16.msra.mxu0 0
  %1175 = vmatprep.subr.bf16.mxu0 0
  %1176 = vmatpush1.bf16.msra.mxu0 0
  %1177 = vmatprep.subr.bf16.mxu0 0
  %1178 = vmatpush1.bf16.msra.mxu0 0
  %1179 = vmatprep.subr.bf16.mxu0 0
  %1180 = vmatpush1.bf16.msra.mxu0 0
  %1181 = vmatprep.mubr.bf16.mxu0 0
  %1182 = vmatmul.mubr.bf16.gmra.mrb[0].mxu0 %v1147
  %v1183 = vpop.f32.mrb[0].mxu0
  %v1184 = vadd.f32 0.0, %v1183
  %v1185 = vpop.f32.mrb[0].mxu0
  %v1186 = vpop.f32.mrb[0].mxu0
  %v1187 = vpop.f32.mrb[0].mxu0
  %1188 = vdwg.mxu0
  %v1189 = vpack.c.bf16 %v1010, %v1010
  %v1190 = vmul.f32 %v1024, %v298
  %v1191 = vmul.f32 %v1024, %v300
  %v1192 = vmul.f32 %v1024, %v302
  %v1193 = vmul.f32 %v1024, %v304
  %v1194 = vpack.c.bf16 %v1191, %v1190
  %v1195 = vpack.c.bf16 %v1193, %v1192
  %v1196 = vmul.f32 %v995, %v136
  %v1197 = vmul.f32 %v995, %v137
  %v1198 = vmul.f32 %v995, %v138
  %v1199 = vmul.f32 %v995, %v139
  %v1200 = vpack.c.bf16 %v1197, %v1196
  %v1201 = vpack.c.bf16 %v1199, %v1198
  %1204 = vrot.lane.b32.xlu0 %v1194, 64
  %v1205 = vpop.permute.xlu0 %1204
  %1206 = vrot.lane.b32.xlu0 %v1195, 64
  %v1207 = vpop.permute.xlu0 %1206
  %v1209 = vsel %vm147, %v1189, 0
  %v1212 = vsel %vm147, %v1205, 0
  %v1215 = vsel %vm147, %v1207, 0
  %1217 = vmatprep.subr.bf16.mxu0 0
  %1218 = vmatpush1.bf16.xpose.msra.mxu0 %v1212
  %1219 = vmatprep.subr.bf16.mxu0 0
  %1220 = vmatpush1.bf16.xpose.msra.mxu0 %v1215
  %1221 = vmatprep.subr.bf16.mxu0 0
  %1222 = vmatpush1.bf16.xpose.msra.mxu0 0
  %1223 = vmatprep.subr.bf16.mxu0 0
  %1224 = vmatpush1.bf16.xpose.msra.mxu0 0
  %1225 = vmatprep.subr.bf16.mxu0 0
  %1226 = vmatpush1.bf16.xpose.msra.mxu0 0
  %1227 = vmatprep.subr.bf16.mxu0 0
  %1228 = vmatpush1.bf16.xpose.msra.mxu0 0
  %1229 = vmatprep.subr.bf16.mxu0 0
  %1230 = vmatpush1.bf16.xpose.msra.mxu0 0
  %1231 = vmatprep.subr.bf16.mxu0 0
  %1232 = vmatpush1.bf16.xpose.msra.mxu0 0
  %1233 = vmatprep.subr.bf16.mxu0 0
  %1234 = vmatpush1.bf16.xpose.msra.mxu0 0
  %1235 = vmatprep.subr.bf16.mxu0 0
  %1236 = vmatpush1.bf16.xpose.msra.mxu0 0
  %1237 = vmatprep.subr.bf16.mxu0 0
  %1238 = vmatpush1.bf16.xpose.msra.mxu0 0
  %1239 = vmatprep.subr.bf16.mxu0 0
  %1240 = vmatpush1.bf16.xpose.msra.mxu0 0
  %1241 = vmatprep.subr.bf16.mxu0 0
  %1242 = vmatpush1.bf16.xpose.msra.mxu0 0
  %1243 = vmatprep.subr.bf16.mxu0 0
  %1244 = vmatpush1.bf16.xpose.msra.mxu0 0
  %1245 = vmatprep.subr.bf16.mxu0 0
  %1246 = vmatpush1.bf16.xpose.msra.mxu0 0
  %1247 = vmatprep.subr.bf16.mxu0 0
  %1248 = vmatpush1.bf16.xpose.msra.mxu0 0
  %1249 = vmatprep.mubr.bf16.mxu0 0
  %1250 = vmatmul.mubr.bf16.gmra.mrb[0].mxu0 %v1209
  %v1251 = vpop.f32.mrb[0].mxu0
  %v1252 = vadd.f32 0.0, %v1251
  %v1253 = vpop.f32.mrb[0].mxu0
  %v1254 = vpop.f32.mrb[0].mxu0
  %v1255 = vpop.f32.mrb[0].mxu0
  %1256 = vdwg.mxu0
  %v1257 = vsel %vm147, %v1252, -inf
  %1258 = vmax.xlane.f32.xlu0 %v1257
  %v1259 = vpop.xlane.xlu0 %1258
  %v1260 = vsub.f32 %v1252, %v1259
  %v1261 = vmul.f32 %v1260, 1.442695
  %v1262 = vpow.pop %v1261
  %v1263 = vpack.c.bf16 %v1262, %v1262
  %v1265 = vsel %vm147, %v1263, 0
  %1267 = vmatprep.subr.bf16.mxu0 0
  %1268 = vmatpush1.bf16.msra.mxu0 %v391
  %1269 = vmatprep.subr.bf16.mxu0 0
  %1270 = vmatpush1.bf16.msra.mxu0 %v392
  %1271 = vmatprep.subr.bf16.mxu0 0
  %1272 = vmatpush1.bf16.msra.mxu0 0
  %1273 = vmatprep.subr.bf16.mxu0 0
  %1274 = vmatpush1.bf16.msra.mxu0 0
  %1275 = vmatprep.subr.bf16.mxu0 0
  %1276 = vmatpush1.bf16.msra.mxu0 0
  %1277 = vmatprep.subr.bf16.mxu0 0
  %1278 = vmatpush1.bf16.msra.mxu0 0
  %1279 = vmatprep.subr.bf16.mxu0 0
  %1280 = vmatpush1.bf16.msra.mxu0 0
  %1281 = vmatprep.subr.bf16.mxu0 0
  %1282 = vmatpush1.bf16.msra.mxu0 0
  %1283 = vmatprep.subr.bf16.mxu0 0
  %1284 = vmatpush1.bf16.msra.mxu0 0
  %1285 = vmatprep.subr.bf16.mxu0 0
  %1286 = vmatpush1.bf16.msra.mxu0 0
  %1287 = vmatprep.subr.bf16.mxu0 0
  %1288 = vmatpush1.bf16.msra.mxu0 0
  %1289 = vmatprep.subr.bf16.mxu0 0
  %1290 = vmatpush1.bf16.msra.mxu0 0
  %1291 = vmatprep.subr.bf16.mxu0 0
  %1292 = vmatpush1.bf16.msra.mxu0 0
  %1293 = vmatprep.subr.bf16.mxu0 0
  %1294 = vmatpush1.bf16.msra.mxu0 0
  %1295 = vmatprep.subr.bf16.mxu0 0
  %1296 = vmatpush1.bf16.msra.mxu0 0
  %1297 = vmatprep.subr.bf16.mxu0 0
  %1298 = vmatpush1.bf16.msra.mxu0 0
  %1299 = vmatprep.mubr.bf16.mxu0 0
  %1300 = vmatmul.mubr.bf16.gmra.mrb[0].mxu0 %v1265
  %v1301 = vpop.f32.mrb[0].mxu0
  %v1302 = vadd.f32 0.0, %v1301
  %v1303 = vpop.f32.mrb[0].mxu0
  %v1304 = vpop.f32.mrb[0].mxu0
  %v1305 = vpop.f32.mrb[0].mxu0
  %1306 = vdwg.mxu0
  %v1307 = vrcp.pop %v1302
  %v1308 = vmul.f32 %v1262, %v1307
  %v1309 = vpack.c.bf16 %v1308, %v1308
  %v1311 = vsel %vm147, %v1309, 0
  %1313 = vmatprep.subr.bf16.mxu0 0
  %1314 = vmatpush1.bf16.msra.mxu0 %v1200
  %1315 = vmatprep.subr.bf16.mxu0 0
  %1316 = vmatpush1.bf16.msra.mxu0 %v1201
  %1317 = vmatprep.subr.bf16.mxu0 0
  %1318 = vmatpush1.bf16.msra.mxu0 0
  %1319 = vmatprep.subr.bf16.mxu0 0
  %1320 = vmatpush1.bf16.msra.mxu0 0
  %1321 = vmatprep.subr.bf16.mxu0 0
  %1322 = vmatpush1.bf16.msra.mxu0 0
  %1323 = vmatprep.subr.bf16.mxu0 0
  %1324 = vmatpush1.bf16.msra.mxu0 0
  %1325 = vmatprep.subr.bf16.mxu0 0
  %1326 = vmatpush1.bf16.msra.mxu0 0
  %1327 = vmatprep.subr.bf16.mxu0 0
  %1328 = vmatpush1.bf16.msra.mxu0 0
  %1329 = vmatprep.subr.bf16.mxu0 0
  %1330 = vmatpush1.bf16.msra.mxu0 0
  %1331 = vmatprep.subr.bf16.mxu0 0
  %1332 = vmatpush1.bf16.msra.mxu0 0
  %1333 = vmatprep.subr.bf16.mxu0 0
  %1334 = vmatpush1.bf16.msra.mxu0 0
  %1335 = vmatprep.subr.bf16.mxu0 0
  %1336 = vmatpush1.bf16.msra.mxu0 0
  %1337 = vmatprep.subr.bf16.mxu0 0
  %1338 = vmatpush1.bf16.msra.mxu0 0
  %1339 = vmatprep.subr.bf16.mxu0 0
  %1340 = vmatpush1.bf16.msra.mxu0 0
  %1341 = vmatprep.subr.bf16.mxu0 0
  %1342 = vmatpush1.bf16.msra.mxu0 0
  %1343 = vmatprep.subr.bf16.mxu0 0
  %1344 = vmatpush1.bf16.msra.mxu0 0
  %1345 = vmatprep.mubr.bf16.mxu0 0
  %1346 = vmatmul.mubr.bf16.gmra.mrb[0].mxu0 %v1311
  %v1347 = vpop.f32.mrb[0].mxu0
  %v1348 = vadd.f32 0.0, %v1347
  %v1349 = vpop.f32.mrb[0].mxu0
  %v1350 = vpop.f32.mrb[0].mxu0
  %v1351 = vpop.f32.mrb[0].mxu0
  %1352 = vdwg.mxu0
  %v1353 = vpack.c.bf16 %v1348, %v1184
  %s1354 = scalar_lea.vmem %s9, 16
  %v1355 = vld [vmem:[%s1354] sm:$0xf]
  %v1356 = vld [vmem:[%s1354 + $0x4] sm:$0xf]
  %v1357 = vld [vmem:[%s1354 + $0x8] sm:$0xf]
  %v1358 = vld [vmem:[%s1354 + $0xc] sm:$0xf]
  %v1363 = vunpack.c.l.b16 %v1355
  %v1364 = vunpack.c.l.b16 %v1356
  %v1365 = vunpack.c.l.b16 %v1357
  %v1366 = vunpack.c.l.b16 %v1358
  %v1367 = vpack.c.b16 %v1364, %v1363
  %v1368 = vpack.c.b16 %v1366, %v1365
  %v1372 = vsel %vm147, %v1353, 0
  %1374 = vmatprep.subr.bf16.mxu0 0
  %1375 = vmatpush1.bf16.msra.mxu0 %v1367
  %1376 = vmatprep.subr.bf16.mxu0 0
  %1377 = vmatpush1.bf16.msra.mxu0 %v1368
  %1378 = vmatprep.subr.bf16.mxu0 0
  %1379 = vmatpush1.bf16.msra.mxu0 0
  %1380 = vmatprep.subr.bf16.mxu0 0
  %1381 = vmatpush1.bf16.msra.mxu0 0
  %1382 = vmatprep.subr.bf16.mxu0 0
  %1383 = vmatpush1.bf16.msra.mxu0 0
  %1384 = vmatprep.subr.bf16.mxu0 0
  %1385 = vmatpush1.bf16.msra.mxu0 0
  %1386 = vmatprep.subr.bf16.mxu0 0
  %1387 = vmatpush1.bf16.msra.mxu0 0
  %1388 = vmatprep.subr.bf16.mxu0 0
  %1389 = vmatpush1.bf16.msra.mxu0 0
  %1390 = vmatprep.subr.bf16.mxu0 0
  %1391 = vmatpush1.bf16.msra.mxu0 0
  %1392 = vmatprep.subr.bf16.mxu0 0
  %1393 = vmatpush1.bf16.msra.mxu0 0
  %1394 = vmatprep.subr.bf16.mxu0 0
  %1395 = vmatpush1.bf16.msra.mxu0 0
  %1396 = vmatprep.subr.bf16.mxu0 0
  %1397 = vmatpush1.bf16.msra.mxu0 0
  %1398 = vmatprep.subr.bf16.mxu0 0
  %1399 = vmatpush1.bf16.msra.mxu0 0
  %1400 = vmatprep.subr.bf16.mxu0 0
  %1401 = vmatpush1.bf16.msra.mxu0 0
  %1402 = vmatprep.subr.bf16.mxu0 0
  %1403 = vmatpush1.bf16.msra.mxu0 0
  %1404 = vmatprep.subr.bf16.mxu0 0
  %1405 = vmatpush1.bf16.msra.mxu0 0
  %1406 = vmatprep.mubr.bf16.mxu0 0
  %1407 = vmatmul.mubr.bf16.gmra.mrb[0].mxu0 %v1372
  %v1408 = vpop.f32.mrb[0].mxu0
  %v1409 = vadd.f32 0.0, %v1408
  %v1410 = vpop.f32.mrb[0].mxu0
  %v1411 = vpop.f32.mrb[0].mxu0
  %v1412 = vadd.f32 0.0, %v1411
  %v1413 = vpop.f32.mrb[0].mxu0
  %1414 = vdwg.mxu0
  %v1415 = vadd.f32 %v897, %v1409
  %v1416 = vadd.f32 %v898, %v1412
  %s1417 = scalar_lea.vmem %s10, 1
  %v1418 = vld [vmem:[%s1417] sm:$0x1]
  %v1419 = vmul.f32 %v1415, %v1415
  %v1420 = vmul.f32 %v1416, %v1416
  %v1421 = vsel %vm147, %v1419, 0.0
  %1422 = vadd.xlane.f32.xlu0 %v1421
  %v1423 = vpop.xlane.xlu0 %1422
  %v1424 = vsel %vm147, %v1420, 0.0
  %1425 = vadd.xlane.f32.xlu0 %v1424
  %v1426 = vpop.xlane.xlu0 %1425
  %v1427 = vmul.f32 %v1423, %v154
  %v1428 = vmul.f32 %v1426, %v154
  %v1429 = vadd.f32 %v1427, 1e-06
  %v1430 = vadd.f32 %v1428, 1e-06
  %v1431 = vrsqrt.pop %v1429
  %v1432 = vrsqrt.pop %v1430
  %v1433 = vmul.f32 %v1415, %v1431
  %v1434 = vmul.f32 %v1416, %v1432
  %v1436 = vlaneseq
  %v1437 = vshrl.u32 %v1436, 7
  %v1438 = vsub.s32 0, %v1437
  %v1439 = vrot.slane %v1418, %v1438
  %v1441 = vmul.f32 %v1433, %v1439
  %v1442 = vmul.f32 %v1434, %v1439
  %v1443 = vpack.c.bf16 %v1442, %v1441
  %s1444 = scalar_lea.vmem %s11, 16
  %v1445 = vld [vmem:[%s1444] sm:$0xf]
  %v1446 = vld [vmem:[%s1444 + $0x4] sm:$0xf]
  %v1447 = vld [vmem:[%s1444 + $0x8] sm:$0xf]
  %v1448 = vld [vmem:[%s1444 + $0xc] sm:$0xf]
  %v1453 = vunpack.c.l.b16 %v1445
  %v1454 = vunpack.c.l.b16 %v1446
  %v1455 = vunpack.c.l.b16 %v1447
  %v1456 = vunpack.c.l.b16 %v1448
  %v1457 = vpack.c.b16 %v1454, %v1453
  %v1458 = vpack.c.b16 %v1456, %v1455
  %v1462 = vsel %vm147, %v1443, 0
  %1464 = vmatprep.subr.bf16.mxu0 0
  %1465 = vmatpush1.bf16.msra.mxu0 %v1457
  %1466 = vmatprep.subr.bf16.mxu0 0
  %1467 = vmatpush1.bf16.msra.mxu0 %v1458
  %1468 = vmatprep.subr.bf16.mxu0 0
  %1469 = vmatpush1.bf16.msra.mxu0 0
  %1470 = vmatprep.subr.bf16.mxu0 0
  %1471 = vmatpush1.bf16.msra.mxu0 0
  %1472 = vmatprep.subr.bf16.mxu0 0
  %1473 = vmatpush1.bf16.msra.mxu0 0
  %1474 = vmatprep.subr.bf16.mxu0 0
  %1475 = vmatpush1.bf16.msra.mxu0 0
  %1476 = vmatprep.subr.bf16.mxu0 0
  %1477 = vmatpush1.bf16.msra.mxu0 0
  %1478 = vmatprep.subr.bf16.mxu0 0
  %1479 = vmatpush1.bf16.msra.mxu0 0
  %1480 = vmatprep.subr.bf16.mxu0 0
  %1481 = vmatpush1.bf16.msra.mxu0 0
  %1482 = vmatprep.subr.bf16.mxu0 0
  %1483 = vmatpush1.bf16.msra.mxu0 0
  %1484 = vmatprep.subr.bf16.mxu0 0
  %1485 = vmatpush1.bf16.msra.mxu0 0
  %1486 = vmatprep.subr.bf16.mxu0 0
  %1487 = vmatpush1.bf16.msra.mxu0 0
  %1488 = vmatprep.subr.bf16.mxu0 0
  %1489 = vmatpush1.bf16.msra.mxu0 0
  %1490 = vmatprep.subr.bf16.mxu0 0
  %1491 = vmatpush1.bf16.msra.mxu0 0
  %1492 = vmatprep.subr.bf16.mxu0 0
  %1493 = vmatpush1.bf16.msra.mxu0 0
  %1494 = vmatprep.subr.bf16.mxu0 0
  %1495 = vmatpush1.bf16.msra.mxu0 0
  %1496 = vmatprep.mubr.bf16.mxu0 0
  %1497 = vmatmul.mubr.bf16.gmra.mrb[0].mxu0 %v1462
  %v1498 = vpop.f32.mrb[0].mxu0
  %v1499 = vadd.f32 0.0, %v1498
  %v1500 = vpop.f32.mrb[0].mxu0
  %v1501 = vpop.f32.mrb[0].mxu0
  %v1502 = vadd.f32 0.0, %v1501
  %v1503 = vpop.f32.mrb[0].mxu0
  %1504 = vdwg.mxu0
  %v1505 = vsub.f32 0.0, %v1499
  %v1506 = vsub.f32 0.0, %v1502
  %v1507 = vmul.f32 %v1505, 1.442695
  %v1508 = vpow.pop %v1507
  %v1509 = vmul.f32 %v1506, 1.442695
  %v1510 = vpow.pop %v1509
  %v1511 = vadd.f32 %v1508, 1.0
  %v1512 = vadd.f32 %v1510, 1.0
  %v1513 = vrcp.pop %v1511
  %v1514 = vrcp.pop %v1512
  %v1515 = vmul.f32 %v1499, %v1513
  %v1516 = vmul.f32 %v1502, %v1514
  %1519 = vrot.lane.b32.xlu0 %v1499, 64
  %v1520 = vpop.permute.xlu0 %1519
  %1521 = vrot.lane.b32.xlu0 %v1502, 64
  %v1522 = vpop.permute.xlu0 %1521
  %v1525 = vmul.f32 %v1515, %v1520
  %v1526 = vmul.f32 %v1516, %v1522
  %v1527 = vpack.c.bf16 %v1526, %v1525
  %s1528 = scalar_lea.vmem %s12, 32
  %v1529 = vld [vmem:[%s1528] sm:$0xf]
  %v1530 = vld [vmem:[%s1528 + $0x4] sm:$0xf]
  %v1531 = vld [vmem:[%s1528 + $0x8] sm:$0xf]
  %v1532 = vld [vmem:[%s1528 + $0xc] sm:$0xf]
  %v1533 = vld [vmem:[%s1528 + $0x10] sm:$0xf]
  %v1534 = vld [vmem:[%s1528 + $0x14] sm:$0xf]
  %v1535 = vld [vmem:[%s1528 + $0x18] sm:$0xf]
  %v1536 = vld [vmem:[%s1528 + $0x1c] sm:$0xf]
  %v1545 = vunpack.c.l.b16 %v1529
  %v1546 = vunpack.c.l.b16 %v1530
  %v1547 = vunpack.c.l.b16 %v1531
  %v1548 = vunpack.c.l.b16 %v1532
  %v1549 = vunpack.c.l.b16 %v1533
  %v1550 = vunpack.c.l.b16 %v1534
  %v1551 = vunpack.c.l.b16 %v1535
  %v1552 = vunpack.c.l.b16 %v1536
  %v1553 = vpack.c.b16 %v1546, %v1545
  %v1554 = vpack.c.b16 %v1548, %v1547
  %v1555 = vpack.c.b16 %v1550, %v1549
  %v1556 = vpack.c.b16 %v1552, %v1551
  %v1562 = vsel %vm852, %v1527, 0
  %1564 = vmatprep.subr.bf16.mxu0 0
  %1565 = vmatpush1.bf16.msra.mxu0 %v1553
  %1566 = vmatprep.subr.bf16.mxu0 0
  %1567 = vmatpush1.bf16.msra.mxu0 %v1554
  %1568 = vmatprep.subr.bf16.mxu0 0
  %1569 = vmatpush1.bf16.msra.mxu0 %v1555
  %1570 = vmatprep.subr.bf16.mxu0 0
  %1571 = vmatpush1.bf16.msra.mxu0 %v1556
  %1572 = vmatprep.subr.bf16.mxu0 0
  %1573 = vmatpush1.bf16.msra.mxu0 0
  %1574 = vmatprep.subr.bf16.mxu0 0
  %1575 = vmatpush1.bf16.msra.mxu0 0
  %1576 = vmatprep.subr.bf16.mxu0 0
  %1577 = vmatpush1.bf16.msra.mxu0 0
  %1578 = vmatprep.subr.bf16.mxu0 0
  %1579 = vmatpush1.bf16.msra.mxu0 0
  %1580 = vmatprep.subr.bf16.mxu0 0
  %1581 = vmatpush1.bf16.msra.mxu0 0
  %1582 = vmatprep.subr.bf16.mxu0 0
  %1583 = vmatpush1.bf16.msra.mxu0 0
  %1584 = vmatprep.subr.bf16.mxu0 0
  %1585 = vmatpush1.bf16.msra.mxu0 0
  %1586 = vmatprep.subr.bf16.mxu0 0
  %1587 = vmatpush1.bf16.msra.mxu0 0
  %1588 = vmatprep.subr.bf16.mxu0 0
  %1589 = vmatpush1.bf16.msra.mxu0 0
  %1590 = vmatprep.subr.bf16.mxu0 0
  %1591 = vmatpush1.bf16.msra.mxu0 0
  %1592 = vmatprep.subr.bf16.mxu0 0
  %1593 = vmatpush1.bf16.msra.mxu0 0
  %1594 = vmatprep.subr.bf16.mxu0 0
  %1595 = vmatpush1.bf16.msra.mxu0 0
  %1596 = vmatprep.mubr.bf16.mxu0 0
  %1597 = vmatmul.mubr.bf16.gmra.mrb[0].mxu0 %v1562
  %v1598 = vpop.f32.mrb[0].mxu0
  %v1599 = vadd.f32 0.0, %v1598
  %v1600 = vpop.f32.mrb[0].mxu0
  %v1601 = vpop.f32.mrb[0].mxu0
  %v1602 = vadd.f32 0.0, %v1601
  %v1603 = vpop.f32.mrb[0].mxu0
  %1604 = vdwg.mxu0
  %v1605 = vadd.f32 %v1415, %v1599
  %v1606 = vadd.f32 %v1416, %v1602
  %v1607 = vld [vmem:[%s13] sm:$0x1]
  %v1608 = vmul.f32 %v1605, %v1605
  %v1609 = vmul.f32 %v1606, %v1606
  %v1610 = vsel %vm147, %v1608, 0.0
  %1611 = vadd.xlane.f32.xlu0 %v1610
  %v1612 = vpop.xlane.xlu0 %1611
  %v1613 = vsel %vm147, %v1609, 0.0
  %1614 = vadd.xlane.f32.xlu0 %v1613
  %v1615 = vpop.xlane.xlu0 %1614
  %v1616 = vmul.f32 %v1612, %v154
  %v1617 = vmul.f32 %v1615, %v154
  %v1618 = vadd.f32 %v1616, 1e-06
  %v1619 = vadd.f32 %v1617, 1e-06
  %v1620 = vrsqrt.pop %v1618
  %v1621 = vrsqrt.pop %v1619
  %v1622 = vmul.f32 %v1605, %v1620
  %v1623 = vmul.f32 %v1606, %v1621
  %v1625 = vlaneseq
  %v1626 = vshrl.u32 %v1625, 7
  %v1627 = vsub.s32 0, %v1626
  %v1628 = vrot.slane %v1607, %v1627
  %v1630 = vmul.f32 %v1622, %v1628
  %v1631 = vmul.f32 %v1623, %v1628
  %v1632 = vpack.c.bf16 %v1631, %v1630
  %v1633 = vld [vmem:[%s14] sm:$0xf]
  %v1634 = vld [vmem:[%s14 + $0x4] sm:$0xf]
  %v1635 = vld [vmem:[%s14 + $0x8] sm:$0xf]
  %v1636 = vld [vmem:[%s14 + $0xc] sm:$0xf]
  %v1637 = vld [vmem:[%s15] sm:$0x1]
  %v1639 = vlaneseq
  %v1640 = vshrl.u32 %v1639, 7
  %v1641 = vsub.s32 0, %v1640
  %v1642 = vrot.slane %v1637, %v1641
  %v1648 = vunpack.c.l.b16 %v1633
  %v1649 = vunpack.c.l.b16 %v1634
  %v1650 = vunpack.c.l.b16 %v1635
  %v1651 = vunpack.c.l.b16 %v1636
  %v1652 = vpack.c.b16 %v1649, %v1648
  %v1653 = vpack.c.b16 %v1651, %v1650
  %v1657 = vsel %vm147, %v1632, 0
  %1659 = vmatprep.subr.bf16.mxu0 0
  %1660 = vmatpush1.bf16.msra.mxu0 %v1652
  %1661 = vmatprep.subr.bf16.mxu0 0
  %1662 = vmatpush1.bf16.msra.mxu0 %v1653
  %1663 = vmatprep.subr.bf16.mxu0 0
  %1664 = vmatpush1.bf16.msra.mxu0 0
  %1665 = vmatprep.subr.bf16.mxu0 0
  %1666 = vmatpush1.bf16.msra.mxu0 0
  %1667 = vmatprep.subr.bf16.mxu0 0
  %1668 = vmatpush1.bf16.msra.mxu0 0
  %1669 = vmatprep.subr.bf16.mxu0 0
  %1670 = vmatpush1.bf16.msra.mxu0 0
  %1671 = vmatprep.subr.bf16.mxu0 0
  %1672 = vmatpush1.bf16.msra.mxu0 0
  %1673 = vmatprep.subr.bf16.mxu0 0
  %1674 = vmatpush1.bf16.msra.mxu0 0
  %1675 = vmatprep.subr.bf16.mxu0 0
  %1676 = vmatpush1.bf16.msra.mxu0 0
  %1677 = vmatprep.subr.bf16.mxu0 0
  %1678 = vmatpush1.bf16.msra.mxu0 0
  %1679 = vmatprep.subr.bf16.mxu0 0
  %1680 = vmatpush1.bf16.msra.mxu0 0
  %1681 = vmatprep.subr.bf16.mxu0 0
  %1682 = vmatpush1.bf16.msra.mxu0 0
  %1683 = vmatprep.subr.bf16.mxu0 0
  %1684 = vmatpush1.bf16.msra.mxu0 0
  %1685 = vmatprep.subr.bf16.mxu0 0
  %1686 = vmatpush1.bf16.msra.mxu0 0
  %1687 = vmatprep.subr.bf16.mxu0 0
  %1688 = vmatpush1.bf16.msra.mxu0 0
  %1689 = vmatprep.subr.bf16.mxu0 0
  %1690 = vmatpush1.bf16.msra.mxu0 0
  %1691 = vmatprep.mubr.bf16.mxu0 0
  %1692 = vmatmul.mubr.bf16.gmra.mrb[0].mxu0 %v1657
  %v1693 = vpop.f32.mrb[0].mxu0
  %v1694 = vadd.f32 %v1642, %v1693
  %v1695 = vpop.f32.mrb[0].mxu0
  %v1696 = vpop.f32.mrb[0].mxu0
  %v1697 = vadd.f32 %v1642, %v1696
  %v1698 = vpop.f32.mrb[0].mxu0
  %1699 = vdwg.mxu0
  %1700 = vst [vmem:[%s16] sm:$0xff] %v1694
  %1701 = vst [vmem:[%s16 + $0x8] sm:$0xff] %v1697
  // Predicated region
  $region66: #{llama_encoder_forward.1} parent=0 // pred_check
    _
  $region67: #{llama_encoder_forward.1} parent=0 // pred_check_branch
    %1703 = sbr.rel (0) target = $region69
  $region68: #{llama_encoder_forward.1} parent=0 // pred_region
    _
  $region69: #{llama_encoder_forward.1} parent=0 // pred_fallthru
    _
  // Predicated region
  $region70: #{llama_encoder_forward.1} parent=0 // pred_check
    _
  $region71: #{llama_encoder_forward.1} parent=0 // pred_check_branch
    %1705 = sbr.rel (0) target = $region73
  $region72: #{llama_encoder_forward.1} parent=0 // pred_region
    _
  $region73: #{llama_encoder_forward.1} parent=0 // pred_fallthru
    _

</llo_original>
